<compile_context>
chip_gen: v7x
topology: tpu7x:2x2x1
jax: 0.10.0
libtpu: 0.0.40
codegen_flags: <defaults>
</compile_context>

<pallas_src>
import jax
import jax.numpy as jnp
from jax.experimental import pallas as pl
from jax.experimental.pallas import tpu as pltpu

INPUT_SIZE = 5
HIDDEN = 64
NUM_LAYERS = 2
OUTPUT_SIZE = 5
FC1 = 64
FC2 = 32

IPAD = 8      # input feature dim zero-padded to a sublane multiple
LANE = 128    # lane width: FC weights, FC biases and output are padded to this

# Row offsets inside the stacked LSTM weight (all multiples of 8 -> aligned).
_R_IH0 = 0
_R_HH0 = IPAD
_R_IH1 = IPAD + HIDDEN
_R_HH1 = IPAD + 2 * HIDDEN
_LSTM_W_ROWS = IPAD + 3 * HIDDEN       # 200
_FC_W_ROWS = HIDDEN + 2 * LANE         # 320


def _round_up(n, m):
    return ((n + m - 1) // m) * m


def lstm_mlp_kernel(
    x_ref,        # (T, BB, IPAD)            time-major batch block (zero-padded)
    lstm_w_ref,   # (200, 4H)                [W_ih_l0^T(pad8); W_hh_l0^T; W_ih_l1^T; W_hh_l1^T]
    lstm_b_ref,   # (2, 4H)                  [b_ih_l0+b_hh_l0 ; b_ih_l1+b_hh_l1]
    fc_w_ref,     # (320, 128)               [fc1_w^T ; fc2_w^T ; fc3_w^T], lane/row padded
    fc_b_ref,     # (3, 128)                 [fc1_b ; fc2_b ; fc3_b], lane padded
    out_ref,      # (BB, 128)                lane-dense output slab
):
    T, BB, _ = x_ref.shape
    H = HIDDEN
    H4 = 4 * H

    # Loop-invariant bias broadcasts hoisted (JAX does not CSE broadcast_in_dim).
    b0b = jnp.broadcast_to(lstm_b_ref[0:1, :], (BB, H4))
    b1b = jnp.broadcast_to(lstm_b_ref[1:2, :], (BB, H4))

    def gate_act(gates, c):
        # Gate column order is [i | f | o | g] (re-laid out in prepare_params):
        # one contiguous 3H sigmoid slice + one H tanh slice.
        sfo = jax.nn.sigmoid(gates[:, : 3 * H])
        g = jnp.tanh(gates[:, 3 * H:])
        i = sfo[:, 0 * H:1 * H]
        f = sfo[:, 1 * H:2 * H]
        o = sfo[:, 2 * H:3 * H]
        c_new = f * c + i * g
        return o * jnp.tanh(c_new), c_new

    def step(t, carry):
        h0, c0, h1, c1, g1p = carry
        xt = x_ref[t]                                           # (BB, IPAD)
        # Layer 0: the x-projection has no carry dependency -> off the serial
        # chain (MXU has slack); only h0 @ W_hh0 is on the chain.
        g0 = (
            jnp.dot(xt, lstm_w_ref[_R_IH0:_R_IH0 + IPAD, :],
                    preferred_element_type=jnp.float32)
            + b0b
            + jnp.dot(h0, lstm_w_ref[_R_HH0:_R_HH0 + H, :],
                      preferred_element_type=jnp.float32)
        )
        h0, c0 = gate_act(g0, c0)

        # Layer 1: the recurrent half (h1 @ W_hh1 + b1) was pre-computed at the
        # end of the previous step (g1p); only the h0-dependent matmul remains
        # on the critical chain, and there is no concat.
        g1 = g1p + jnp.dot(h0, lstm_w_ref[_R_IH1:_R_IH1 + H, :],
                           preferred_element_type=jnp.float32)
        h1, c1 = gate_act(g1, c1)

        # Off-chain: next step's recurrent contribution (overlaps step t+1's
        # layer-0 matmul + activations).
        g1p = (
            jnp.dot(h1, lstm_w_ref[_R_HH1:_R_HH1 + H, :],
                    preferred_element_type=jnp.float32)
            + b1b
        )
        return h0, c0, h1, c1, g1p

    z = jnp.zeros((BB, H), jnp.float32)
    # h1_init = 0  =>  initial g1_partial is just the layer-1 bias.
    carry = (z, z, z, z, b1b)
    unroll = True if T <= 16 else 8
    h0, c0, h1, c1, _ = jax.lax.fori_loop(0, T, step, carry, unroll=unroll)

    # MLP head on the last hidden state of the top LSTM layer.  FC weights /
    # biases are 128-lane padded with zeros, so padded lanes stay exactly 0.
    o1, o2, o3 = 0, HIDDEN, HIDDEN + LANE
    z1 = jnp.maximum(
        jnp.dot(h1, fc_w_ref[o1:o1 + HIDDEN, :],
                preferred_element_type=jnp.float32) + fc_b_ref[0:1, :], 0.0)
    z2 = jnp.maximum(
        jnp.dot(z1, fc_w_ref[o2:o2 + LANE, :],
                preferred_element_type=jnp.float32) + fc_b_ref[1:2, :], 0.0)
    z3 = (
        jnp.dot(z2, fc_w_ref[o3:o3 + LANE, :],
                preferred_element_type=jnp.float32) + fc_b_ref[2:3, :])
    out_ref[...] = z3.astype(out_ref.dtype)


def init_params(key):
    """Deterministic parameter init (PyTorch-style uniform ranges)."""
    ks = jax.random.split(key, 20)
    k = 1.0 / jnp.sqrt(HIDDEN)

    def u(key, shape, bound):
        return jax.random.uniform(key, shape, jnp.float32, -bound, bound)

    p = {}
    # LSTM layer 0
    p["w_ih_l0"] = u(ks[0], (4 * HIDDEN, INPUT_SIZE), k)
    p["w_hh_l0"] = u(ks[1], (4 * HIDDEN, HIDDEN), k)
    p["b_ih_l0"] = u(ks[2], (4 * HIDDEN,), k)
    p["b_hh_l0"] = u(ks[3], (4 * HIDDEN,), k)
    # LSTM layer 1
    p["w_ih_l1"] = u(ks[4], (4 * HIDDEN, HIDDEN), k)
    p["w_hh_l1"] = u(ks[5], (4 * HIDDEN, HIDDEN), k)
    p["b_ih_l1"] = u(ks[6], (4 * HIDDEN,), k)
    p["b_hh_l1"] = u(ks[7], (4 * HIDDEN,), k)
    # FC head
    p["fc1_w"] = u(ks[8], (FC1, HIDDEN), 1.0 / jnp.sqrt(HIDDEN))
    p["fc1_b"] = u(ks[9], (FC1,), 1.0 / jnp.sqrt(HIDDEN))
    p["fc2_w"] = u(ks[10], (FC2, FC1), 1.0 / jnp.sqrt(FC1))
    p["fc2_b"] = u(ks[11], (FC2,), 1.0 / jnp.sqrt(FC1))
    p["fc3_w"] = u(ks[12], (OUTPUT_SIZE, FC2), 1.0 / jnp.sqrt(FC2))
    p["fc3_b"] = u(ks[13], (OUTPUT_SIZE,), 1.0 / jnp.sqrt(FC2))
    return p


def prepare_params(p):
    """One-time weight re-layout (transpose / gate-reorder / stack / pad),
    done OUTSIDE the jitted forward so the hot path sees kernel-ready operands."""
    H = HIDDEN

    def reorder_cols(wt):   # (K, 4H) in PyTorch order [i|f|g|o] -> [i|f|o|g]
        return jnp.concatenate(
            [wt[:, :2 * H], wt[:, 3 * H:4 * H], wt[:, 2 * H:3 * H]], axis=1)

    def reorder_bias(b):    # (4H,)
        return jnp.concatenate([b[:2 * H], b[3 * H:4 * H], b[2 * H:3 * H]])

    wih0 = reorder_cols(jnp.asarray(p["w_ih_l0"].T, jnp.float32))        # (5, 4H)
    wih0 = jnp.zeros((IPAD, 4 * H), jnp.float32).at[:INPUT_SIZE].set(wih0)
    whh0 = reorder_cols(jnp.asarray(p["w_hh_l0"].T, jnp.float32))        # (H, 4H)
    wih1 = reorder_cols(jnp.asarray(p["w_ih_l1"].T, jnp.float32))        # (H, 4H)
    whh1 = reorder_cols(jnp.asarray(p["w_hh_l1"].T, jnp.float32))        # (H, 4H)
    lstm_w = jnp.concatenate([wih0, whh0, wih1, whh1], axis=0)           # (200, 4H)

    b0 = reorder_bias(p["b_ih_l0"] + p["b_hh_l0"])
    b1 = reorder_bias(p["b_ih_l1"] + p["b_hh_l1"])
    lstm_b = jnp.stack([b0, b1], axis=0).astype(jnp.float32)             # (2, 4H)

    fc1w = jnp.zeros((HIDDEN, LANE), jnp.float32).at[:, :FC1].set(p["fc1_w"].T)
    fc2w = jnp.zeros((LANE, LANE), jnp.float32).at[:FC1, :FC2].set(p["fc2_w"].T)
    fc3w = jnp.zeros((LANE, LANE), jnp.float32).at[:FC2, :OUTPUT_SIZE].set(p["fc3_w"].T)
    fc_w = jnp.concatenate([fc1w, fc2w, fc3w], axis=0)                   # (320, 128)

    fc_b = jnp.zeros((3, LANE), jnp.float32)
    fc_b = fc_b.at[0, :FC1].set(p["fc1_b"])
    fc_b = fc_b.at[1, :FC2].set(p["fc2_b"])
    fc_b = fc_b.at[2, :OUTPUT_SIZE].set(p["fc3_b"])

    return {"lstm_w": lstm_w, "lstm_b": lstm_b, "fc_w": fc_w, "fc_b": fc_b}


def _choose_blocks(B):
    """Chip-aware batch blocking.  Single-TC chips (v5e/v6e): as few grid steps
    as possible.  Multi-TC chips (v7x megacore): >=1 block per TensorCore so
    the 'parallel' grid axis actually shards work."""
    Bp0 = _round_up(max(B, 1), 8)
    try:
        n_cores = getattr(jax.devices()[0], "num_cores", 1) or 1
    except Exception:  # pragma: no cover - defensive
        n_cores = 1
    n_blk = pl.cdiv(Bp0, 256)                      # few, large blocks by default
    if n_cores > 1 and Bp0 >= 8 * n_cores:
        n_blk = _round_up(n_blk, n_cores)          # keep every TC busy
    BB = _round_up(pl.cdiv(Bp0, n_blk), 8)
    Bp = n_blk * BB
    return Bp, BB, n_blk


@jax.jit
def stock_price_lstm_forward(x, prep):
    """x: (B, T, INPUT_SIZE) float32 -> (B, OUTPUT_SIZE) float32 (eval forward)."""
    B, T, I = x.shape
    H4 = 4 * HIDDEN
    Bp, BB, n_blk = _choose_blocks(B)

    # Zero-pad batch to the block multiple and features to IPAD (both free:
    # padded rows are sliced off, padded feature columns hit zero weight rows).
    xp = jnp.zeros((Bp, T, IPAD), x.dtype).at[:B, :, :I].set(x)
    # Tiny (B,T,5) transpose so the per-step fetch is a dynamic leading-dim
    # ref index inside the kernel (cheapest/most robust dynamic access).
    x_tm = jnp.transpose(xp, (1, 0, 2))            # (T, Bp, IPAD) time-major

    def fixed(shape):
        return pl.BlockSpec(shape, lambda i: (0,) * len(shape))

    out = pl.pallas_call(
        lstm_mlp_kernel,
        out_shape=jax.ShapeDtypeStruct((Bp, LANE), jnp.float32),
        grid=(n_blk,),
        in_specs=[
            pl.BlockSpec((T, BB, IPAD), lambda i: (0, i, 0)),   # x, blocked on batch
            fixed((_LSTM_W_ROWS, H4)),                          # stacked LSTM weights
            fixed((2, H4)),                                     # stacked LSTM biases
            fixed((_FC_W_ROWS, LANE)),                          # stacked FC weights
            fixed((3, LANE)),                                   # stacked FC biases
        ],
        out_specs=pl.BlockSpec((BB, LANE), lambda i: (i, 0)),   # lane-dense output
        compiler_params=pltpu.CompilerParams(
            dimension_semantics=("parallel",),
            vmem_limit_bytes=32 * 1024 * 1024,
        ),
    )(x_tm, prep["lstm_w"], prep["lstm_b"], prep["fc_w"], prep["fc_b"])

    return out[:B, :OUTPUT_SIZE]


def reference_forward(x, params):
    """Pure-JAX reference matching PyTorch nn.LSTM (eval) + MLP head.
    Matmul precision pinned to 'highest' so the f32 reference is comparable to
    the kernel's f32 MXU accumulation."""
    B, T, _ = x.shape
    H = HIDDEN
    hp = jax.lax.Precision.HIGHEST
    dot = lambda a, b: jnp.dot(a, b, precision=hp)

    def cell(xt, h, c, w_ih, w_hh, b_ih, b_hh):
        gates = dot(xt, w_ih.T) + b_ih + dot(h, w_hh.T) + b_hh
        i = jax.nn.sigmoid(gates[:, 0 * H:1 * H])
        f = jax.nn.sigmoid(gates[:, 1 * H:2 * H])
        g = jnp.tanh(gates[:, 2 * H:3 * H])
        o = jax.nn.sigmoid(gates[:, 3 * H:4 * H])
        c_new = f * c + i * g
        return o * jnp.tanh(c_new), c_new

    h0 = jnp.zeros((B, H)); c0 = jnp.zeros((B, H))
    h1 = jnp.zeros((B, H)); c1 = jnp.zeros((B, H))
    for t in range(T):
        xt = x[:, t, :]
        h0, c0 = cell(xt, h0, c0, params["w_ih_l0"], params["w_hh_l0"],
                      params["b_ih_l0"], params["b_hh_l0"])
        # NOTE: nn.LSTM inter-layer dropout (p=0.2) is train-mode only.
        h1, c1 = cell(h0, h1, c1, params["w_ih_l1"], params["w_hh_l1"],
                      params["b_ih_l1"], params["b_hh_l1"])
    z = jnp.maximum(dot(h1, params["fc1_w"].T) + params["fc1_b"], 0.0)
    z = jnp.maximum(dot(z, params["fc2_w"].T) + params["fc2_b"], 0.0)
    return dot(z, params["fc3_w"].T) + params["fc3_b"]


if __name__ == "__main__":
    key = jax.random.PRNGKey(0)
    k_param, k_x = jax.random.split(key)

    B, T = 2, 8
    x = jax.random.normal(k_x, (B, T, INPUT_SIZE), dtype=jnp.float32)
    params = init_params(k_param)
    prep = prepare_params(params)   # one-time re-layout, outside the jitted path

    out = stock_price_lstm_forward(x, prep)
    out = jax.block_until_ready(out)

    ref = reference_forward(x, params)
    assert out.shape == (B, OUTPUT_SIZE), out.shape
    assert jnp.allclose(out, ref, rtol=1e-4, atol=1e-5), (out, ref)

    print("KERNEL_OK")
</pallas_src>

<mosaic_0001>
module attributes {stable_mosaic.version = 11 : i64} {
  func.func @lstm_mlp_kernel(%arg0: i32, %arg1: memref<8x8x8xf32, #tpu.memory_space<vmem>>, %arg2: memref<200x256xf32, #tpu.memory_space<vmem>>, %arg3: memref<2x256xf32, #tpu.memory_space<vmem>>, %arg4: memref<320x128xf32, #tpu.memory_space<vmem>>, %arg5: memref<3x128xf32, #tpu.memory_space<vmem>>, %arg6: memref<8x128xf32, #tpu.memory_space<vmem>>) attributes {dimension_semantics = [#tpu.dimension_semantics<parallel>], iteration_bounds = array<i64: 1>, scalar_prefetch = 0 : i64, scratch_operands = 0 : i64, tpu.core_type = #tpu.core_type<tc>, window_params = [{transform_indices = @transform_0, window_bounds = array<i64: 8, 8, 8>}, {pipeline_mode = #tpu.pipeline_mode<synchronous>, transform_indices = @transform_1, window_bounds = array<i64: 200, 256>}, {pipeline_mode = #tpu.pipeline_mode<synchronous>, transform_indices = @transform_2, window_bounds = array<i64: 2, 256>}, {pipeline_mode = #tpu.pipeline_mode<synchronous>, transform_indices = @transform_3, window_bounds = array<i64: 320, 128>}, {pipeline_mode = #tpu.pipeline_mode<synchronous>, transform_indices = @transform_4, window_bounds = array<i64: 3, 128>}, {transform_indices = @transform_5, window_bounds = array<i64: 8, 128>}]} {
    %c0 = arith.constant 0 : index
    %c0_0 = arith.constant 0 : index
    %0 = vector.load %arg3[%c0, %c0_0] : memref<2x256xf32, #tpu.memory_space<vmem>>, vector<1x256xf32>
    %1 = vector.shape_cast %0 : vector<1x256xf32> to vector<1x256xf32>
    %2 = vector.broadcast %1 : vector<1x256xf32> to vector<8x256xf32>
    %c1 = arith.constant 1 : index
    %c0_1 = arith.constant 0 : index
    %3 = vector.load %arg3[%c1, %c0_1] : memref<2x256xf32, #tpu.memory_space<vmem>>, vector<1x256xf32>
    %4 = vector.shape_cast %3 : vector<1x256xf32> to vector<1x256xf32>
    %5 = vector.broadcast %4 : vector<1x256xf32> to vector<8x256xf32>
    %cst = arith.constant 0.000000e+00 : f32
    %6 = vector.broadcast %cst : f32 to vector<8x64xf32>
    %c0_i32 = arith.constant 0 : i32
    %7 = arith.index_cast %c0_i32 : i32 to index
    %c0_2 = arith.constant 0 : index
    %c0_3 = arith.constant 0 : index
    %8 = vector.load %arg1[%7, %c0_2, %c0_3] : memref<8x8x8xf32, #tpu.memory_space<vmem>>, vector<1x8x8xf32>
    %9 = vector.shape_cast %8 : vector<1x8x8xf32> to vector<8x8xf32>
    %c0_4 = arith.constant 0 : index
    %c0_5 = arith.constant 0 : index
    %10 = vector.load %arg2[%c0_4, %c0_5] : memref<200x256xf32, #tpu.memory_space<vmem>>, vector<8x256xf32>
    %cst_6 = arith.constant dense<0.000000e+00> : vector<8x256xf32>
    %11 = tpu.matmul %9, %10, %cst_6 {dimension_numbers = #tpu.dot_dimension_numbers<[1], [0], [0], [1], [0, 0, 1, 1], [], []>} : vector<8x8xf32>, vector<8x256xf32>, vector<8x256xf32> -> vector<8x256xf32>
    %12 = arith.addf %11, %2 : vector<8x256xf32>
    %c8 = arith.constant 8 : index
    %c0_7 = arith.constant 0 : index
    %13 = vector.load %arg2[%c8, %c0_7] : memref<200x256xf32, #tpu.memory_space<vmem>>, vector<64x256xf32>
    %cst_8 = arith.constant dense<0.000000e+00> : vector<8x256xf32>
    %14 = tpu.matmul %6, %13, %cst_8 {dimension_numbers = #tpu.dot_dimension_numbers<[1], [0], [0], [1], [0, 0, 1, 1], [], []>} : vector<8x64xf32>, vector<64x256xf32>, vector<8x256xf32> -> vector<8x256xf32>
    %15 = arith.addf %12, %14 : vector<8x256xf32>
    %16 = vector.extract_strided_slice %15 {offsets = [0, 0], sizes = [8, 192], strides = [1, 1]} : vector<8x256xf32> to vector<8x192xf32>
    %17 = arith.negf %16 : vector<8x192xf32>
    %18 = math.exp %17 : vector<8x192xf32>
    %cst_9 = arith.constant 1.000000e+00 : f32
    %19 = vector.broadcast %cst_9 : f32 to vector<8x192xf32>
    %20 = arith.addf %19, %18 : vector<8x192xf32>
    %21 = arith.divf %19, %20 : vector<8x192xf32>
    %22 = vector.extract_strided_slice %15 {offsets = [0, 192], sizes = [8, 64], strides = [1, 1]} : vector<8x256xf32> to vector<8x64xf32>
    %23 = math.tanh %22 : vector<8x64xf32>
    %24 = vector.extract_strided_slice %21 {offsets = [0, 0], sizes = [8, 64], strides = [1, 1]} : vector<8x192xf32> to vector<8x64xf32>
    %25 = vector.extract_strided_slice %21 {offsets = [0, 64], sizes = [8, 64], strides = [1, 1]} : vector<8x192xf32> to vector<8x64xf32>
    %26 = vector.extract_strided_slice %21 {offsets = [0, 128], sizes = [8, 64], strides = [1, 1]} : vector<8x192xf32> to vector<8x64xf32>
    %27 = arith.mulf %25, %6 : vector<8x64xf32>
    %28 = arith.mulf %24, %23 : vector<8x64xf32>
    %29 = arith.addf %27, %28 : vector<8x64xf32>
    %30 = math.tanh %29 : vector<8x64xf32>
    %31 = arith.mulf %26, %30 : vector<8x64xf32>
    %c72 = arith.constant 72 : index
    %c0_10 = arith.constant 0 : index
    %32 = vector.load %arg2[%c72, %c0_10] : memref<200x256xf32, #tpu.memory_space<vmem>>, vector<64x256xf32>
    %cst_11 = arith.constant dense<0.000000e+00> : vector<8x256xf32>
    %33 = tpu.matmul %31, %32, %cst_11 {dimension_numbers = #tpu.dot_dimension_numbers<[1], [0], [0], [1], [0, 0, 1, 1], [], []>} : vector<8x64xf32>, vector<64x256xf32>, vector<8x256xf32> -> vector<8x256xf32>
    %34 = arith.addf %5, %33 : vector<8x256xf32>
    %35 = vector.extract_strided_slice %34 {offsets = [0, 0], sizes = [8, 192], strides = [1, 1]} : vector<8x256xf32> to vector<8x192xf32>
    %36 = arith.negf %35 : vector<8x192xf32>
    %37 = math.exp %36 : vector<8x192xf32>
    %cst_12 = arith.constant 1.000000e+00 : f32
    %38 = vector.broadcast %cst_12 : f32 to vector<8x192xf32>
    %39 = arith.addf %38, %37 : vector<8x192xf32>
    %40 = arith.divf %38, %39 : vector<8x192xf32>
    %41 = vector.extract_strided_slice %34 {offsets = [0, 192], sizes = [8, 64], strides = [1, 1]} : vector<8x256xf32> to vector<8x64xf32>
    %42 = math.tanh %41 : vector<8x64xf32>
    %43 = vector.extract_strided_slice %40 {offsets = [0, 0], sizes = [8, 64], strides = [1, 1]} : vector<8x192xf32> to vector<8x64xf32>
    %44 = vector.extract_strided_slice %40 {offsets = [0, 64], sizes = [8, 64], strides = [1, 1]} : vector<8x192xf32> to vector<8x64xf32>
    %45 = vector.extract_strided_slice %40 {offsets = [0, 128], sizes = [8, 64], strides = [1, 1]} : vector<8x192xf32> to vector<8x64xf32>
    %46 = arith.mulf %44, %6 : vector<8x64xf32>
    %47 = arith.mulf %43, %42 : vector<8x64xf32>
    %48 = arith.addf %46, %47 : vector<8x64xf32>
    %49 = math.tanh %48 : vector<8x64xf32>
    %50 = arith.mulf %45, %49 : vector<8x64xf32>
    %c136 = arith.constant 136 : index
    %c0_13 = arith.constant 0 : index
    %51 = vector.load %arg2[%c136, %c0_13] : memref<200x256xf32, #tpu.memory_space<vmem>>, vector<64x256xf32>
    %cst_14 = arith.constant dense<0.000000e+00> : vector<8x256xf32>
    %52 = tpu.matmul %50, %51, %cst_14 {dimension_numbers = #tpu.dot_dimension_numbers<[1], [0], [0], [1], [0, 0, 1, 1], [], []>} : vector<8x64xf32>, vector<64x256xf32>, vector<8x256xf32> -> vector<8x256xf32>
    %53 = arith.addf %52, %5 : vector<8x256xf32>
    %c1_i32 = arith.constant 1 : i32
    %54 = arith.index_cast %c1_i32 : i32 to index
    %c0_15 = arith.constant 0 : index
    %c0_16 = arith.constant 0 : index
    %55 = vector.load %arg1[%54, %c0_15, %c0_16] : memref<8x8x8xf32, #tpu.memory_space<vmem>>, vector<1x8x8xf32>
    %56 = vector.shape_cast %55 : vector<1x8x8xf32> to vector<8x8xf32>
    %c0_17 = arith.constant 0 : index
    %c0_18 = arith.constant 0 : index
    %57 = vector.load %arg2[%c0_17, %c0_18] : memref<200x256xf32, #tpu.memory_space<vmem>>, vector<8x256xf32>
    %cst_19 = arith.constant dense<0.000000e+00> : vector<8x256xf32>
    %58 = tpu.matmul %56, %57, %cst_19 {dimension_numbers = #tpu.dot_dimension_numbers<[1], [0], [0], [1], [0, 0, 1, 1], [], []>} : vector<8x8xf32>, vector<8x256xf32>, vector<8x256xf32> -> vector<8x256xf32>
    %59 = arith.addf %58, %2 : vector<8x256xf32>
    %c8_20 = arith.constant 8 : index
    %c0_21 = arith.constant 0 : index
    %60 = vector.load %arg2[%c8_20, %c0_21] : memref<200x256xf32, #tpu.memory_space<vmem>>, vector<64x256xf32>
    %cst_22 = arith.constant dense<0.000000e+00> : vector<8x256xf32>
    %61 = tpu.matmul %31, %60, %cst_22 {dimension_numbers = #tpu.dot_dimension_numbers<[1], [0], [0], [1], [0, 0, 1, 1], [], []>} : vector<8x64xf32>, vector<64x256xf32>, vector<8x256xf32> -> vector<8x256xf32>
    %62 = arith.addf %59, %61 : vector<8x256xf32>
    %63 = vector.extract_strided_slice %62 {offsets = [0, 0], sizes = [8, 192], strides = [1, 1]} : vector<8x256xf32> to vector<8x192xf32>
    %64 = arith.negf %63 : vector<8x192xf32>
    %65 = math.exp %64 : vector<8x192xf32>
    %cst_23 = arith.constant 1.000000e+00 : f32
    %66 = vector.broadcast %cst_23 : f32 to vector<8x192xf32>
    %67 = arith.addf %66, %65 : vector<8x192xf32>
    %68 = arith.divf %66, %67 : vector<8x192xf32>
    %69 = vector.extract_strided_slice %62 {offsets = [0, 192], sizes = [8, 64], strides = [1, 1]} : vector<8x256xf32> to vector<8x64xf32>
    %70 = math.tanh %69 : vector<8x64xf32>
    %71 = vector.extract_strided_slice %68 {offsets = [0, 0], sizes = [8, 64], strides = [1, 1]} : vector<8x192xf32> to vector<8x64xf32>
    %72 = vector.extract_strided_slice %68 {offsets = [0, 64], sizes = [8, 64], strides = [1, 1]} : vector<8x192xf32> to vector<8x64xf32>
    %73 = vector.extract_strided_slice %68 {offsets = [0, 128], sizes = [8, 64], strides = [1, 1]} : vector<8x192xf32> to vector<8x64xf32>
    %74 = arith.mulf %72, %29 : vector<8x64xf32>
    %75 = arith.mulf %71, %70 : vector<8x64xf32>
    %76 = arith.addf %74, %75 : vector<8x64xf32>
    %77 = math.tanh %76 : vector<8x64xf32>
    %78 = arith.mulf %73, %77 : vector<8x64xf32>
    %c72_24 = arith.constant 72 : index
    %c0_25 = arith.constant 0 : index
    %79 = vector.load %arg2[%c72_24, %c0_25] : memref<200x256xf32, #tpu.memory_space<vmem>>, vector<64x256xf32>
    %cst_26 = arith.constant dense<0.000000e+00> : vector<8x256xf32>
    %80 = tpu.matmul %78, %79, %cst_26 {dimension_numbers = #tpu.dot_dimension_numbers<[1], [0], [0], [1], [0, 0, 1, 1], [], []>} : vector<8x64xf32>, vector<64x256xf32>, vector<8x256xf32> -> vector<8x256xf32>
    %81 = arith.addf %53, %80 : vector<8x256xf32>
    %82 = vector.extract_strided_slice %81 {offsets = [0, 0], sizes = [8, 192], strides = [1, 1]} : vector<8x256xf32> to vector<8x192xf32>
    %83 = arith.negf %82 : vector<8x192xf32>
    %84 = math.exp %83 : vector<8x192xf32>
    %cst_27 = arith.constant 1.000000e+00 : f32
    %85 = vector.broadcast %cst_27 : f32 to vector<8x192xf32>
    %86 = arith.addf %85, %84 : vector<8x192xf32>
    %87 = arith.divf %85, %86 : vector<8x192xf32>
    %88 = vector.extract_strided_slice %81 {offsets = [0, 192], sizes = [8, 64], strides = [1, 1]} : vector<8x256xf32> to vector<8x64xf32>
    %89 = math.tanh %88 : vector<8x64xf32>
    %90 = vector.extract_strided_slice %87 {offsets = [0, 0], sizes = [8, 64], strides = [1, 1]} : vector<8x192xf32> to vector<8x64xf32>
    %91 = vector.extract_strided_slice %87 {offsets = [0, 64], sizes = [8, 64], strides = [1, 1]} : vector<8x192xf32> to vector<8x64xf32>
    %92 = vector.extract_strided_slice %87 {offsets = [0, 128], sizes = [8, 64], strides = [1, 1]} : vector<8x192xf32> to vector<8x64xf32>
    %93 = arith.mulf %91, %48 : vector<8x64xf32>
    %94 = arith.mulf %90, %89 : vector<8x64xf32>
    %95 = arith.addf %93, %94 : vector<8x64xf32>
    %96 = math.tanh %95 : vector<8x64xf32>
    %97 = arith.mulf %92, %96 : vector<8x64xf32>
    %c136_28 = arith.constant 136 : index
    %c0_29 = arith.constant 0 : index
    %98 = vector.load %arg2[%c136_28, %c0_29] : memref<200x256xf32, #tpu.memory_space<vmem>>, vector<64x256xf32>
    %cst_30 = arith.constant dense<0.000000e+00> : vector<8x256xf32>
    %99 = tpu.matmul %97, %98, %cst_30 {dimension_numbers = #tpu.dot_dimension_numbers<[1], [0], [0], [1], [0, 0, 1, 1], [], []>} : vector<8x64xf32>, vector<64x256xf32>, vector<8x256xf32> -> vector<8x256xf32>
    %100 = arith.addf %99, %5 : vector<8x256xf32>
    %c2_i32 = arith.constant 2 : i32
    %101 = arith.index_cast %c2_i32 : i32 to index
    %c0_31 = arith.constant 0 : index
    %c0_32 = arith.constant 0 : index
    %102 = vector.load %arg1[%101, %c0_31, %c0_32] : memref<8x8x8xf32, #tpu.memory_space<vmem>>, vector<1x8x8xf32>
    %103 = vector.shape_cast %102 : vector<1x8x8xf32> to vector<8x8xf32>
    %c0_33 = arith.constant 0 : index
    %c0_34 = arith.constant 0 : index
    %104 = vector.load %arg2[%c0_33, %c0_34] : memref<200x256xf32, #tpu.memory_space<vmem>>, vector<8x256xf32>
    %cst_35 = arith.constant dense<0.000000e+00> : vector<8x256xf32>
    %105 = tpu.matmul %103, %104, %cst_35 {dimension_numbers = #tpu.dot_dimension_numbers<[1], [0], [0], [1], [0, 0, 1, 1], [], []>} : vector<8x8xf32>, vector<8x256xf32>, vector<8x256xf32> -> vector<8x256xf32>
    %106 = arith.addf %105, %2 : vector<8x256xf32>
    %c8_36 = arith.constant 8 : index
    %c0_37 = arith.constant 0 : index
    %107 = vector.load %arg2[%c8_36, %c0_37] : memref<200x256xf32, #tpu.memory_space<vmem>>, vector<64x256xf32>
    %cst_38 = arith.constant dense<0.000000e+00> : vector<8x256xf32>
    %108 = tpu.matmul %78, %107, %cst_38 {dimension_numbers = #tpu.dot_dimension_numbers<[1], [0], [0], [1], [0, 0, 1, 1], [], []>} : vector<8x64xf32>, vector<64x256xf32>, vector<8x256xf32> -> vector<8x256xf32>
    %109 = arith.addf %106, %108 : vector<8x256xf32>
    %110 = vector.extract_strided_slice %109 {offsets = [0, 0], sizes = [8, 192], strides = [1, 1]} : vector<8x256xf32> to vector<8x192xf32>
    %111 = arith.negf %110 : vector<8x192xf32>
    %112 = math.exp %111 : vector<8x192xf32>
    %cst_39 = arith.constant 1.000000e+00 : f32
    %113 = vector.broadcast %cst_39 : f32 to vector<8x192xf32>
    %114 = arith.addf %113, %112 : vector<8x192xf32>
    %115 = arith.divf %113, %114 : vector<8x192xf32>
    %116 = vector.extract_strided_slice %109 {offsets = [0, 192], sizes = [8, 64], strides = [1, 1]} : vector<8x256xf32> to vector<8x64xf32>
    %117 = math.tanh %116 : vector<8x64xf32>
    %118 = vector.extract_strided_slice %115 {offsets = [0, 0], sizes = [8, 64], strides = [1, 1]} : vector<8x192xf32> to vector<8x64xf32>
    %119 = vector.extract_strided_slice %115 {offsets = [0, 64], sizes = [8, 64], strides = [1, 1]} : vector<8x192xf32> to vector<8x64xf32>
    %120 = vector.extract_strided_slice %115 {offsets = [0, 128], sizes = [8, 64], strides = [1, 1]} : vector<8x192xf32> to vector<8x64xf32>
    %121 = arith.mulf %119, %76 : vector<8x64xf32>
    %122 = arith.mulf %118, %117 : vector<8x64xf32>
    %123 = arith.addf %121, %122 : vector<8x64xf32>
    %124 = math.tanh %123 : vector<8x64xf32>
    %125 = arith.mulf %120, %124 : vector<8x64xf32>
    %c72_40 = arith.constant 72 : index
    %c0_41 = arith.constant 0 : index
    %126 = vector.load %arg2[%c72_40, %c0_41] : memref<200x256xf32, #tpu.memory_space<vmem>>, vector<64x256xf32>
    %cst_42 = arith.constant dense<0.000000e+00> : vector<8x256xf32>
    %127 = tpu.matmul %125, %126, %cst_42 {dimension_numbers = #tpu.dot_dimension_numbers<[1], [0], [0], [1], [0, 0, 1, 1], [], []>} : vector<8x64xf32>, vector<64x256xf32>, vector<8x256xf32> -> vector<8x256xf32>
    %128 = arith.addf %100, %127 : vector<8x256xf32>
    %129 = vector.extract_strided_slice %128 {offsets = [0, 0], sizes = [8, 192], strides = [1, 1]} : vector<8x256xf32> to vector<8x192xf32>
    %130 = arith.negf %129 : vector<8x192xf32>
    %131 = math.exp %130 : vector<8x192xf32>
    %cst_43 = arith.constant 1.000000e+00 : f32
    %132 = vector.broadcast %cst_43 : f32 to vector<8x192xf32>
    %133 = arith.addf %132, %131 : vector<8x192xf32>
    %134 = arith.divf %132, %133 : vector<8x192xf32>
    %135 = vector.extract_strided_slice %128 {offsets = [0, 192], sizes = [8, 64], strides = [1, 1]} : vector<8x256xf32> to vector<8x64xf32>
    %136 = math.tanh %135 : vector<8x64xf32>
    %137 = vector.extract_strided_slice %134 {offsets = [0, 0], sizes = [8, 64], strides = [1, 1]} : vector<8x192xf32> to vector<8x64xf32>
    %138 = vector.extract_strided_slice %134 {offsets = [0, 64], sizes = [8, 64], strides = [1, 1]} : vector<8x192xf32> to vector<8x64xf32>
    %139 = vector.extract_strided_slice %134 {offsets = [0, 128], sizes = [8, 64], strides = [1, 1]} : vector<8x192xf32> to vector<8x64xf32>
    %140 = arith.mulf %138, %95 : vector<8x64xf32>
    %141 = arith.mulf %137, %136 : vector<8x64xf32>
    %142 = arith.addf %140, %141 : vector<8x64xf32>
    %143 = math.tanh %142 : vector<8x64xf32>
    %144 = arith.mulf %139, %143 : vector<8x64xf32>
    %c136_44 = arith.constant 136 : index
    %c0_45 = arith.constant 0 : index
    %145 = vector.load %arg2[%c136_44, %c0_45] : memref<200x256xf32, #tpu.memory_space<vmem>>, vector<64x256xf32>
    %cst_46 = arith.constant dense<0.000000e+00> : vector<8x256xf32>
    %146 = tpu.matmul %144, %145, %cst_46 {dimension_numbers = #tpu.dot_dimension_numbers<[1], [0], [0], [1], [0, 0, 1, 1], [], []>} : vector<8x64xf32>, vector<64x256xf32>, vector<8x256xf32> -> vector<8x256xf32>
    %147 = arith.addf %146, %5 : vector<8x256xf32>
    %c3_i32 = arith.constant 3 : i32
    %148 = arith.index_cast %c3_i32 : i32 to index
    %c0_47 = arith.constant 0 : index
    %c0_48 = arith.constant 0 : index
    %149 = vector.load %arg1[%148, %c0_47, %c0_48] : memref<8x8x8xf32, #tpu.memory_space<vmem>>, vector<1x8x8xf32>
    %150 = vector.shape_cast %149 : vector<1x8x8xf32> to vector<8x8xf32>
    %c0_49 = arith.constant 0 : index
    %c0_50 = arith.constant 0 : index
    %151 = vector.load %arg2[%c0_49, %c0_50] : memref<200x256xf32, #tpu.memory_space<vmem>>, vector<8x256xf32>
    %cst_51 = arith.constant dense<0.000000e+00> : vector<8x256xf32>
    %152 = tpu.matmul %150, %151, %cst_51 {dimension_numbers = #tpu.dot_dimension_numbers<[1], [0], [0], [1], [0, 0, 1, 1], [], []>} : vector<8x8xf32>, vector<8x256xf32>, vector<8x256xf32> -> vector<8x256xf32>
    %153 = arith.addf %152, %2 : vector<8x256xf32>
    %c8_52 = arith.constant 8 : index
    %c0_53 = arith.constant 0 : index
    %154 = vector.load %arg2[%c8_52, %c0_53] : memref<200x256xf32, #tpu.memory_space<vmem>>, vector<64x256xf32>
    %cst_54 = arith.constant dense<0.000000e+00> : vector<8x256xf32>
    %155 = tpu.matmul %125, %154, %cst_54 {dimension_numbers = #tpu.dot_dimension_numbers<[1], [0], [0], [1], [0, 0, 1, 1], [], []>} : vector<8x64xf32>, vector<64x256xf32>, vector<8x256xf32> -> vector<8x256xf32>
    %156 = arith.addf %153, %155 : vector<8x256xf32>
    %157 = vector.extract_strided_slice %156 {offsets = [0, 0], sizes = [8, 192], strides = [1, 1]} : vector<8x256xf32> to vector<8x192xf32>
    %158 = arith.negf %157 : vector<8x192xf32>
    %159 = math.exp %158 : vector<8x192xf32>
    %cst_55 = arith.constant 1.000000e+00 : f32
    %160 = vector.broadcast %cst_55 : f32 to vector<8x192xf32>
    %161 = arith.addf %160, %159 : vector<8x192xf32>
    %162 = arith.divf %160, %161 : vector<8x192xf32>
    %163 = vector.extract_strided_slice %156 {offsets = [0, 192], sizes = [8, 64], strides = [1, 1]} : vector<8x256xf32> to vector<8x64xf32>
    %164 = math.tanh %163 : vector<8x64xf32>
    %165 = vector.extract_strided_slice %162 {offsets = [0, 0], sizes = [8, 64], strides = [1, 1]} : vector<8x192xf32> to vector<8x64xf32>
    %166 = vector.extract_strided_slice %162 {offsets = [0, 64], sizes = [8, 64], strides = [1, 1]} : vector<8x192xf32> to vector<8x64xf32>
    %167 = vector.extract_strided_slice %162 {offsets = [0, 128], sizes = [8, 64], strides = [1, 1]} : vector<8x192xf32> to vector<8x64xf32>
    %168 = arith.mulf %166, %123 : vector<8x64xf32>
    %169 = arith.mulf %165, %164 : vector<8x64xf32>
    %170 = arith.addf %168, %169 : vector<8x64xf32>
    %171 = math.tanh %170 : vector<8x64xf32>
    %172 = arith.mulf %167, %171 : vector<8x64xf32>
    %c72_56 = arith.constant 72 : index
    %c0_57 = arith.constant 0 : index
    %173 = vector.load %arg2[%c72_56, %c0_57] : memref<200x256xf32, #tpu.memory_space<vmem>>, vector<64x256xf32>
    %cst_58 = arith.constant dense<0.000000e+00> : vector<8x256xf32>
    %174 = tpu.matmul %172, %173, %cst_58 {dimension_numbers = #tpu.dot_dimension_numbers<[1], [0], [0], [1], [0, 0, 1, 1], [], []>} : vector<8x64xf32>, vector<64x256xf32>, vector<8x256xf32> -> vector<8x256xf32>
    %175 = arith.addf %147, %174 : vector<8x256xf32>
    %176 = vector.extract_strided_slice %175 {offsets = [0, 0], sizes = [8, 192], strides = [1, 1]} : vector<8x256xf32> to vector<8x192xf32>
    %177 = arith.negf %176 : vector<8x192xf32>
    %178 = math.exp %177 : vector<8x192xf32>
    %cst_59 = arith.constant 1.000000e+00 : f32
    %179 = vector.broadcast %cst_59 : f32 to vector<8x192xf32>
    %180 = arith.addf %179, %178 : vector<8x192xf32>
    %181 = arith.divf %179, %180 : vector<8x192xf32>
    %182 = vector.extract_strided_slice %175 {offsets = [0, 192], sizes = [8, 64], strides = [1, 1]} : vector<8x256xf32> to vector<8x64xf32>
    %183 = math.tanh %182 : vector<8x64xf32>
    %184 = vector.extract_strided_slice %181 {offsets = [0, 0], sizes = [8, 64], strides = [1, 1]} : vector<8x192xf32> to vector<8x64xf32>
    %185 = vector.extract_strided_slice %181 {offsets = [0, 64], sizes = [8, 64], strides = [1, 1]} : vector<8x192xf32> to vector<8x64xf32>
    %186 = vector.extract_strided_slice %181 {offsets = [0, 128], sizes = [8, 64], strides = [1, 1]} : vector<8x192xf32> to vector<8x64xf32>
    %187 = arith.mulf %185, %142 : vector<8x64xf32>
    %188 = arith.mulf %184, %183 : vector<8x64xf32>
    %189 = arith.addf %187, %188 : vector<8x64xf32>
    %190 = math.tanh %189 : vector<8x64xf32>
    %191 = arith.mulf %186, %190 : vector<8x64xf32>
    %c136_60 = arith.constant 136 : index
    %c0_61 = arith.constant 0 : index
    %192 = vector.load %arg2[%c136_60, %c0_61] : memref<200x256xf32, #tpu.memory_space<vmem>>, vector<64x256xf32>
    %cst_62 = arith.constant dense<0.000000e+00> : vector<8x256xf32>
    %193 = tpu.matmul %191, %192, %cst_62 {dimension_numbers = #tpu.dot_dimension_numbers<[1], [0], [0], [1], [0, 0, 1, 1], [], []>} : vector<8x64xf32>, vector<64x256xf32>, vector<8x256xf32> -> vector<8x256xf32>
    %194 = arith.addf %193, %5 : vector<8x256xf32>
    %c4_i32 = arith.constant 4 : i32
    %195 = arith.index_cast %c4_i32 : i32 to index
    %c0_63 = arith.constant 0 : index
    %c0_64 = arith.constant 0 : index
    %196 = vector.load %arg1[%195, %c0_63, %c0_64] : memref<8x8x8xf32, #tpu.memory_space<vmem>>, vector<1x8x8xf32>
    %197 = vector.shape_cast %196 : vector<1x8x8xf32> to vector<8x8xf32>
    %c0_65 = arith.constant 0 : index
    %c0_66 = arith.constant 0 : index
    %198 = vector.load %arg2[%c0_65, %c0_66] : memref<200x256xf32, #tpu.memory_space<vmem>>, vector<8x256xf32>
    %cst_67 = arith.constant dense<0.000000e+00> : vector<8x256xf32>
    %199 = tpu.matmul %197, %198, %cst_67 {dimension_numbers = #tpu.dot_dimension_numbers<[1], [0], [0], [1], [0, 0, 1, 1], [], []>} : vector<8x8xf32>, vector<8x256xf32>, vector<8x256xf32> -> vector<8x256xf32>
    %200 = arith.addf %199, %2 : vector<8x256xf32>
    %c8_68 = arith.constant 8 : index
    %c0_69 = arith.constant 0 : index
    %201 = vector.load %arg2[%c8_68, %c0_69] : memref<200x256xf32, #tpu.memory_space<vmem>>, vector<64x256xf32>
    %cst_70 = arith.constant dense<0.000000e+00> : vector<8x256xf32>
    %202 = tpu.matmul %172, %201, %cst_70 {dimension_numbers = #tpu.dot_dimension_numbers<[1], [0], [0], [1], [0, 0, 1, 1], [], []>} : vector<8x64xf32>, vector<64x256xf32>, vector<8x256xf32> -> vector<8x256xf32>
    %203 = arith.addf %200, %202 : vector<8x256xf32>
    %204 = vector.extract_strided_slice %203 {offsets = [0, 0], sizes = [8, 192], strides = [1, 1]} : vector<8x256xf32> to vector<8x192xf32>
    %205 = arith.negf %204 : vector<8x192xf32>
    %206 = math.exp %205 : vector<8x192xf32>
    %cst_71 = arith.constant 1.000000e+00 : f32
    %207 = vector.broadcast %cst_71 : f32 to vector<8x192xf32>
    %208 = arith.addf %207, %206 : vector<8x192xf32>
    %209 = arith.divf %207, %208 : vector<8x192xf32>
    %210 = vector.extract_strided_slice %203 {offsets = [0, 192], sizes = [8, 64], strides = [1, 1]} : vector<8x256xf32> to vector<8x64xf32>
    %211 = math.tanh %210 : vector<8x64xf32>
    %212 = vector.extract_strided_slice %209 {offsets = [0, 0], sizes = [8, 64], strides = [1, 1]} : vector<8x192xf32> to vector<8x64xf32>
    %213 = vector.extract_strided_slice %209 {offsets = [0, 64], sizes = [8, 64], strides = [1, 1]} : vector<8x192xf32> to vector<8x64xf32>
    %214 = vector.extract_strided_slice %209 {offsets = [0, 128], sizes = [8, 64], strides = [1, 1]} : vector<8x192xf32> to vector<8x64xf32>
    %215 = arith.mulf %213, %170 : vector<8x64xf32>
    %216 = arith.mulf %212, %211 : vector<8x64xf32>
    %217 = arith.addf %215, %216 : vector<8x64xf32>
    %218 = math.tanh %217 : vector<8x64xf32>
    %219 = arith.mulf %214, %218 : vector<8x64xf32>
    %c72_72 = arith.constant 72 : index
    %c0_73 = arith.constant 0 : index
    %220 = vector.load %arg2[%c72_72, %c0_73] : memref<200x256xf32, #tpu.memory_space<vmem>>, vector<64x256xf32>
    %cst_74 = arith.constant dense<0.000000e+00> : vector<8x256xf32>
    %221 = tpu.matmul %219, %220, %cst_74 {dimension_numbers = #tpu.dot_dimension_numbers<[1], [0], [0], [1], [0, 0, 1, 1], [], []>} : vector<8x64xf32>, vector<64x256xf32>, vector<8x256xf32> -> vector<8x256xf32>
    %222 = arith.addf %194, %221 : vector<8x256xf32>
    %223 = vector.extract_strided_slice %222 {offsets = [0, 0], sizes = [8, 192], strides = [1, 1]} : vector<8x256xf32> to vector<8x192xf32>
    %224 = arith.negf %223 : vector<8x192xf32>
    %225 = math.exp %224 : vector<8x192xf32>
    %cst_75 = arith.constant 1.000000e+00 : f32
    %226 = vector.broadcast %cst_75 : f32 to vector<8x192xf32>
    %227 = arith.addf %226, %225 : vector<8x192xf32>
    %228 = arith.divf %226, %227 : vector<8x192xf32>
    %229 = vector.extract_strided_slice %222 {offsets = [0, 192], sizes = [8, 64], strides = [1, 1]} : vector<8x256xf32> to vector<8x64xf32>
    %230 = math.tanh %229 : vector<8x64xf32>
    %231 = vector.extract_strided_slice %228 {offsets = [0, 0], sizes = [8, 64], strides = [1, 1]} : vector<8x192xf32> to vector<8x64xf32>
    %232 = vector.extract_strided_slice %228 {offsets = [0, 64], sizes = [8, 64], strides = [1, 1]} : vector<8x192xf32> to vector<8x64xf32>
    %233 = vector.extract_strided_slice %228 {offsets = [0, 128], sizes = [8, 64], strides = [1, 1]} : vector<8x192xf32> to vector<8x64xf32>
    %234 = arith.mulf %232, %189 : vector<8x64xf32>
    %235 = arith.mulf %231, %230 : vector<8x64xf32>
    %236 = arith.addf %234, %235 : vector<8x64xf32>
    %237 = math.tanh %236 : vector<8x64xf32>
    %238 = arith.mulf %233, %237 : vector<8x64xf32>
    %c136_76 = arith.constant 136 : index
    %c0_77 = arith.constant 0 : index
    %239 = vector.load %arg2[%c136_76, %c0_77] : memref<200x256xf32, #tpu.memory_space<vmem>>, vector<64x256xf32>
    %cst_78 = arith.constant dense<0.000000e+00> : vector<8x256xf32>
    %240 = tpu.matmul %238, %239, %cst_78 {dimension_numbers = #tpu.dot_dimension_numbers<[1], [0], [0], [1], [0, 0, 1, 1], [], []>} : vector<8x64xf32>, vector<64x256xf32>, vector<8x256xf32> -> vector<8x256xf32>
    %241 = arith.addf %240, %5 : vector<8x256xf32>
    %c5_i32 = arith.constant 5 : i32
    %242 = arith.index_cast %c5_i32 : i32 to index
    %c0_79 = arith.constant 0 : index
    %c0_80 = arith.constant 0 : index
    %243 = vector.load %arg1[%242, %c0_79, %c0_80] : memref<8x8x8xf32, #tpu.memory_space<vmem>>, vector<1x8x8xf32>
    %244 = vector.shape_cast %243 : vector<1x8x8xf32> to vector<8x8xf32>
    %c0_81 = arith.constant 0 : index
    %c0_82 = arith.constant 0 : index
    %245 = vector.load %arg2[%c0_81, %c0_82] : memref<200x256xf32, #tpu.memory_space<vmem>>, vector<8x256xf32>
    %cst_83 = arith.constant dense<0.000000e+00> : vector<8x256xf32>
    %246 = tpu.matmul %244, %245, %cst_83 {dimension_numbers = #tpu.dot_dimension_numbers<[1], [0], [0], [1], [0, 0, 1, 1], [], []>} : vector<8x8xf32>, vector<8x256xf32>, vector<8x256xf32> -> vector<8x256xf32>
    %247 = arith.addf %246, %2 : vector<8x256xf32>
    %c8_84 = arith.constant 8 : index
    %c0_85 = arith.constant 0 : index
    %248 = vector.load %arg2[%c8_84, %c0_85] : memref<200x256xf32, #tpu.memory_space<vmem>>, vector<64x256xf32>
    %cst_86 = arith.constant dense<0.000000e+00> : vector<8x256xf32>
    %249 = tpu.matmul %219, %248, %cst_86 {dimension_numbers = #tpu.dot_dimension_numbers<[1], [0], [0], [1], [0, 0, 1, 1], [], []>} : vector<8x64xf32>, vector<64x256xf32>, vector<8x256xf32> -> vector<8x256xf32>
    %250 = arith.addf %247, %249 : vector<8x256xf32>
    %251 = vector.extract_strided_slice %250 {offsets = [0, 0], sizes = [8, 192], strides = [1, 1]} : vector<8x256xf32> to vector<8x192xf32>
    %252 = arith.negf %251 : vector<8x192xf32>
    %253 = math.exp %252 : vector<8x192xf32>
    %cst_87 = arith.constant 1.000000e+00 : f32
    %254 = vector.broadcast %cst_87 : f32 to vector<8x192xf32>
    %255 = arith.addf %254, %253 : vector<8x192xf32>
    %256 = arith.divf %254, %255 : vector<8x192xf32>
    %257 = vector.extract_strided_slice %250 {offsets = [0, 192], sizes = [8, 64], strides = [1, 1]} : vector<8x256xf32> to vector<8x64xf32>
    %258 = math.tanh %257 : vector<8x64xf32>
    %259 = vector.extract_strided_slice %256 {offsets = [0, 0], sizes = [8, 64], strides = [1, 1]} : vector<8x192xf32> to vector<8x64xf32>
    %260 = vector.extract_strided_slice %256 {offsets = [0, 64], sizes = [8, 64], strides = [1, 1]} : vector<8x192xf32> to vector<8x64xf32>
    %261 = vector.extract_strided_slice %256 {offsets = [0, 128], sizes = [8, 64], strides = [1, 1]} : vector<8x192xf32> to vector<8x64xf32>
    %262 = arith.mulf %260, %217 : vector<8x64xf32>
    %263 = arith.mulf %259, %258 : vector<8x64xf32>
    %264 = arith.addf %262, %263 : vector<8x64xf32>
    %265 = math.tanh %264 : vector<8x64xf32>
    %266 = arith.mulf %261, %265 : vector<8x64xf32>
    %c72_88 = arith.constant 72 : index
    %c0_89 = arith.constant 0 : index
    %267 = vector.load %arg2[%c72_88, %c0_89] : memref<200x256xf32, #tpu.memory_space<vmem>>, vector<64x256xf32>
    %cst_90 = arith.constant dense<0.000000e+00> : vector<8x256xf32>
    %268 = tpu.matmul %266, %267, %cst_90 {dimension_numbers = #tpu.dot_dimension_numbers<[1], [0], [0], [1], [0, 0, 1, 1], [], []>} : vector<8x64xf32>, vector<64x256xf32>, vector<8x256xf32> -> vector<8x256xf32>
    %269 = arith.addf %241, %268 : vector<8x256xf32>
    %270 = vector.extract_strided_slice %269 {offsets = [0, 0], sizes = [8, 192], strides = [1, 1]} : vector<8x256xf32> to vector<8x192xf32>
    %271 = arith.negf %270 : vector<8x192xf32>
    %272 = math.exp %271 : vector<8x192xf32>
    %cst_91 = arith.constant 1.000000e+00 : f32
    %273 = vector.broadcast %cst_91 : f32 to vector<8x192xf32>
    %274 = arith.addf %273, %272 : vector<8x192xf32>
    %275 = arith.divf %273, %274 : vector<8x192xf32>
    %276 = vector.extract_strided_slice %269 {offsets = [0, 192], sizes = [8, 64], strides = [1, 1]} : vector<8x256xf32> to vector<8x64xf32>
    %277 = math.tanh %276 : vector<8x64xf32>
    %278 = vector.extract_strided_slice %275 {offsets = [0, 0], sizes = [8, 64], strides = [1, 1]} : vector<8x192xf32> to vector<8x64xf32>
    %279 = vector.extract_strided_slice %275 {offsets = [0, 64], sizes = [8, 64], strides = [1, 1]} : vector<8x192xf32> to vector<8x64xf32>
    %280 = vector.extract_strided_slice %275 {offsets = [0, 128], sizes = [8, 64], strides = [1, 1]} : vector<8x192xf32> to vector<8x64xf32>
    %281 = arith.mulf %279, %236 : vector<8x64xf32>
    %282 = arith.mulf %278, %277 : vector<8x64xf32>
    %283 = arith.addf %281, %282 : vector<8x64xf32>
    %284 = math.tanh %283 : vector<8x64xf32>
    %285 = arith.mulf %280, %284 : vector<8x64xf32>
    %c136_92 = arith.constant 136 : index
    %c0_93 = arith.constant 0 : index
    %286 = vector.load %arg2[%c136_92, %c0_93] : memref<200x256xf32, #tpu.memory_space<vmem>>, vector<64x256xf32>
    %cst_94 = arith.constant dense<0.000000e+00> : vector<8x256xf32>
    %287 = tpu.matmul %285, %286, %cst_94 {dimension_numbers = #tpu.dot_dimension_numbers<[1], [0], [0], [1], [0, 0, 1, 1], [], []>} : vector<8x64xf32>, vector<64x256xf32>, vector<8x256xf32> -> vector<8x256xf32>
    %288 = arith.addf %287, %5 : vector<8x256xf32>
    %c6_i32 = arith.constant 6 : i32
    %289 = arith.index_cast %c6_i32 : i32 to index
    %c0_95 = arith.constant 0 : index
    %c0_96 = arith.constant 0 : index
    %290 = vector.load %arg1[%289, %c0_95, %c0_96] : memref<8x8x8xf32, #tpu.memory_space<vmem>>, vector<1x8x8xf32>
    %291 = vector.shape_cast %290 : vector<1x8x8xf32> to vector<8x8xf32>
    %c0_97 = arith.constant 0 : index
    %c0_98 = arith.constant 0 : index
    %292 = vector.load %arg2[%c0_97, %c0_98] : memref<200x256xf32, #tpu.memory_space<vmem>>, vector<8x256xf32>
    %cst_99 = arith.constant dense<0.000000e+00> : vector<8x256xf32>
    %293 = tpu.matmul %291, %292, %cst_99 {dimension_numbers = #tpu.dot_dimension_numbers<[1], [0], [0], [1], [0, 0, 1, 1], [], []>} : vector<8x8xf32>, vector<8x256xf32>, vector<8x256xf32> -> vector<8x256xf32>
    %294 = arith.addf %293, %2 : vector<8x256xf32>
    %c8_100 = arith.constant 8 : index
    %c0_101 = arith.constant 0 : index
    %295 = vector.load %arg2[%c8_100, %c0_101] : memref<200x256xf32, #tpu.memory_space<vmem>>, vector<64x256xf32>
    %cst_102 = arith.constant dense<0.000000e+00> : vector<8x256xf32>
    %296 = tpu.matmul %266, %295, %cst_102 {dimension_numbers = #tpu.dot_dimension_numbers<[1], [0], [0], [1], [0, 0, 1, 1], [], []>} : vector<8x64xf32>, vector<64x256xf32>, vector<8x256xf32> -> vector<8x256xf32>
    %297 = arith.addf %294, %296 : vector<8x256xf32>
    %298 = vector.extract_strided_slice %297 {offsets = [0, 0], sizes = [8, 192], strides = [1, 1]} : vector<8x256xf32> to vector<8x192xf32>
    %299 = arith.negf %298 : vector<8x192xf32>
    %300 = math.exp %299 : vector<8x192xf32>
    %cst_103 = arith.constant 1.000000e+00 : f32
    %301 = vector.broadcast %cst_103 : f32 to vector<8x192xf32>
    %302 = arith.addf %301, %300 : vector<8x192xf32>
    %303 = arith.divf %301, %302 : vector<8x192xf32>
    %304 = vector.extract_strided_slice %297 {offsets = [0, 192], sizes = [8, 64], strides = [1, 1]} : vector<8x256xf32> to vector<8x64xf32>
    %305 = math.tanh %304 : vector<8x64xf32>
    %306 = vector.extract_strided_slice %303 {offsets = [0, 0], sizes = [8, 64], strides = [1, 1]} : vector<8x192xf32> to vector<8x64xf32>
    %307 = vector.extract_strided_slice %303 {offsets = [0, 64], sizes = [8, 64], strides = [1, 1]} : vector<8x192xf32> to vector<8x64xf32>
    %308 = vector.extract_strided_slice %303 {offsets = [0, 128], sizes = [8, 64], strides = [1, 1]} : vector<8x192xf32> to vector<8x64xf32>
    %309 = arith.mulf %307, %264 : vector<8x64xf32>
    %310 = arith.mulf %306, %305 : vector<8x64xf32>
    %311 = arith.addf %309, %310 : vector<8x64xf32>
    %312 = math.tanh %311 : vector<8x64xf32>
    %313 = arith.mulf %308, %312 : vector<8x64xf32>
    %c72_104 = arith.constant 72 : index
    %c0_105 = arith.constant 0 : index
    %314 = vector.load %arg2[%c72_104, %c0_105] : memref<200x256xf32, #tpu.memory_space<vmem>>, vector<64x256xf32>
    %cst_106 = arith.constant dense<0.000000e+00> : vector<8x256xf32>
    %315 = tpu.matmul %313, %314, %cst_106 {dimension_numbers = #tpu.dot_dimension_numbers<[1], [0], [0], [1], [0, 0, 1, 1], [], []>} : vector<8x64xf32>, vector<64x256xf32>, vector<8x256xf32> -> vector<8x256xf32>
    %316 = arith.addf %288, %315 : vector<8x256xf32>
    %317 = vector.extract_strided_slice %316 {offsets = [0, 0], sizes = [8, 192], strides = [1, 1]} : vector<8x256xf32> to vector<8x192xf32>
    %318 = arith.negf %317 : vector<8x192xf32>
    %319 = math.exp %318 : vector<8x192xf32>
    %cst_107 = arith.constant 1.000000e+00 : f32
    %320 = vector.broadcast %cst_107 : f32 to vector<8x192xf32>
    %321 = arith.addf %320, %319 : vector<8x192xf32>
    %322 = arith.divf %320, %321 : vector<8x192xf32>
    %323 = vector.extract_strided_slice %316 {offsets = [0, 192], sizes = [8, 64], strides = [1, 1]} : vector<8x256xf32> to vector<8x64xf32>
    %324 = math.tanh %323 : vector<8x64xf32>
    %325 = vector.extract_strided_slice %322 {offsets = [0, 0], sizes = [8, 64], strides = [1, 1]} : vector<8x192xf32> to vector<8x64xf32>
    %326 = vector.extract_strided_slice %322 {offsets = [0, 64], sizes = [8, 64], strides = [1, 1]} : vector<8x192xf32> to vector<8x64xf32>
    %327 = vector.extract_strided_slice %322 {offsets = [0, 128], sizes = [8, 64], strides = [1, 1]} : vector<8x192xf32> to vector<8x64xf32>
    %328 = arith.mulf %326, %283 : vector<8x64xf32>
    %329 = arith.mulf %325, %324 : vector<8x64xf32>
    %330 = arith.addf %328, %329 : vector<8x64xf32>
    %331 = math.tanh %330 : vector<8x64xf32>
    %332 = arith.mulf %327, %331 : vector<8x64xf32>
    %c136_108 = arith.constant 136 : index
    %c0_109 = arith.constant 0 : index
    %333 = vector.load %arg2[%c136_108, %c0_109] : memref<200x256xf32, #tpu.memory_space<vmem>>, vector<64x256xf32>
    %cst_110 = arith.constant dense<0.000000e+00> : vector<8x256xf32>
    %334 = tpu.matmul %332, %333, %cst_110 {dimension_numbers = #tpu.dot_dimension_numbers<[1], [0], [0], [1], [0, 0, 1, 1], [], []>} : vector<8x64xf32>, vector<64x256xf32>, vector<8x256xf32> -> vector<8x256xf32>
    %335 = arith.addf %334, %5 : vector<8x256xf32>
    %c7_i32 = arith.constant 7 : i32
    %336 = arith.index_cast %c7_i32 : i32 to index
    %c0_111 = arith.constant 0 : index
    %c0_112 = arith.constant 0 : index
    %337 = vector.load %arg1[%336, %c0_111, %c0_112] : memref<8x8x8xf32, #tpu.memory_space<vmem>>, vector<1x8x8xf32>
    %338 = vector.shape_cast %337 : vector<1x8x8xf32> to vector<8x8xf32>
    %c0_113 = arith.constant 0 : index
    %c0_114 = arith.constant 0 : index
    %339 = vector.load %arg2[%c0_113, %c0_114] : memref<200x256xf32, #tpu.memory_space<vmem>>, vector<8x256xf32>
    %cst_115 = arith.constant dense<0.000000e+00> : vector<8x256xf32>
    %340 = tpu.matmul %338, %339, %cst_115 {dimension_numbers = #tpu.dot_dimension_numbers<[1], [0], [0], [1], [0, 0, 1, 1], [], []>} : vector<8x8xf32>, vector<8x256xf32>, vector<8x256xf32> -> vector<8x256xf32>
    %341 = arith.addf %340, %2 : vector<8x256xf32>
    %c8_116 = arith.constant 8 : index
    %c0_117 = arith.constant 0 : index
    %342 = vector.load %arg2[%c8_116, %c0_117] : memref<200x256xf32, #tpu.memory_space<vmem>>, vector<64x256xf32>
    %cst_118 = arith.constant dense<0.000000e+00> : vector<8x256xf32>
    %343 = tpu.matmul %313, %342, %cst_118 {dimension_numbers = #tpu.dot_dimension_numbers<[1], [0], [0], [1], [0, 0, 1, 1], [], []>} : vector<8x64xf32>, vector<64x256xf32>, vector<8x256xf32> -> vector<8x256xf32>
    %344 = arith.addf %341, %343 : vector<8x256xf32>
    %345 = vector.extract_strided_slice %344 {offsets = [0, 0], sizes = [8, 192], strides = [1, 1]} : vector<8x256xf32> to vector<8x192xf32>
    %346 = arith.negf %345 : vector<8x192xf32>
    %347 = math.exp %346 : vector<8x192xf32>
    %cst_119 = arith.constant 1.000000e+00 : f32
    %348 = vector.broadcast %cst_119 : f32 to vector<8x192xf32>
    %349 = arith.addf %348, %347 : vector<8x192xf32>
    %350 = arith.divf %348, %349 : vector<8x192xf32>
    %351 = vector.extract_strided_slice %344 {offsets = [0, 192], sizes = [8, 64], strides = [1, 1]} : vector<8x256xf32> to vector<8x64xf32>
    %352 = math.tanh %351 : vector<8x64xf32>
    %353 = vector.extract_strided_slice %350 {offsets = [0, 0], sizes = [8, 64], strides = [1, 1]} : vector<8x192xf32> to vector<8x64xf32>
    %354 = vector.extract_strided_slice %350 {offsets = [0, 64], sizes = [8, 64], strides = [1, 1]} : vector<8x192xf32> to vector<8x64xf32>
    %355 = vector.extract_strided_slice %350 {offsets = [0, 128], sizes = [8, 64], strides = [1, 1]} : vector<8x192xf32> to vector<8x64xf32>
    %356 = arith.mulf %354, %311 : vector<8x64xf32>
    %357 = arith.mulf %353, %352 : vector<8x64xf32>
    %358 = arith.addf %356, %357 : vector<8x64xf32>
    %359 = math.tanh %358 : vector<8x64xf32>
    %360 = arith.mulf %355, %359 : vector<8x64xf32>
    %c72_120 = arith.constant 72 : index
    %c0_121 = arith.constant 0 : index
    %361 = vector.load %arg2[%c72_120, %c0_121] : memref<200x256xf32, #tpu.memory_space<vmem>>, vector<64x256xf32>
    %cst_122 = arith.constant dense<0.000000e+00> : vector<8x256xf32>
    %362 = tpu.matmul %360, %361, %cst_122 {dimension_numbers = #tpu.dot_dimension_numbers<[1], [0], [0], [1], [0, 0, 1, 1], [], []>} : vector<8x64xf32>, vector<64x256xf32>, vector<8x256xf32> -> vector<8x256xf32>
    %363 = arith.addf %335, %362 : vector<8x256xf32>
    %364 = vector.extract_strided_slice %363 {offsets = [0, 0], sizes = [8, 192], strides = [1, 1]} : vector<8x256xf32> to vector<8x192xf32>
    %365 = arith.negf %364 : vector<8x192xf32>
    %366 = math.exp %365 : vector<8x192xf32>
    %cst_123 = arith.constant 1.000000e+00 : f32
    %367 = vector.broadcast %cst_123 : f32 to vector<8x192xf32>
    %368 = arith.addf %367, %366 : vector<8x192xf32>
    %369 = arith.divf %367, %368 : vector<8x192xf32>
    %370 = vector.extract_strided_slice %363 {offsets = [0, 192], sizes = [8, 64], strides = [1, 1]} : vector<8x256xf32> to vector<8x64xf32>
    %371 = math.tanh %370 : vector<8x64xf32>
    %372 = vector.extract_strided_slice %369 {offsets = [0, 0], sizes = [8, 64], strides = [1, 1]} : vector<8x192xf32> to vector<8x64xf32>
    %373 = vector.extract_strided_slice %369 {offsets = [0, 64], sizes = [8, 64], strides = [1, 1]} : vector<8x192xf32> to vector<8x64xf32>
    %374 = vector.extract_strided_slice %369 {offsets = [0, 128], sizes = [8, 64], strides = [1, 1]} : vector<8x192xf32> to vector<8x64xf32>
    %375 = arith.mulf %373, %330 : vector<8x64xf32>
    %376 = arith.mulf %372, %371 : vector<8x64xf32>
    %377 = arith.addf %375, %376 : vector<8x64xf32>
    %378 = math.tanh %377 : vector<8x64xf32>
    %379 = arith.mulf %374, %378 : vector<8x64xf32>
    %c136_124 = arith.constant 136 : index
    %c0_125 = arith.constant 0 : index
    %380 = vector.load %arg2[%c136_124, %c0_125] : memref<200x256xf32, #tpu.memory_space<vmem>>, vector<64x256xf32>
    %cst_126 = arith.constant dense<0.000000e+00> : vector<8x256xf32>
    %381 = tpu.matmul %379, %380, %cst_126 {dimension_numbers = #tpu.dot_dimension_numbers<[1], [0], [0], [1], [0, 0, 1, 1], [], []>} : vector<8x64xf32>, vector<64x256xf32>, vector<8x256xf32> -> vector<8x256xf32>
    %382 = arith.addf %381, %5 : vector<8x256xf32>
    %c8_i32 = arith.constant 8 : i32
    %c0_127 = arith.constant 0 : index
    %c0_128 = arith.constant 0 : index
    %383 = vector.load %arg4[%c0_127, %c0_128] : memref<320x128xf32, #tpu.memory_space<vmem>>, vector<64x128xf32>
    %cst_129 = arith.constant dense<0.000000e+00> : vector<8x128xf32>
    %384 = tpu.matmul %379, %383, %cst_129 {dimension_numbers = #tpu.dot_dimension_numbers<[1], [0], [0], [1], [0, 0, 1, 1], [], []>} : vector<8x64xf32>, vector<64x128xf32>, vector<8x128xf32> -> vector<8x128xf32>
    %c0_130 = arith.constant 0 : index
    %c0_131 = arith.constant 0 : index
    %385 = vector.load %arg5[%c0_130, %c0_131] : memref<3x128xf32, #tpu.memory_space<vmem>>, vector<1x128xf32>
    %386 = vector.broadcast %385 : vector<1x128xf32> to vector<8x128xf32>
    %387 = arith.addf %384, %386 : vector<8x128xf32>
    %cst_132 = arith.constant 0.000000e+00 : f32
    %388 = vector.broadcast %cst_132 : f32 to vector<8x128xf32>
    %389 = arith.maximumf %387, %388 : vector<8x128xf32>
    %c64 = arith.constant 64 : index
    %c0_133 = arith.constant 0 : index
    %390 = vector.load %arg4[%c64, %c0_133] : memref<320x128xf32, #tpu.memory_space<vmem>>, vector<128x128xf32>
    %cst_134 = arith.constant dense<0.000000e+00> : vector<8x128xf32>
    %391 = tpu.matmul %389, %390, %cst_134 {dimension_numbers = #tpu.dot_dimension_numbers<[1], [0], [0], [1], [0, 0, 1, 1], [], []>} : vector<8x128xf32>, vector<128x128xf32>, vector<8x128xf32> -> vector<8x128xf32>
    %c1_135 = arith.constant 1 : index
    %c0_136 = arith.constant 0 : index
    %392 = vector.load %arg5[%c1_135, %c0_136] : memref<3x128xf32, #tpu.memory_space<vmem>>, vector<1x128xf32>
    %393 = vector.broadcast %392 : vector<1x128xf32> to vector<8x128xf32>
    %394 = arith.addf %391, %393 : vector<8x128xf32>
    %cst_137 = arith.constant 0.000000e+00 : f32
    %395 = vector.broadcast %cst_137 : f32 to vector<8x128xf32>
    %396 = arith.maximumf %394, %395 : vector<8x128xf32>
    %c192 = arith.constant 192 : index
    %c0_138 = arith.constant 0 : index
    %397 = vector.load %arg4[%c192, %c0_138] : memref<320x128xf32, #tpu.memory_space<vmem>>, vector<128x128xf32>
    %cst_139 = arith.constant dense<0.000000e+00> : vector<8x128xf32>
    %398 = tpu.matmul %396, %397, %cst_139 {dimension_numbers = #tpu.dot_dimension_numbers<[1], [0], [0], [1], [0, 0, 1, 1], [], []>} : vector<8x128xf32>, vector<128x128xf32>, vector<8x128xf32> -> vector<8x128xf32>
    %c2 = arith.constant 2 : index
    %c0_140 = arith.constant 0 : index
    %399 = vector.load %arg5[%c2, %c0_140] : memref<3x128xf32, #tpu.memory_space<vmem>>, vector<1x128xf32>
    %400 = vector.broadcast %399 : vector<1x128xf32> to vector<8x128xf32>
    %401 = arith.addf %398, %400 : vector<8x128xf32>
    %c0_141 = arith.constant 0 : index
    %c0_142 = arith.constant 0 : index
    %402 = vector.load %arg6[%c0_141, %c0_142] : memref<8x128xf32, #tpu.memory_space<vmem>>, vector<8x128xf32>
    tpu.vector_store %arg6[%c0_141, %c0_142], %401 {strides = array<i32>} : memref<8x128xf32, #tpu.memory_space<vmem>>, vector<8x128xf32>,
    return
  }
  func.func @transform_0(%arg0: i32) -> (i32, i32, i32) {
    %c0_i32 = arith.constant 0 : i32
    %c0_i32_0 = arith.constant 0 : i32
    %c0_i32_1 = arith.constant 0 : i32
    return %c0_i32, %arg0, %c0_i32_0 : i32, i32, i32
  }
  func.func @transform_1(%arg0: i32) -> (i32, i32) {
    %c0_i32 = arith.constant 0 : i32
    %c0_i32_0 = arith.constant 0 : i32
    %c0_i32_1 = arith.constant 0 : i32
    return %c0_i32, %c0_i32_0 : i32, i32
  }
  func.func @transform_2(%arg0: i32) -> (i32, i32) {
    %c0_i32 = arith.constant 0 : i32
    %c0_i32_0 = arith.constant 0 : i32
    %c0_i32_1 = arith.constant 0 : i32
    return %c0_i32, %c0_i32_0 : i32, i32
  }
  func.func @transform_3(%arg0: i32) -> (i32, i32) {
    %c0_i32 = arith.constant 0 : i32
    %c0_i32_0 = arith.constant 0 : i32
    %c0_i32_1 = arith.constant 0 : i32
    return %c0_i32, %c0_i32_0 : i32, i32
  }
  func.func @transform_4(%arg0: i32) -> (i32, i32) {
    %c0_i32 = arith.constant 0 : i32
    %c0_i32_0 = arith.constant 0 : i32
    %c0_i32_1 = arith.constant 0 : i32
    return %c0_i32, %c0_i32_0 : i32, i32
  }
  func.func @transform_5(%arg0: i32) -> (i32, i32) {
    %c0_i32 = arith.constant 0 : i32
    %c0_i32_0 = arith.constant 0 : i32
    return %arg0, %c0_i32 : i32, i32
  }
}

</mosaic_0001>

<llo_original>
// kernel: stock_price_lstm_forward.1
$region0: #{stock_price_lstm_forward.1}
  #allocation0 [shape = 'u32[]', space=smem, size = 0x4, offset = 0x4, fixed_abs, tag = 'smem constant byte address 0x4 - core index']
  #allocation1 [shape = 'u32[144,128]{1,0:T(1,128)}', space=vmem, size = 0x12000, scoped, tag = 'internal scratch']
  %s0 = inlined_call_operand.vmem [shape: f32[8,8,8], index: 0, kind: input, shape index: {}]
  %s1 = inlined_call_operand.hbm [shape: f32[200,256], index: 1, kind: input, shape index: {}]
  %s2 = inlined_call_operand.vmem [shape: f32[2,256], index: 2, kind: input, shape index: {}]
  %s3 = inlined_call_operand.hbm [shape: f32[320,128], index: 3, kind: input, shape index: {}]
  %s4 = inlined_call_operand.vmem [shape: f32[3,128], index: 4, kind: input, shape index: {}]
  %s5 = inlined_call_operand.vmem [shape: f32[8,128], index: 5, kind: output, shape index: {}]
  %s6 = sld [smem:[#allocation0]]
  $region38: #{stock_price_lstm_forward.1} parent=0
    _
  %s8 = ssub.s32 1, %s6
  %s9 = scalar_select 0, %s8, %s6
  $region1: #{stock_price_lstm_forward.1} parent=0
    #allocation2 [shape = 'u8[204800]{0}', space=vmem, size = 0x32000, scoped, tag = 'input window, operand 1, single buffered']
    #allocation3 [shape = 's32[1]{0}', space=sflag, size = 0x4, scoped, tag = 'scoped memory for stock_price_lstm_forward.1']
    #allocation4 [shape = 'u8[163840]{0}', space=vmem, size = 0x28000, scoped, tag = 'input window, operand 3, single buffered']
    #allocation5 [shape = 's32[1]{0}', space=sflag, size = 0x4, scoped, tag = 'scoped memory for stock_price_lstm_forward.1']
    %10 = vsyncpa [#allocation3], 0
    %11 = vsyncpa [#allocation5], 0
    // Predicated region
    $region2: #{stock_price_lstm_forward.1} parent=1 // pred_check
      _
    $region3: #{stock_price_lstm_forward.1} parent=1 // pred_check_branch
      %13 = sbr.rel (0) target = $region5
    $region4: #{stock_price_lstm_forward.1} parent=1 // pred_region
      _
    $region5: #{stock_price_lstm_forward.1} parent=1 // pred_fallthru
      _
    // Predicated region
    $region6: #{stock_price_lstm_forward.1} parent=1 // pred_check
      _
    $region7: #{stock_price_lstm_forward.1} parent=1 // pred_check_branch
      %15 = sbr.rel (0) target = $region9
    $region8: #{stock_price_lstm_forward.1} parent=1 // pred_region
      %s17 = ssub.s32 6400, 6400
      %18 = vsyncadd [#allocation3], %s17
      %s19 = sshll.u32 [#allocation2], 4
      %s20 = int_to_ptr.vmem [resolvable:$true] %s19
      %25 = dma.hbm_to_vmem [thread:$0]  %s1, 6400, %s20, [#allocation3], 256, 256, 16
    $region9: #{stock_price_lstm_forward.1} parent=1 // pred_fallthru
      _
    // Predicated region
    $region10: #{stock_price_lstm_forward.1} parent=1 // pred_check
      _
    $region11: #{stock_price_lstm_forward.1} parent=1 // pred_check_branch
      %27 = sbr.rel (0) target = $region13
    $region12: #{stock_price_lstm_forward.1} parent=1 // pred_region
      _
    $region13: #{stock_price_lstm_forward.1} parent=1 // pred_fallthru
      _
    // Predicated region
    $region14: #{stock_price_lstm_forward.1} parent=1 // pred_check
      _
    $region15: #{stock_price_lstm_forward.1} parent=1 // pred_check_branch
      %29 = sbr.rel (0) target = $region17
    $region16: #{stock_price_lstm_forward.1} parent=1 // pred_region
      %s31 = ssub.s32 5120, 5120
      %32 = vsyncadd [#allocation5], %s31
      %s33 = sshll.u32 [#allocation4], 4
      %s34 = int_to_ptr.vmem [resolvable:$true] %s33
      %39 = dma.hbm_to_vmem [thread:$0]  %s3, 5120, %s34, [#allocation5], 128, 128, 8
    $region17: #{stock_price_lstm_forward.1} parent=1 // pred_fallthru
      _
    // Predicated region
    $region18: #{stock_price_lstm_forward.1} parent=1 // pred_check
      _
    $region19: #{stock_price_lstm_forward.1} parent=1 // pred_check_branch
      %41 = sbr.rel (0) target = $region21
    $region20: #{stock_price_lstm_forward.1} parent=1 // pred_region
      _
    $region21: #{stock_price_lstm_forward.1} parent=1 // pred_fallthru
      _
    // Predicated region
    $region22: #{stock_price_lstm_forward.1} parent=1 // pred_check
      _
    $region23: #{stock_price_lstm_forward.1} parent=1 // pred_check_branch
      %43 = sbr.rel (0) target = $region25
    $region24: #{stock_price_lstm_forward.1} parent=1 // pred_region
      %44 = dma.done [#allocation3], 6400
    $region25: #{stock_price_lstm_forward.1} parent=1 // pred_fallthru
      _
    // Predicated region
    $region26: #{stock_price_lstm_forward.1} parent=1 // pred_check
      _
    $region27: #{stock_price_lstm_forward.1} parent=1 // pred_check_branch
      %46 = sbr.rel (0) target = $region29
    $region28: #{stock_price_lstm_forward.1} parent=1 // pred_region
      %47 = dma.done [#allocation5], 5120
    $region29: #{stock_price_lstm_forward.1} parent=1 // pred_fallthru
      _
    %v48 = vld [vmem:[%s2] ss:$2 sm:$0x3]
    %v50 = vlaneseq
    %v51 = vshrl.u32 %v50, 7
    %v52 = vsub.s32 0, %v51
    %v53 = vrot.slane %v48, %v52
    %v54 = vlaneseq
    %v55 = vshrl.u32 %v54, 7
    %v56 = vsub.s32 1, %v55
    %v57 = vrot.slane %v48, %v56
    %s60 = scalar_lea.vmem %s2, 1
    %v61 = vld [vmem:[%s60] ss:$2 sm:$0x3]
    %v63 = vlaneseq
    %v64 = vshrl.u32 %v63, 7
    %v65 = vsub.s32 0, %v64
    %v66 = vrot.slane %v61, %v65
    %v67 = vlaneseq
    %v68 = vshrl.u32 %v67, 7
    %v69 = vsub.s32 1, %v68
    %v70 = vrot.slane %v61, %v69
    %v73 = vld [vmem:[%s0] sm:$0xff]
    %v74 = vld [vmem:[#allocation2] sm:$0xff]
    %v75 = vld [vmem:[#allocation2 + $0x8] sm:$0xff]
    %vm76 = vcmask 64512
    %v78 = vsel %vm76, %v73, 0
    %80 = vmatprep.subr.mxu0 %v75
    %81 = vmatpush1.msra.mxu0 %v74
    %82 = vmatprep.subr.mxu0 0.0
    %83 = vmatpush1.msra.mxu0 0.0
    %84 = vmatprep.subr.mxu0 0.0
    %85 = vmatpush1.msra.mxu0 0.0
    %86 = vmatprep.subr.mxu0 0.0
    %87 = vmatpush1.msra.mxu0 0.0
    %88 = vmatprep.subr.mxu0 0.0
    %89 = vmatpush1.msra.mxu0 0.0
    %90 = vmatprep.subr.mxu0 0.0
    %91 = vmatpush1.msra.mxu0 0.0
    %92 = vmatprep.subr.mxu0 0.0
    %93 = vmatpush1.msra.mxu0 0.0
    %94 = vmatprep.subr.mxu0 0.0
    %95 = vmatpush1.msra.mxu0 0.0
    %96 = vmatprep.subr.mxu0 0.0
    %97 = vmatpush1.msra.mxu0 0.0
    %98 = vmatprep.subr.mxu0 0.0
    %99 = vmatpush1.msra.mxu0 0.0
    %100 = vmatprep.subr.mxu0 0.0
    %101 = vmatpush1.msra.mxu0 0.0
    %102 = vmatprep.subr.mxu0 0.0
    %103 = vmatpush1.msra.mxu0 0.0
    %104 = vmatprep.subr.mxu0 0.0
    %105 = vmatpush1.msra.mxu0 0.0
    %106 = vmatprep.subr.mxu0 0.0
    %107 = vmatpush1.msra.mxu0 0.0
    %108 = vmatprep.subr.mxu0 0.0
    %109 = vmatpush1.msra.mxu0 0.0
    %110 = vmatprep.subr.mxu0 0.0
    %111 = vmatpush1.msra.mxu0 0.0
    %112 = vmatprep.subr.mxu0 0.0
    %113 = vmatpush1.msra.mxu0 0.0
    %114 = vmatprep.subr.mxu0 0.0
    %115 = vmatpush1.msra.mxu0 0.0
    %116 = vmatprep.subr.mxu0 0.0
    %117 = vmatpush1.msra.mxu0 0.0
    %118 = vmatprep.subr.mxu0 0.0
    %119 = vmatpush1.msra.mxu0 0.0
    %120 = vmatprep.subr.mxu0 0.0
    %121 = vmatpush1.msra.mxu0 0.0
    %122 = vmatprep.subr.mxu0 0.0
    %123 = vmatpush1.msra.mxu0 0.0
    %124 = vmatprep.subr.mxu0 0.0
    %125 = vmatpush1.msra.mxu0 0.0
    %126 = vmatprep.subr.mxu0 0.0
    %127 = vmatpush1.msra.mxu0 0.0
    %128 = vmatprep.subr.mxu0 0.0
    %129 = vmatpush1.msra.mxu0 0.0
    %130 = vmatprep.subr.mxu0 0.0
    %131 = vmatpush1.msra.mxu0 0.0
    %132 = vmatprep.subr.mxu0 0.0
    %133 = vmatpush1.msra.mxu0 0.0
    %134 = vmatprep.subr.mxu0 0.0
    %135 = vmatpush1.msra.mxu0 0.0
    %136 = vmatprep.subr.mxu0 0.0
    %137 = vmatpush1.msra.mxu0 0.0
    %138 = vmatprep.subr.mxu0 0.0
    %139 = vmatpush1.msra.mxu0 0.0
    %140 = vmatprep.subr.mxu0 0.0
    %141 = vmatpush1.msra.mxu0 0.0
    %142 = vmatprep.subr.mxu0 0.0
    %143 = vmatpush1.msra.mxu0 0.0
    %144 = vmatprep.mubr.f32.mxu0 0.0
    %145 = vmatmul.mubr.f32.gmra.mrb[0].mxu0 %v78
    %v146 = vpop.f32.mrb[0].mxu0
    %v147 = vadd.f32 %v53, %v146
    %v148 = vpop.f32.mrb[0].mxu0
    %v149 = vadd.f32 %v57, %v148
    %150 = vdwg.mxu0
    %v151 = vld [vmem:[#allocation2 + $0x10] sm:$0xff]
    %v152 = vld [vmem:[#allocation2 + $0x18] sm:$0xff]
    %v153 = vld [vmem:[#allocation2 + $0x20] sm:$0xff]
    %v154 = vld [vmem:[#allocation2 + $0x28] sm:$0xff]
    %v155 = vld [vmem:[#allocation2 + $0x30] sm:$0xff]
    %v156 = vld [vmem:[#allocation2 + $0x38] sm:$0xff]
    %v157 = vld [vmem:[#allocation2 + $0x40] sm:$0xff]
    %v158 = vld [vmem:[#allocation2 + $0x48] sm:$0xff]
    %v159 = vld [vmem:[#allocation2 + $0x50] sm:$0xff]
    %v160 = vld [vmem:[#allocation2 + $0x58] sm:$0xff]
    %v161 = vld [vmem:[#allocation2 + $0x60] sm:$0xff]
    %v162 = vld [vmem:[#allocation2 + $0x68] sm:$0xff]
    %v163 = vld [vmem:[#allocation2 + $0x70] sm:$0xff]
    %v164 = vld [vmem:[#allocation2 + $0x78] sm:$0xff]
    %v165 = vld [vmem:[#allocation2 + $0x80] sm:$0xff]
    %v166 = vld [vmem:[#allocation2 + $0x88] sm:$0xff]
    %vm167 = vcmask 523264
    %v169 = vsel %vm167, 0.0, 0
    %171 = vmatprep.subr.mxu0 %v152
    %172 = vmatpush1.msra.mxu0 %v151
    %173 = vmatprep.subr.mxu0 %v154
    %174 = vmatpush1.msra.mxu0 %v153
    %175 = vmatprep.subr.mxu0 %v156
    %176 = vmatpush1.msra.mxu0 %v155
    %177 = vmatprep.subr.mxu0 %v158
    %178 = vmatpush1.msra.mxu0 %v157
    %179 = vmatprep.subr.mxu0 %v160
    %180 = vmatpush1.msra.mxu0 %v159
    %181 = vmatprep.subr.mxu0 %v162
    %182 = vmatpush1.msra.mxu0 %v161
    %183 = vmatprep.subr.mxu0 %v164
    %184 = vmatpush1.msra.mxu0 %v163
    %185 = vmatprep.subr.mxu0 %v166
    %186 = vmatpush1.msra.mxu0 %v165
    %187 = vmatprep.subr.mxu0 0.0
    %188 = vmatpush1.msra.mxu0 0.0
    %189 = vmatprep.subr.mxu0 0.0
    %190 = vmatpush1.msra.mxu0 0.0
    %191 = vmatprep.subr.mxu0 0.0
    %192 = vmatpush1.msra.mxu0 0.0
    %193 = vmatprep.subr.mxu0 0.0
    %194 = vmatpush1.msra.mxu0 0.0
    %195 = vmatprep.subr.mxu0 0.0
    %196 = vmatpush1.msra.mxu0 0.0
    %197 = vmatprep.subr.mxu0 0.0
    %198 = vmatpush1.msra.mxu0 0.0
    %199 = vmatprep.subr.mxu0 0.0
    %200 = vmatpush1.msra.mxu0 0.0
    %201 = vmatprep.subr.mxu0 0.0
    %202 = vmatpush1.msra.mxu0 0.0
    %203 = vmatprep.subr.mxu0 0.0
    %204 = vmatpush1.msra.mxu0 0.0
    %205 = vmatprep.subr.mxu0 0.0
    %206 = vmatpush1.msra.mxu0 0.0
    %207 = vmatprep.subr.mxu0 0.0
    %208 = vmatpush1.msra.mxu0 0.0
    %209 = vmatprep.subr.mxu0 0.0
    %210 = vmatpush1.msra.mxu0 0.0
    %211 = vmatprep.subr.mxu0 0.0
    %212 = vmatpush1.msra.mxu0 0.0
    %213 = vmatprep.subr.mxu0 0.0
    %214 = vmatpush1.msra.mxu0 0.0
    %215 = vmatprep.subr.mxu0 0.0
    %216 = vmatpush1.msra.mxu0 0.0
    %217 = vmatprep.subr.mxu0 0.0
    %218 = vmatpush1.msra.mxu0 0.0
    %219 = vmatprep.subr.mxu0 0.0
    %220 = vmatpush1.msra.mxu0 0.0
    %221 = vmatprep.subr.mxu0 0.0
    %222 = vmatpush1.msra.mxu0 0.0
    %223 = vmatprep.subr.mxu0 0.0
    %224 = vmatpush1.msra.mxu0 0.0
    %225 = vmatprep.subr.mxu0 0.0
    %226 = vmatpush1.msra.mxu0 0.0
    %227 = vmatprep.subr.mxu0 0.0
    %228 = vmatpush1.msra.mxu0 0.0
    %229 = vmatprep.subr.mxu0 0.0
    %230 = vmatpush1.msra.mxu0 0.0
    %231 = vmatprep.subr.mxu0 0.0
    %232 = vmatpush1.msra.mxu0 0.0
    %233 = vmatprep.subr.mxu0 0.0
    %234 = vmatpush1.msra.mxu0 0.0
    %235 = vmatprep.mubr.f32.mxu0 0.0
    %236 = vmatmul.mubr.f32.gmra.mrb[0].mxu0 %v169
    %v237 = vpop.f32.mrb[0].mxu0
    %v238 = vadd.f32 0.0, %v237
    %v239 = vpop.f32.mrb[0].mxu0
    %v240 = vadd.f32 0.0, %v239
    %241 = vdwg.mxu0
    %v242 = vadd.f32 %v147, %v238
    %v243 = vadd.f32 %v149, %v240
    %v244 = vxor.u32 %v242, 2147483648
    %v245 = vxor.u32 %v243, 2147483648
    %v246 = vmul.f32 %v244, 1.442695
    %v247 = vpow.pop %v246
    %v248 = vmul.f32 %v245, 1.442695
    %v249 = vpow.pop %v248
    %v250 = vadd.f32 %v247, 1.0
    %v251 = vadd.f32 %v249, 1.0
    %v252 = vrcp.pop %v250
    %v253 = vmul.f32 1.0, %v252
    %v254 = vrcp.pop %v251
    %v255 = vmul.f32 1.0, %v254
    %v256 = vtanh.pop %v243
    %v257 = vmul.f32 %v253, 0.0
    %259 = vrot.lane.b32.xlu0 %v256, 64
    %v260 = vpop.permute.xlu0 %259
    %v262 = vmul.f32 %v253, %v260
    %264 = vrot.lane.b32.xlu0 %v262, 64
    %v265 = vpop.permute.xlu0 %264
    %v267 = vadd.f32 %v257, %v265
    %v268 = vtanh.pop %v267
    %270 = vrot.lane.b32.xlu0 %v268, 64
    %v271 = vpop.permute.xlu0 %270
    %v273 = vmul.f32 %v255, %v271
    %v274 = vld [vmem:[#allocation2 + $0x90] sm:$0xff]
    %v275 = vld [vmem:[#allocation2 + $0x98] sm:$0xff]
    %v276 = vld [vmem:[#allocation2 + $0xa0] sm:$0xff]
    %v277 = vld [vmem:[#allocation2 + $0xa8] sm:$0xff]
    %v278 = vld [vmem:[#allocation2 + $0xb0] sm:$0xff]
    %v279 = vld [vmem:[#allocation2 + $0xb8] sm:$0xff]
    %v280 = vld [vmem:[#allocation2 + $0xc0] sm:$0xff]
    %v281 = vld [vmem:[#allocation2 + $0xc8] sm:$0xff]
    %v282 = vld [vmem:[#allocation2 + $0xd0] sm:$0xff]
    %v283 = vld [vmem:[#allocation2 + $0xd8] sm:$0xff]
    %v284 = vld [vmem:[#allocation2 + $0xe0] sm:$0xff]
    %v285 = vld [vmem:[#allocation2 + $0xe8] sm:$0xff]
    %v286 = vld [vmem:[#allocation2 + $0xf0] sm:$0xff]
    %v287 = vld [vmem:[#allocation2 + $0xf8] sm:$0xff]
    %v288 = vld [vmem:[#allocation2 + $0x100] sm:$0xff]
    %v289 = vld [vmem:[#allocation2 + $0x108] sm:$0xff]
    %v291 = vsel %vm167, %v273, 0
    %293 = vmatprep.subr.mxu0 %v275
    %294 = vmatpush1.msra.mxu0 %v274
    %295 = vmatprep.subr.mxu0 %v277
    %296 = vmatpush1.msra.mxu0 %v276
    %297 = vmatprep.subr.mxu0 %v279
    %298 = vmatpush1.msra.mxu0 %v278
    %299 = vmatprep.subr.mxu0 %v281
    %300 = vmatpush1.msra.mxu0 %v280
    %301 = vmatprep.subr.mxu0 %v283
    %302 = vmatpush1.msra.mxu0 %v282
    %303 = vmatprep.subr.mxu0 %v285
    %304 = vmatpush1.msra.mxu0 %v284
    %305 = vmatprep.subr.mxu0 %v287
    %306 = vmatpush1.msra.mxu0 %v286
    %307 = vmatprep.subr.mxu0 %v289
    %308 = vmatpush1.msra.mxu0 %v288
    %309 = vmatprep.subr.mxu0 0.0
    %310 = vmatpush1.msra.mxu0 0.0
    %311 = vmatprep.subr.mxu0 0.0
    %312 = vmatpush1.msra.mxu0 0.0
    %313 = vmatprep.subr.mxu0 0.0
    %314 = vmatpush1.msra.mxu0 0.0
    %315 = vmatprep.subr.mxu0 0.0
    %316 = vmatpush1.msra.mxu0 0.0
    %317 = vmatprep.subr.mxu0 0.0
    %318 = vmatpush1.msra.mxu0 0.0
    %319 = vmatprep.subr.mxu0 0.0
    %320 = vmatpush1.msra.mxu0 0.0
    %321 = vmatprep.subr.mxu0 0.0
    %322 = vmatpush1.msra.mxu0 0.0
    %323 = vmatprep.subr.mxu0 0.0
    %324 = vmatpush1.msra.mxu0 0.0
    %325 = vmatprep.subr.mxu0 0.0
    %326 = vmatpush1.msra.mxu0 0.0
    %327 = vmatprep.subr.mxu0 0.0
    %328 = vmatpush1.msra.mxu0 0.0
    %329 = vmatprep.subr.mxu0 0.0
    %330 = vmatpush1.msra.mxu0 0.0
    %331 = vmatprep.subr.mxu0 0.0
    %332 = vmatpush1.msra.mxu0 0.0
    %333 = vmatprep.subr.mxu0 0.0
    %334 = vmatpush1.msra.mxu0 0.0
    %335 = vmatprep.subr.mxu0 0.0
    %336 = vmatpush1.msra.mxu0 0.0
    %337 = vmatprep.subr.mxu0 0.0
    %338 = vmatpush1.msra.mxu0 0.0
    %339 = vmatprep.subr.mxu0 0.0
    %340 = vmatpush1.msra.mxu0 0.0
    %341 = vmatprep.subr.mxu0 0.0
    %342 = vmatpush1.msra.mxu0 0.0
    %343 = vmatprep.subr.mxu0 0.0
    %344 = vmatpush1.msra.mxu0 0.0
    %345 = vmatprep.subr.mxu0 0.0
    %346 = vmatpush1.msra.mxu0 0.0
    %347 = vmatprep.subr.mxu0 0.0
    %348 = vmatpush1.msra.mxu0 0.0
    %349 = vmatprep.subr.mxu0 0.0
    %350 = vmatpush1.msra.mxu0 0.0
    %351 = vmatprep.subr.mxu0 0.0
    %352 = vmatpush1.msra.mxu0 0.0
    %353 = vmatprep.subr.mxu0 0.0
    %354 = vmatpush1.msra.mxu0 0.0
    %355 = vmatprep.subr.mxu0 0.0
    %356 = vmatpush1.msra.mxu0 0.0
    %357 = vmatprep.mubr.f32.mxu0 0.0
    %358 = vmatmul.mubr.f32.gmra.mrb[0].mxu0 %v291
    %v359 = vpop.f32.mrb[0].mxu0
    %v360 = vadd.f32 0.0, %v359
    %v361 = vpop.f32.mrb[0].mxu0
    %v362 = vadd.f32 0.0, %v361
    %363 = vdwg.mxu0
    %v364 = vadd.f32 %v66, %v360
    %v365 = vadd.f32 %v70, %v362
    %v366 = vxor.u32 %v364, 2147483648
    %v367 = vxor.u32 %v365, 2147483648
    %v368 = vmul.f32 %v366, 1.442695
    %v369 = vpow.pop %v368
    %v370 = vmul.f32 %v367, 1.442695
    %v371 = vpow.pop %v370
    %v372 = vadd.f32 %v369, 1.0
    %v373 = vadd.f32 %v371, 1.0
    %v374 = vrcp.pop %v372
    %v375 = vmul.f32 1.0, %v374
    %v376 = vrcp.pop %v373
    %v377 = vmul.f32 1.0, %v376
    %v378 = vtanh.pop %v365
    %v379 = vmul.f32 %v375, 0.0
    %381 = vrot.lane.b32.xlu0 %v378, 64
    %v382 = vpop.permute.xlu0 %381
    %v384 = vmul.f32 %v375, %v382
    %386 = vrot.lane.b32.xlu0 %v384, 64
    %v387 = vpop.permute.xlu0 %386
    %v389 = vadd.f32 %v379, %v387
    %v390 = vtanh.pop %v389
    %392 = vrot.lane.b32.xlu0 %v390, 64
    %v393 = vpop.permute.xlu0 %392
    %v395 = vmul.f32 %v377, %v393
    %v396 = vld [vmem:[#allocation2 + $0x110] sm:$0xff]
    %v397 = vld [vmem:[#allocation2 + $0x118] sm:$0xff]
    %v398 = vld [vmem:[#allocation2 + $0x120] sm:$0xff]
    %v399 = vld [vmem:[#allocation2 + $0x128] sm:$0xff]
    %v400 = vld [vmem:[#allocation2 + $0x130] sm:$0xff]
    %v401 = vld [vmem:[#allocation2 + $0x138] sm:$0xff]
    %v402 = vld [vmem:[#allocation2 + $0x140] sm:$0xff]
    %v403 = vld [vmem:[#allocation2 + $0x148] sm:$0xff]
    %v404 = vld [vmem:[#allocation2 + $0x150] sm:$0xff]
    %v405 = vld [vmem:[#allocation2 + $0x158] sm:$0xff]
    %v406 = vld [vmem:[#allocation2 + $0x160] sm:$0xff]
    %v407 = vld [vmem:[#allocation2 + $0x168] sm:$0xff]
    %v408 = vld [vmem:[#allocation2 + $0x170] sm:$0xff]
    %v409 = vld [vmem:[#allocation2 + $0x178] sm:$0xff]
    %v410 = vld [vmem:[#allocation2 + $0x180] sm:$0xff]
    %v411 = vld [vmem:[#allocation2 + $0x188] sm:$0xff]
    %v413 = vsel %vm167, %v395, 0
    %415 = vmatprep.subr.mxu0 %v397
    %416 = vmatpush1.msra.mxu0 %v396
    %417 = vmatprep.subr.mxu0 %v399
    %418 = vmatpush1.msra.mxu0 %v398
    %419 = vmatprep.subr.mxu0 %v401
    %420 = vmatpush1.msra.mxu0 %v400
    %421 = vmatprep.subr.mxu0 %v403
    %422 = vmatpush1.msra.mxu0 %v402
    %423 = vmatprep.subr.mxu0 %v405
    %424 = vmatpush1.msra.mxu0 %v404
    %425 = vmatprep.subr.mxu0 %v407
    %426 = vmatpush1.msra.mxu0 %v406
    %427 = vmatprep.subr.mxu0 %v409
    %428 = vmatpush1.msra.mxu0 %v408
    %429 = vmatprep.subr.mxu0 %v411
    %430 = vmatpush1.msra.mxu0 %v410
    %431 = vmatprep.subr.mxu0 0.0
    %432 = vmatpush1.msra.mxu0 0.0
    %433 = vmatprep.subr.mxu0 0.0
    %434 = vmatpush1.msra.mxu0 0.0
    %435 = vmatprep.subr.mxu0 0.0
    %436 = vmatpush1.msra.mxu0 0.0
    %437 = vmatprep.subr.mxu0 0.0
    %438 = vmatpush1.msra.mxu0 0.0
    %439 = vmatprep.subr.mxu0 0.0
    %440 = vmatpush1.msra.mxu0 0.0
    %441 = vmatprep.subr.mxu0 0.0
    %442 = vmatpush1.msra.mxu0 0.0
    %443 = vmatprep.subr.mxu0 0.0
    %444 = vmatpush1.msra.mxu0 0.0
    %445 = vmatprep.subr.mxu0 0.0
    %446 = vmatpush1.msra.mxu0 0.0
    %447 = vmatprep.subr.mxu0 0.0
    %448 = vmatpush1.msra.mxu0 0.0
    %449 = vmatprep.subr.mxu0 0.0
    %450 = vmatpush1.msra.mxu0 0.0
    %451 = vmatprep.subr.mxu0 0.0
    %452 = vmatpush1.msra.mxu0 0.0
    %453 = vmatprep.subr.mxu0 0.0
    %454 = vmatpush1.msra.mxu0 0.0
    %455 = vmatprep.subr.mxu0 0.0
    %456 = vmatpush1.msra.mxu0 0.0
    %457 = vmatprep.subr.mxu0 0.0
    %458 = vmatpush1.msra.mxu0 0.0
    %459 = vmatprep.subr.mxu0 0.0
    %460 = vmatpush1.msra.mxu0 0.0
    %461 = vmatprep.subr.mxu0 0.0
    %462 = vmatpush1.msra.mxu0 0.0
    %463 = vmatprep.subr.mxu0 0.0
    %464 = vmatpush1.msra.mxu0 0.0
    %465 = vmatprep.subr.mxu0 0.0
    %466 = vmatpush1.msra.mxu0 0.0
    %467 = vmatprep.subr.mxu0 0.0
    %468 = vmatpush1.msra.mxu0 0.0
    %469 = vmatprep.subr.mxu0 0.0
    %470 = vmatpush1.msra.mxu0 0.0
    %471 = vmatprep.subr.mxu0 0.0
    %472 = vmatpush1.msra.mxu0 0.0
    %473 = vmatprep.subr.mxu0 0.0
    %474 = vmatpush1.msra.mxu0 0.0
    %475 = vmatprep.subr.mxu0 0.0
    %476 = vmatpush1.msra.mxu0 0.0
    %477 = vmatprep.subr.mxu0 0.0
    %478 = vmatpush1.msra.mxu0 0.0
    %479 = vmatprep.mubr.f32.mxu0 0.0
    %480 = vmatmul.mubr.f32.gmra.mrb[0].mxu0 %v413
    %v481 = vpop.f32.mrb[0].mxu0
    %v482 = vadd.f32 %v66, %v481
    %v483 = vpop.f32.mrb[0].mxu0
    %v484 = vadd.f32 %v70, %v483
    %485 = vdwg.mxu0
    %s486 = scalar_lea.vmem %s0, 8
    %v487 = vld [vmem:[%s486] sm:$0xff]
    %v489 = vsel %vm76, %v487, 0
    %491 = vmatprep.subr.mxu0 %v75
    %492 = vmatpush1.msra.mxu0 %v74
    %493 = vmatprep.subr.mxu0 0.0
    %494 = vmatpush1.msra.mxu0 0.0
    %495 = vmatprep.subr.mxu0 0.0
    %496 = vmatpush1.msra.mxu0 0.0
    %497 = vmatprep.subr.mxu0 0.0
    %498 = vmatpush1.msra.mxu0 0.0
    %499 = vmatprep.subr.mxu0 0.0
    %500 = vmatpush1.msra.mxu0 0.0
    %501 = vmatprep.subr.mxu0 0.0
    %502 = vmatpush1.msra.mxu0 0.0
    %503 = vmatprep.subr.mxu0 0.0
    %504 = vmatpush1.msra.mxu0 0.0
    %505 = vmatprep.subr.mxu0 0.0
    %506 = vmatpush1.msra.mxu0 0.0
    %507 = vmatprep.subr.mxu0 0.0
    %508 = vmatpush1.msra.mxu0 0.0
    %509 = vmatprep.subr.mxu0 0.0
    %510 = vmatpush1.msra.mxu0 0.0
    %511 = vmatprep.subr.mxu0 0.0
    %512 = vmatpush1.msra.mxu0 0.0
    %513 = vmatprep.subr.mxu0 0.0
    %514 = vmatpush1.msra.mxu0 0.0
    %515 = vmatprep.subr.mxu0 0.0
    %516 = vmatpush1.msra.mxu0 0.0
    %517 = vmatprep.subr.mxu0 0.0
    %518 = vmatpush1.msra.mxu0 0.0
    %519 = vmatprep.subr.mxu0 0.0
    %520 = vmatpush1.msra.mxu0 0.0
    %521 = vmatprep.subr.mxu0 0.0
    %522 = vmatpush1.msra.mxu0 0.0
    %523 = vmatprep.subr.mxu0 0.0
    %524 = vmatpush1.msra.mxu0 0.0
    %525 = vmatprep.subr.mxu0 0.0
    %526 = vmatpush1.msra.mxu0 0.0
    %527 = vmatprep.subr.mxu0 0.0
    %528 = vmatpush1.msra.mxu0 0.0
    %529 = vmatprep.subr.mxu0 0.0
    %530 = vmatpush1.msra.mxu0 0.0
    %531 = vmatprep.subr.mxu0 0.0
    %532 = vmatpush1.msra.mxu0 0.0
    %533 = vmatprep.subr.mxu0 0.0
    %534 = vmatpush1.msra.mxu0 0.0
    %535 = vmatprep.subr.mxu0 0.0
    %536 = vmatpush1.msra.mxu0 0.0
    %537 = vmatprep.subr.mxu0 0.0
    %538 = vmatpush1.msra.mxu0 0.0
    %539 = vmatprep.subr.mxu0 0.0
    %540 = vmatpush1.msra.mxu0 0.0
    %541 = vmatprep.subr.mxu0 0.0
    %542 = vmatpush1.msra.mxu0 0.0
    %543 = vmatprep.subr.mxu0 0.0
    %544 = vmatpush1.msra.mxu0 0.0
    %545 = vmatprep.subr.mxu0 0.0
    %546 = vmatpush1.msra.mxu0 0.0
    %547 = vmatprep.subr.mxu0 0.0
    %548 = vmatpush1.msra.mxu0 0.0
    %549 = vmatprep.subr.mxu0 0.0
    %550 = vmatpush1.msra.mxu0 0.0
    %551 = vmatprep.subr.mxu0 0.0
    %552 = vmatpush1.msra.mxu0 0.0
    %553 = vmatprep.subr.mxu0 0.0
    %554 = vmatpush1.msra.mxu0 0.0
    %555 = vmatprep.mubr.f32.mxu0 0.0
    %556 = vmatmul.mubr.f32.gmra.mrb[0].mxu0 %v489
    %v557 = vpop.f32.mrb[0].mxu0
    %v558 = vadd.f32 %v53, %v557
    %v559 = vpop.f32.mrb[0].mxu0
    %v560 = vadd.f32 %v57, %v559
    %561 = vdwg.mxu0
    %562 = vmatprep.subr.mxu0 %v152
    %563 = vmatpush1.msra.mxu0 %v151
    %564 = vmatprep.subr.mxu0 %v154
    %565 = vmatpush1.msra.mxu0 %v153
    %566 = vmatprep.subr.mxu0 %v156
    %567 = vmatpush1.msra.mxu0 %v155
    %568 = vmatprep.subr.mxu0 %v158
    %569 = vmatpush1.msra.mxu0 %v157
    %570 = vmatprep.subr.mxu0 %v160
    %571 = vmatpush1.msra.mxu0 %v159
    %572 = vmatprep.subr.mxu0 %v162
    %573 = vmatpush1.msra.mxu0 %v161
    %574 = vmatprep.subr.mxu0 %v164
    %575 = vmatpush1.msra.mxu0 %v163
    %576 = vmatprep.subr.mxu0 %v166
    %577 = vmatpush1.msra.mxu0 %v165
    %578 = vmatprep.subr.mxu0 0.0
    %579 = vmatpush1.msra.mxu0 0.0
    %580 = vmatprep.subr.mxu0 0.0
    %581 = vmatpush1.msra.mxu0 0.0
    %582 = vmatprep.subr.mxu0 0.0
    %583 = vmatpush1.msra.mxu0 0.0
    %584 = vmatprep.subr.mxu0 0.0
    %585 = vmatpush1.msra.mxu0 0.0
    %586 = vmatprep.subr.mxu0 0.0
    %587 = vmatpush1.msra.mxu0 0.0
    %588 = vmatprep.subr.mxu0 0.0
    %589 = vmatpush1.msra.mxu0 0.0
    %590 = vmatprep.subr.mxu0 0.0
    %591 = vmatpush1.msra.mxu0 0.0
    %592 = vmatprep.subr.mxu0 0.0
    %593 = vmatpush1.msra.mxu0 0.0
    %594 = vmatprep.subr.mxu0 0.0
    %595 = vmatpush1.msra.mxu0 0.0
    %596 = vmatprep.subr.mxu0 0.0
    %597 = vmatpush1.msra.mxu0 0.0
    %598 = vmatprep.subr.mxu0 0.0
    %599 = vmatpush1.msra.mxu0 0.0
    %600 = vmatprep.subr.mxu0 0.0
    %601 = vmatpush1.msra.mxu0 0.0
    %602 = vmatprep.subr.mxu0 0.0
    %603 = vmatpush1.msra.mxu0 0.0
    %604 = vmatprep.subr.mxu0 0.0
    %605 = vmatpush1.msra.mxu0 0.0
    %606 = vmatprep.subr.mxu0 0.0
    %607 = vmatpush1.msra.mxu0 0.0
    %608 = vmatprep.subr.mxu0 0.0
    %609 = vmatpush1.msra.mxu0 0.0
    %610 = vmatprep.subr.mxu0 0.0
    %611 = vmatpush1.msra.mxu0 0.0
    %612 = vmatprep.subr.mxu0 0.0
    %613 = vmatpush1.msra.mxu0 0.0
    %614 = vmatprep.subr.mxu0 0.0
    %615 = vmatpush1.msra.mxu0 0.0
    %616 = vmatprep.subr.mxu0 0.0
    %617 = vmatpush1.msra.mxu0 0.0
    %618 = vmatprep.subr.mxu0 0.0
    %619 = vmatpush1.msra.mxu0 0.0
    %620 = vmatprep.subr.mxu0 0.0
    %621 = vmatpush1.msra.mxu0 0.0
    %622 = vmatprep.subr.mxu0 0.0
    %623 = vmatpush1.msra.mxu0 0.0
    %624 = vmatprep.subr.mxu0 0.0
    %625 = vmatpush1.msra.mxu0 0.0
    %626 = vmatprep.mubr.f32.mxu0 0.0
    %627 = vmatmul.mubr.f32.gmra.mrb[0].mxu0 %v291
    %v628 = vpop.f32.mrb[0].mxu0
    %v629 = vadd.f32 0.0, %v628
    %v630 = vpop.f32.mrb[0].mxu0
    %v631 = vadd.f32 0.0, %v630
    %632 = vdwg.mxu0
    %v633 = vadd.f32 %v558, %v629
    %v634 = vadd.f32 %v560, %v631
    %v635 = vxor.u32 %v633, 2147483648
    %v636 = vxor.u32 %v634, 2147483648
    %v637 = vmul.f32 %v635, 1.442695
    %v638 = vpow.pop %v637
    %v639 = vmul.f32 %v636, 1.442695
    %v640 = vpow.pop %v639
    %v641 = vadd.f32 %v638, 1.0
    %v642 = vadd.f32 %v640, 1.0
    %v643 = vrcp.pop %v641
    %v644 = vmul.f32 1.0, %v643
    %v645 = vrcp.pop %v642
    %v646 = vmul.f32 1.0, %v645
    %v647 = vtanh.pop %v634
    %v648 = vmul.f32 %v644, %v267
    %650 = vrot.lane.b32.xlu0 %v647, 64
    %v651 = vpop.permute.xlu0 %650
    %v653 = vmul.f32 %v644, %v651
    %655 = vrot.lane.b32.xlu0 %v653, 64
    %v656 = vpop.permute.xlu0 %655
    %v658 = vadd.f32 %v648, %v656
    %v659 = vtanh.pop %v658
    %661 = vrot.lane.b32.xlu0 %v659, 64
    %v662 = vpop.permute.xlu0 %661
    %v664 = vmul.f32 %v646, %v662
    %v666 = vsel %vm167, %v664, 0
    %668 = vmatprep.subr.mxu0 %v275
    %669 = vmatpush1.msra.mxu0 %v274
    %670 = vmatprep.subr.mxu0 %v277
    %671 = vmatpush1.msra.mxu0 %v276
    %672 = vmatprep.subr.mxu0 %v279
    %673 = vmatpush1.msra.mxu0 %v278
    %674 = vmatprep.subr.mxu0 %v281
    %675 = vmatpush1.msra.mxu0 %v280
    %676 = vmatprep.subr.mxu0 %v283
    %677 = vmatpush1.msra.mxu0 %v282
    %678 = vmatprep.subr.mxu0 %v285
    %679 = vmatpush1.msra.mxu0 %v284
    %680 = vmatprep.subr.mxu0 %v287
    %681 = vmatpush1.msra.mxu0 %v286
    %682 = vmatprep.subr.mxu0 %v289
    %683 = vmatpush1.msra.mxu0 %v288
    %684 = vmatprep.subr.mxu0 0.0
    %685 = vmatpush1.msra.mxu0 0.0
    %686 = vmatprep.subr.mxu0 0.0
    %687 = vmatpush1.msra.mxu0 0.0
    %688 = vmatprep.subr.mxu0 0.0
    %689 = vmatpush1.msra.mxu0 0.0
    %690 = vmatprep.subr.mxu0 0.0
    %691 = vmatpush1.msra.mxu0 0.0
    %692 = vmatprep.subr.mxu0 0.0
    %693 = vmatpush1.msra.mxu0 0.0
    %694 = vmatprep.subr.mxu0 0.0
    %695 = vmatpush1.msra.mxu0 0.0
    %696 = vmatprep.subr.mxu0 0.0
    %697 = vmatpush1.msra.mxu0 0.0
    %698 = vmatprep.subr.mxu0 0.0
    %699 = vmatpush1.msra.mxu0 0.0
    %700 = vmatprep.subr.mxu0 0.0
    %701 = vmatpush1.msra.mxu0 0.0
    %702 = vmatprep.subr.mxu0 0.0
    %703 = vmatpush1.msra.mxu0 0.0
    %704 = vmatprep.subr.mxu0 0.0
    %705 = vmatpush1.msra.mxu0 0.0
    %706 = vmatprep.subr.mxu0 0.0
    %707 = vmatpush1.msra.mxu0 0.0
    %708 = vmatprep.subr.mxu0 0.0
    %709 = vmatpush1.msra.mxu0 0.0
    %710 = vmatprep.subr.mxu0 0.0
    %711 = vmatpush1.msra.mxu0 0.0
    %712 = vmatprep.subr.mxu0 0.0
    %713 = vmatpush1.msra.mxu0 0.0
    %714 = vmatprep.subr.mxu0 0.0
    %715 = vmatpush1.msra.mxu0 0.0
    %716 = vmatprep.subr.mxu0 0.0
    %717 = vmatpush1.msra.mxu0 0.0
    %718 = vmatprep.subr.mxu0 0.0
    %719 = vmatpush1.msra.mxu0 0.0
    %720 = vmatprep.subr.mxu0 0.0
    %721 = vmatpush1.msra.mxu0 0.0
    %722 = vmatprep.subr.mxu0 0.0
    %723 = vmatpush1.msra.mxu0 0.0
    %724 = vmatprep.subr.mxu0 0.0
    %725 = vmatpush1.msra.mxu0 0.0
    %726 = vmatprep.subr.mxu0 0.0
    %727 = vmatpush1.msra.mxu0 0.0
    %728 = vmatprep.subr.mxu0 0.0
    %729 = vmatpush1.msra.mxu0 0.0
    %730 = vmatprep.subr.mxu0 0.0
    %731 = vmatpush1.msra.mxu0 0.0
    %732 = vmatprep.mubr.f32.mxu0 0.0
    %733 = vmatmul.mubr.f32.gmra.mrb[0].mxu0 %v666
    %v734 = vpop.f32.mrb[0].mxu0
    %v735 = vadd.f32 0.0, %v734
    %v736 = vpop.f32.mrb[0].mxu0
    %v737 = vadd.f32 0.0, %v736
    %738 = vdwg.mxu0
    %v739 = vadd.f32 %v482, %v735
    %v740 = vadd.f32 %v484, %v737
    %v741 = vxor.u32 %v739, 2147483648
    %v742 = vxor.u32 %v740, 2147483648
    %v743 = vmul.f32 %v741, 1.442695
    %v744 = vpow.pop %v743
    %v745 = vmul.f32 %v742, 1.442695
    %v746 = vpow.pop %v745
    %v747 = vadd.f32 %v744, 1.0
    %v748 = vadd.f32 %v746, 1.0
    %v749 = vrcp.pop %v747
    %v750 = vmul.f32 1.0, %v749
    %v751 = vrcp.pop %v748
    %v752 = vmul.f32 1.0, %v751
    %v753 = vtanh.pop %v740
    %v754 = vmul.f32 %v750, %v389
    %756 = vrot.lane.b32.xlu0 %v753, 64
    %v757 = vpop.permute.xlu0 %756
    %v759 = vmul.f32 %v750, %v757
    %761 = vrot.lane.b32.xlu0 %v759, 64
    %v762 = vpop.permute.xlu0 %761
    %v764 = vadd.f32 %v754, %v762
    %v765 = vtanh.pop %v764
    %767 = vrot.lane.b32.xlu0 %v765, 64
    %v768 = vpop.permute.xlu0 %767
    %v770 = vmul.f32 %v752, %v768
    %v772 = vsel %vm167, %v770, 0
    %774 = vmatprep.subr.mxu0 %v397
    %775 = vmatpush1.msra.mxu0 %v396
    %776 = vmatprep.subr.mxu0 %v399
    %777 = vmatpush1.msra.mxu0 %v398
    %778 = vmatprep.subr.mxu0 %v401
    %779 = vmatpush1.msra.mxu0 %v400
    %780 = vmatprep.subr.mxu0 %v403
    %781 = vmatpush1.msra.mxu0 %v402
    %782 = vmatprep.subr.mxu0 %v405
    %783 = vmatpush1.msra.mxu0 %v404
    %784 = vmatprep.subr.mxu0 %v407
    %785 = vmatpush1.msra.mxu0 %v406
    %786 = vmatprep.subr.mxu0 %v409
    %787 = vmatpush1.msra.mxu0 %v408
    %788 = vmatprep.subr.mxu0 %v411
    %789 = vmatpush1.msra.mxu0 %v410
    %790 = vmatprep.subr.mxu0 0.0
    %791 = vmatpush1.msra.mxu0 0.0
    %792 = vmatprep.subr.mxu0 0.0
    %793 = vmatpush1.msra.mxu0 0.0
    %794 = vmatprep.subr.mxu0 0.0
    %795 = vmatpush1.msra.mxu0 0.0
    %796 = vmatprep.subr.mxu0 0.0
    %797 = vmatpush1.msra.mxu0 0.0
    %798 = vmatprep.subr.mxu0 0.0
    %799 = vmatpush1.msra.mxu0 0.0
    %800 = vmatprep.subr.mxu0 0.0
    %801 = vmatpush1.msra.mxu0 0.0
    %802 = vmatprep.subr.mxu0 0.0
    %803 = vmatpush1.msra.mxu0 0.0
    %804 = vmatprep.subr.mxu0 0.0
    %805 = vmatpush1.msra.mxu0 0.0
    %806 = vmatprep.subr.mxu0 0.0
    %807 = vmatpush1.msra.mxu0 0.0
    %808 = vmatprep.subr.mxu0 0.0
    %809 = vmatpush1.msra.mxu0 0.0
    %810 = vmatprep.subr.mxu0 0.0
    %811 = vmatpush1.msra.mxu0 0.0
    %812 = vmatprep.subr.mxu0 0.0
    %813 = vmatpush1.msra.mxu0 0.0
    %814 = vmatprep.subr.mxu0 0.0
    %815 = vmatpush1.msra.mxu0 0.0
    %816 = vmatprep.subr.mxu0 0.0
    %817 = vmatpush1.msra.mxu0 0.0
    %818 = vmatprep.subr.mxu0 0.0
    %819 = vmatpush1.msra.mxu0 0.0
    %820 = vmatprep.subr.mxu0 0.0
    %821 = vmatpush1.msra.mxu0 0.0
    %822 = vmatprep.subr.mxu0 0.0
    %823 = vmatpush1.msra.mxu0 0.0
    %824 = vmatprep.subr.mxu0 0.0
    %825 = vmatpush1.msra.mxu0 0.0
    %826 = vmatprep.subr.mxu0 0.0
    %827 = vmatpush1.msra.mxu0 0.0
    %828 = vmatprep.subr.mxu0 0.0
    %829 = vmatpush1.msra.mxu0 0.0
    %830 = vmatprep.subr.mxu0 0.0
    %831 = vmatpush1.msra.mxu0 0.0
    %832 = vmatprep.subr.mxu0 0.0
    %833 = vmatpush1.msra.mxu0 0.0
    %834 = vmatprep.subr.mxu0 0.0
    %835 = vmatpush1.msra.mxu0 0.0
    %836 = vmatprep.subr.mxu0 0.0
    %837 = vmatpush1.msra.mxu0 0.0
    %838 = vmatprep.mubr.f32.mxu0 0.0
    %839 = vmatmul.mubr.f32.gmra.mrb[0].mxu0 %v772
    %v840 = vpop.f32.mrb[0].mxu0
    %v841 = vadd.f32 %v66, %v840
    %v842 = vpop.f32.mrb[0].mxu0
    %v843 = vadd.f32 %v70, %v842
    %844 = vdwg.mxu0
    %s845 = scalar_lea.vmem %s0, 16
    %v846 = vld [vmem:[%s845] sm:$0xff]
    %v848 = vsel %vm76, %v846, 0
    %850 = vmatprep.subr.mxu0 %v75
    %851 = vmatpush1.msra.mxu0 %v74
    %852 = vmatprep.subr.mxu0 0.0
    %853 = vmatpush1.msra.mxu0 0.0
    %854 = vmatprep.subr.mxu0 0.0
    %855 = vmatpush1.msra.mxu0 0.0
    %856 = vmatprep.subr.mxu0 0.0
    %857 = vmatpush1.msra.mxu0 0.0
    %858 = vmatprep.subr.mxu0 0.0
    %859 = vmatpush1.msra.mxu0 0.0
    %860 = vmatprep.subr.mxu0 0.0
    %861 = vmatpush1.msra.mxu0 0.0
    %862 = vmatprep.subr.mxu0 0.0
    %863 = vmatpush1.msra.mxu0 0.0
    %864 = vmatprep.subr.mxu0 0.0
    %865 = vmatpush1.msra.mxu0 0.0
    %866 = vmatprep.subr.mxu0 0.0
    %867 = vmatpush1.msra.mxu0 0.0
    %868 = vmatprep.subr.mxu0 0.0
    %869 = vmatpush1.msra.mxu0 0.0
    %870 = vmatprep.subr.mxu0 0.0
    %871 = vmatpush1.msra.mxu0 0.0
    %872 = vmatprep.subr.mxu0 0.0
    %873 = vmatpush1.msra.mxu0 0.0
    %874 = vmatprep.subr.mxu0 0.0
    %875 = vmatpush1.msra.mxu0 0.0
    %876 = vmatprep.subr.mxu0 0.0
    %877 = vmatpush1.msra.mxu0 0.0
    %878 = vmatprep.subr.mxu0 0.0
    %879 = vmatpush1.msra.mxu0 0.0
    %880 = vmatprep.subr.mxu0 0.0
    %881 = vmatpush1.msra.mxu0 0.0
    %882 = vmatprep.subr.mxu0 0.0
    %883 = vmatpush1.msra.mxu0 0.0
    %884 = vmatprep.subr.mxu0 0.0
    %885 = vmatpush1.msra.mxu0 0.0
    %886 = vmatprep.subr.mxu0 0.0
    %887 = vmatpush1.msra.mxu0 0.0
    %888 = vmatprep.subr.mxu0 0.0
    %889 = vmatpush1.msra.mxu0 0.0
    %890 = vmatprep.subr.mxu0 0.0
    %891 = vmatpush1.msra.mxu0 0.0
    %892 = vmatprep.subr.mxu0 0.0
    %893 = vmatpush1.msra.mxu0 0.0
    %894 = vmatprep.subr.mxu0 0.0
    %895 = vmatpush1.msra.mxu0 0.0
    %896 = vmatprep.subr.mxu0 0.0
    %897 = vmatpush1.msra.mxu0 0.0
    %898 = vmatprep.subr.mxu0 0.0
    %899 = vmatpush1.msra.mxu0 0.0
    %900 = vmatprep.subr.mxu0 0.0
    %901 = vmatpush1.msra.mxu0 0.0
    %902 = vmatprep.subr.mxu0 0.0
    %903 = vmatpush1.msra.mxu0 0.0
    %904 = vmatprep.subr.mxu0 0.0
    %905 = vmatpush1.msra.mxu0 0.0
    %906 = vmatprep.subr.mxu0 0.0
    %907 = vmatpush1.msra.mxu0 0.0
    %908 = vmatprep.subr.mxu0 0.0
    %909 = vmatpush1.msra.mxu0 0.0
    %910 = vmatprep.subr.mxu0 0.0
    %911 = vmatpush1.msra.mxu0 0.0
    %912 = vmatprep.subr.mxu0 0.0
    %913 = vmatpush1.msra.mxu0 0.0
    %914 = vmatprep.mubr.f32.mxu0 0.0
    %915 = vmatmul.mubr.f32.gmra.mrb[0].mxu0 %v848
    %v916 = vpop.f32.mrb[0].mxu0
    %v917 = vadd.f32 %v53, %v916
    %v918 = vpop.f32.mrb[0].mxu0
    %v919 = vadd.f32 %v57, %v918
    %920 = vdwg.mxu0
    %921 = vmatprep.subr.mxu0 %v152
    %922 = vmatpush1.msra.mxu0 %v151
    %923 = vmatprep.subr.mxu0 %v154
    %924 = vmatpush1.msra.mxu0 %v153
    %925 = vmatprep.subr.mxu0 %v156
    %926 = vmatpush1.msra.mxu0 %v155
    %927 = vmatprep.subr.mxu0 %v158
    %928 = vmatpush1.msra.mxu0 %v157
    %929 = vmatprep.subr.mxu0 %v160
    %930 = vmatpush1.msra.mxu0 %v159
    %931 = vmatprep.subr.mxu0 %v162
    %932 = vmatpush1.msra.mxu0 %v161
    %933 = vmatprep.subr.mxu0 %v164
    %934 = vmatpush1.msra.mxu0 %v163
    %935 = vmatprep.subr.mxu0 %v166
    %936 = vmatpush1.msra.mxu0 %v165
    %937 = vmatprep.subr.mxu0 0.0
    %938 = vmatpush1.msra.mxu0 0.0
    %939 = vmatprep.subr.mxu0 0.0
    %940 = vmatpush1.msra.mxu0 0.0
    %941 = vmatprep.subr.mxu0 0.0
    %942 = vmatpush1.msra.mxu0 0.0
    %943 = vmatprep.subr.mxu0 0.0
    %944 = vmatpush1.msra.mxu0 0.0
    %945 = vmatprep.subr.mxu0 0.0
    %946 = vmatpush1.msra.mxu0 0.0
    %947 = vmatprep.subr.mxu0 0.0
    %948 = vmatpush1.msra.mxu0 0.0
    %949 = vmatprep.subr.mxu0 0.0
    %950 = vmatpush1.msra.mxu0 0.0
    %951 = vmatprep.subr.mxu0 0.0
    %952 = vmatpush1.msra.mxu0 0.0
    %953 = vmatprep.subr.mxu0 0.0
    %954 = vmatpush1.msra.mxu0 0.0
    %955 = vmatprep.subr.mxu0 0.0
    %956 = vmatpush1.msra.mxu0 0.0
    %957 = vmatprep.subr.mxu0 0.0
    %958 = vmatpush1.msra.mxu0 0.0
    %959 = vmatprep.subr.mxu0 0.0
    %960 = vmatpush1.msra.mxu0 0.0
    %961 = vmatprep.subr.mxu0 0.0
    %962 = vmatpush1.msra.mxu0 0.0
    %963 = vmatprep.subr.mxu0 0.0
    %964 = vmatpush1.msra.mxu0 0.0
    %965 = vmatprep.subr.mxu0 0.0
    %966 = vmatpush1.msra.mxu0 0.0
    %967 = vmatprep.subr.mxu0 0.0
    %968 = vmatpush1.msra.mxu0 0.0
    %969 = vmatprep.subr.mxu0 0.0
    %970 = vmatpush1.msra.mxu0 0.0
    %971 = vmatprep.subr.mxu0 0.0
    %972 = vmatpush1.msra.mxu0 0.0
    %973 = vmatprep.subr.mxu0 0.0
    %974 = vmatpush1.msra.mxu0 0.0
    %975 = vmatprep.subr.mxu0 0.0
    %976 = vmatpush1.msra.mxu0 0.0
    %977 = vmatprep.subr.mxu0 0.0
    %978 = vmatpush1.msra.mxu0 0.0
    %979 = vmatprep.subr.mxu0 0.0
    %980 = vmatpush1.msra.mxu0 0.0
    %981 = vmatprep.subr.mxu0 0.0
    %982 = vmatpush1.msra.mxu0 0.0
    %983 = vmatprep.subr.mxu0 0.0
    %984 = vmatpush1.msra.mxu0 0.0
    %985 = vmatprep.mubr.f32.mxu0 0.0
    %986 = vmatmul.mubr.f32.gmra.mrb[0].mxu0 %v666
    %v987 = vpop.f32.mrb[0].mxu0
    %v988 = vadd.f32 0.0, %v987
    %v989 = vpop.f32.mrb[0].mxu0
    %v990 = vadd.f32 0.0, %v989
    %991 = vdwg.mxu0
    %v992 = vadd.f32 %v917, %v988
    %v993 = vadd.f32 %v919, %v990
    %v994 = vxor.u32 %v992, 2147483648
    %v995 = vxor.u32 %v993, 2147483648
    %v996 = vmul.f32 %v994, 1.442695
    %v997 = vpow.pop %v996
    %v998 = vmul.f32 %v995, 1.442695
    %v999 = vpow.pop %v998
    %v1000 = vadd.f32 %v997, 1.0
    %v1001 = vadd.f32 %v999, 1.0
    %v1002 = vrcp.pop %v1000
    %v1003 = vmul.f32 1.0, %v1002
    %v1004 = vrcp.pop %v1001
    %v1005 = vmul.f32 1.0, %v1004
    %v1006 = vtanh.pop %v993
    %v1007 = vmul.f32 %v1003, %v658
    %1009 = vrot.lane.b32.xlu0 %v1006, 64
    %v1010 = vpop.permute.xlu0 %1009
    %v1012 = vmul.f32 %v1003, %v1010
    %1014 = vrot.lane.b32.xlu0 %v1012, 64
    %v1015 = vpop.permute.xlu0 %1014
    %v1017 = vadd.f32 %v1007, %v1015
    %v1018 = vtanh.pop %v1017
    %1020 = vrot.lane.b32.xlu0 %v1018, 64
    %v1021 = vpop.permute.xlu0 %1020
    %v1023 = vmul.f32 %v1005, %v1021
    %v1025 = vsel %vm167, %v1023, 0
    %1027 = vmatprep.subr.mxu0 %v275
    %1028 = vmatpush1.msra.mxu0 %v274
    %1029 = vmatprep.subr.mxu0 %v277
    %1030 = vmatpush1.msra.mxu0 %v276
    %1031 = vmatprep.subr.mxu0 %v279
    %1032 = vmatpush1.msra.mxu0 %v278
    %1033 = vmatprep.subr.mxu0 %v281
    %1034 = vmatpush1.msra.mxu0 %v280
    %1035 = vmatprep.subr.mxu0 %v283
    %1036 = vmatpush1.msra.mxu0 %v282
    %1037 = vmatprep.subr.mxu0 %v285
    %1038 = vmatpush1.msra.mxu0 %v284
    %1039 = vmatprep.subr.mxu0 %v287
    %1040 = vmatpush1.msra.mxu0 %v286
    %1041 = vmatprep.subr.mxu0 %v289
    %1042 = vmatpush1.msra.mxu0 %v288
    %1043 = vmatprep.subr.mxu0 0.0
    %1044 = vmatpush1.msra.mxu0 0.0
    %1045 = vmatprep.subr.mxu0 0.0
    %1046 = vmatpush1.msra.mxu0 0.0
    %1047 = vmatprep.subr.mxu0 0.0
    %1048 = vmatpush1.msra.mxu0 0.0
    %1049 = vmatprep.subr.mxu0 0.0
    %1050 = vmatpush1.msra.mxu0 0.0
    %1051 = vmatprep.subr.mxu0 0.0
    %1052 = vmatpush1.msra.mxu0 0.0
    %1053 = vmatprep.subr.mxu0 0.0
    %1054 = vmatpush1.msra.mxu0 0.0
    %1055 = vmatprep.subr.mxu0 0.0
    %1056 = vmatpush1.msra.mxu0 0.0
    %1057 = vmatprep.subr.mxu0 0.0
    %1058 = vmatpush1.msra.mxu0 0.0
    %1059 = vmatprep.subr.mxu0 0.0
    %1060 = vmatpush1.msra.mxu0 0.0
    %1061 = vmatprep.subr.mxu0 0.0
    %1062 = vmatpush1.msra.mxu0 0.0
    %1063 = vmatprep.subr.mxu0 0.0
    %1064 = vmatpush1.msra.mxu0 0.0
    %1065 = vmatprep.subr.mxu0 0.0
    %1066 = vmatpush1.msra.mxu0 0.0
    %1067 = vmatprep.subr.mxu0 0.0
    %1068 = vmatpush1.msra.mxu0 0.0
    %1069 = vmatprep.subr.mxu0 0.0
    %1070 = vmatpush1.msra.mxu0 0.0
    %1071 = vmatprep.subr.mxu0 0.0
    %1072 = vmatpush1.msra.mxu0 0.0
    %1073 = vmatprep.subr.mxu0 0.0
    %1074 = vmatpush1.msra.mxu0 0.0
    %1075 = vmatprep.subr.mxu0 0.0
    %1076 = vmatpush1.msra.mxu0 0.0
    %1077 = vmatprep.subr.mxu0 0.0
    %1078 = vmatpush1.msra.mxu0 0.0
    %1079 = vmatprep.subr.mxu0 0.0
    %1080 = vmatpush1.msra.mxu0 0.0
    %1081 = vmatprep.subr.mxu0 0.0
    %1082 = vmatpush1.msra.mxu0 0.0
    %1083 = vmatprep.subr.mxu0 0.0
    %1084 = vmatpush1.msra.mxu0 0.0
    %1085 = vmatprep.subr.mxu0 0.0
    %1086 = vmatpush1.msra.mxu0 0.0
    %1087 = vmatprep.subr.mxu0 0.0
    %1088 = vmatpush1.msra.mxu0 0.0
    %1089 = vmatprep.subr.mxu0 0.0
    %1090 = vmatpush1.msra.mxu0 0.0
    %1091 = vmatprep.mubr.f32.mxu0 0.0
    %1092 = vmatmul.mubr.f32.gmra.mrb[0].mxu0 %v1025
    %v1093 = vpop.f32.mrb[0].mxu0
    %v1094 = vadd.f32 0.0, %v1093
    %v1095 = vpop.f32.mrb[0].mxu0
    %v1096 = vadd.f32 0.0, %v1095
    %1097 = vdwg.mxu0
    %v1098 = vadd.f32 %v841, %v1094
    %v1099 = vadd.f32 %v843, %v1096
    %v1100 = vxor.u32 %v1098, 2147483648
    %v1101 = vxor.u32 %v1099, 2147483648
    %v1102 = vmul.f32 %v1100, 1.442695
    %v1103 = vpow.pop %v1102
    %v1104 = vmul.f32 %v1101, 1.442695
    %v1105 = vpow.pop %v1104
    %v1106 = vadd.f32 %v1103, 1.0
    %v1107 = vadd.f32 %v1105, 1.0
    %v1108 = vrcp.pop %v1106
    %v1109 = vmul.f32 1.0, %v1108
    %v1110 = vrcp.pop %v1107
    %v1111 = vmul.f32 1.0, %v1110
    %v1112 = vtanh.pop %v1099
    %v1113 = vmul.f32 %v1109, %v764
    %1115 = vrot.lane.b32.xlu0 %v1112, 64
    %v1116 = vpop.permute.xlu0 %1115
    %v1118 = vmul.f32 %v1109, %v1116
    %1120 = vrot.lane.b32.xlu0 %v1118, 64
    %v1121 = vpop.permute.xlu0 %1120
    %v1123 = vadd.f32 %v1113, %v1121
    %v1124 = vtanh.pop %v1123
    %1126 = vrot.lane.b32.xlu0 %v1124, 64
    %v1127 = vpop.permute.xlu0 %1126
    %v1129 = vmul.f32 %v1111, %v1127
    %v1131 = vsel %vm167, %v1129, 0
    %1133 = vmatprep.subr.mxu0 %v397
    %1134 = vmatpush1.msra.mxu0 %v396
    %1135 = vmatprep.subr.mxu0 %v399
    %1136 = vmatpush1.msra.mxu0 %v398
    %1137 = vmatprep.subr.mxu0 %v401
    %1138 = vmatpush1.msra.mxu0 %v400
    %1139 = vmatprep.subr.mxu0 %v403
    %1140 = vmatpush1.msra.mxu0 %v402
    %1141 = vmatprep.subr.mxu0 %v405
    %1142 = vmatpush1.msra.mxu0 %v404
    %1143 = vmatprep.subr.mxu0 %v407
    %1144 = vmatpush1.msra.mxu0 %v406
    %1145 = vmatprep.subr.mxu0 %v409
    %1146 = vmatpush1.msra.mxu0 %v408
    %1147 = vmatprep.subr.mxu0 %v411
    %1148 = vmatpush1.msra.mxu0 %v410
    %1149 = vmatprep.subr.mxu0 0.0
    %1150 = vmatpush1.msra.mxu0 0.0
    %1151 = vmatprep.subr.mxu0 0.0
    %1152 = vmatpush1.msra.mxu0 0.0
    %1153 = vmatprep.subr.mxu0 0.0
    %1154 = vmatpush1.msra.mxu0 0.0
    %1155 = vmatprep.subr.mxu0 0.0
    %1156 = vmatpush1.msra.mxu0 0.0
    %1157 = vmatprep.subr.mxu0 0.0
    %1158 = vmatpush1.msra.mxu0 0.0
    %1159 = vmatprep.subr.mxu0 0.0
    %1160 = vmatpush1.msra.mxu0 0.0
    %1161 = vmatprep.subr.mxu0 0.0
    %1162 = vmatpush1.msra.mxu0 0.0
    %1163 = vmatprep.subr.mxu0 0.0
    %1164 = vmatpush1.msra.mxu0 0.0
    %1165 = vmatprep.subr.mxu0 0.0
    %1166 = vmatpush1.msra.mxu0 0.0
    %1167 = vmatprep.subr.mxu0 0.0
    %1168 = vmatpush1.msra.mxu0 0.0
    %1169 = vmatprep.subr.mxu0 0.0
    %1170 = vmatpush1.msra.mxu0 0.0
    %1171 = vmatprep.subr.mxu0 0.0
    %1172 = vmatpush1.msra.mxu0 0.0
    %1173 = vmatprep.subr.mxu0 0.0
    %1174 = vmatpush1.msra.mxu0 0.0
    %1175 = vmatprep.subr.mxu0 0.0
    %1176 = vmatpush1.msra.mxu0 0.0
    %1177 = vmatprep.subr.mxu0 0.0
    %1178 = vmatpush1.msra.mxu0 0.0
    %1179 = vmatprep.subr.mxu0 0.0
    %1180 = vmatpush1.msra.mxu0 0.0
    %1181 = vmatprep.subr.mxu0 0.0
    %1182 = vmatpush1.msra.mxu0 0.0
    %1183 = vmatprep.subr.mxu0 0.0
    %1184 = vmatpush1.msra.mxu0 0.0
    %1185 = vmatprep.subr.mxu0 0.0
    %1186 = vmatpush1.msra.mxu0 0.0
    %1187 = vmatprep.subr.mxu0 0.0
    %1188 = vmatpush1.msra.mxu0 0.0
    %1189 = vmatprep.subr.mxu0 0.0
    %1190 = vmatpush1.msra.mxu0 0.0
    %1191 = vmatprep.subr.mxu0 0.0
    %1192 = vmatpush1.msra.mxu0 0.0
    %1193 = vmatprep.subr.mxu0 0.0
    %1194 = vmatpush1.msra.mxu0 0.0
    %1195 = vmatprep.subr.mxu0 0.0
    %1196 = vmatpush1.msra.mxu0 0.0
    %1197 = vmatprep.mubr.f32.mxu0 0.0
    %1198 = vmatmul.mubr.f32.gmra.mrb[0].mxu0 %v1131
    %v1199 = vpop.f32.mrb[0].mxu0
    %v1200 = vadd.f32 %v66, %v1199
    %v1201 = vpop.f32.mrb[0].mxu0
    %v1202 = vadd.f32 %v70, %v1201
    %1203 = vdwg.mxu0
    %s1204 = scalar_lea.vmem %s0, 24
    %v1205 = vld [vmem:[%s1204] sm:$0xff]
    %v1207 = vsel %vm76, %v1205, 0
    %1209 = vmatprep.subr.mxu0 %v75
    %1210 = vmatpush1.msra.mxu0 %v74
    %1211 = vmatprep.subr.mxu0 0.0
    %1212 = vmatpush1.msra.mxu0 0.0
    %1213 = vmatprep.subr.mxu0 0.0
    %1214 = vmatpush1.msra.mxu0 0.0
    %1215 = vmatprep.subr.mxu0 0.0
    %1216 = vmatpush1.msra.mxu0 0.0
    %1217 = vmatprep.subr.mxu0 0.0
    %1218 = vmatpush1.msra.mxu0 0.0
    %1219 = vmatprep.subr.mxu0 0.0
    %1220 = vmatpush1.msra.mxu0 0.0
    %1221 = vmatprep.subr.mxu0 0.0
    %1222 = vmatpush1.msra.mxu0 0.0
    %1223 = vmatprep.subr.mxu0 0.0
    %1224 = vmatpush1.msra.mxu0 0.0
    %1225 = vmatprep.subr.mxu0 0.0
    %1226 = vmatpush1.msra.mxu0 0.0
    %1227 = vmatprep.subr.mxu0 0.0
    %1228 = vmatpush1.msra.mxu0 0.0
    %1229 = vmatprep.subr.mxu0 0.0
    %1230 = vmatpush1.msra.mxu0 0.0
    %1231 = vmatprep.subr.mxu0 0.0
    %1232 = vmatpush1.msra.mxu0 0.0
    %1233 = vmatprep.subr.mxu0 0.0
    %1234 = vmatpush1.msra.mxu0 0.0
    %1235 = vmatprep.subr.mxu0 0.0
    %1236 = vmatpush1.msra.mxu0 0.0
    %1237 = vmatprep.subr.mxu0 0.0
    %1238 = vmatpush1.msra.mxu0 0.0
    %1239 = vmatprep.subr.mxu0 0.0
    %1240 = vmatpush1.msra.mxu0 0.0
    %1241 = vmatprep.subr.mxu0 0.0
    %1242 = vmatpush1.msra.mxu0 0.0
    %1243 = vmatprep.subr.mxu0 0.0
    %1244 = vmatpush1.msra.mxu0 0.0
    %1245 = vmatprep.subr.mxu0 0.0
    %1246 = vmatpush1.msra.mxu0 0.0
    %1247 = vmatprep.subr.mxu0 0.0
    %1248 = vmatpush1.msra.mxu0 0.0
    %1249 = vmatprep.subr.mxu0 0.0
    %1250 = vmatpush1.msra.mxu0 0.0
    %1251 = vmatprep.subr.mxu0 0.0
    %1252 = vmatpush1.msra.mxu0 0.0
    %1253 = vmatprep.subr.mxu0 0.0
    %1254 = vmatpush1.msra.mxu0 0.0
    %1255 = vmatprep.subr.mxu0 0.0
    %1256 = vmatpush1.msra.mxu0 0.0
    %1257 = vmatprep.subr.mxu0 0.0
    %1258 = vmatpush1.msra.mxu0 0.0
    %1259 = vmatprep.subr.mxu0 0.0
    %1260 = vmatpush1.msra.mxu0 0.0
    %1261 = vmatprep.subr.mxu0 0.0
    %1262 = vmatpush1.msra.mxu0 0.0
    %1263 = vmatprep.subr.mxu0 0.0
    %1264 = vmatpush1.msra.mxu0 0.0
    %1265 = vmatprep.subr.mxu0 0.0
    %1266 = vmatpush1.msra.mxu0 0.0
    %1267 = vmatprep.subr.mxu0 0.0
    %1268 = vmatpush1.msra.mxu0 0.0
    %1269 = vmatprep.subr.mxu0 0.0
    %1270 = vmatpush1.msra.mxu0 0.0
    %1271 = vmatprep.subr.mxu0 0.0
    %1272 = vmatpush1.msra.mxu0 0.0
    %1273 = vmatprep.mubr.f32.mxu0 0.0
    %1274 = vmatmul.mubr.f32.gmra.mrb[0].mxu0 %v1207
    %v1275 = vpop.f32.mrb[0].mxu0
    %v1276 = vadd.f32 %v53, %v1275
    %v1277 = vpop.f32.mrb[0].mxu0
    %v1278 = vadd.f32 %v57, %v1277
    %1279 = vdwg.mxu0
    %1280 = vmatprep.subr.mxu0 %v152
    %1281 = vmatpush1.msra.mxu0 %v151
    %1282 = vmatprep.subr.mxu0 %v154
    %1283 = vmatpush1.msra.mxu0 %v153
    %1284 = vmatprep.subr.mxu0 %v156
    %1285 = vmatpush1.msra.mxu0 %v155
    %1286 = vmatprep.subr.mxu0 %v158
    %1287 = vmatpush1.msra.mxu0 %v157
    %1288 = vmatprep.subr.mxu0 %v160
    %1289 = vmatpush1.msra.mxu0 %v159
    %1290 = vmatprep.subr.mxu0 %v162
    %1291 = vmatpush1.msra.mxu0 %v161
    %1292 = vmatprep.subr.mxu0 %v164
    %1293 = vmatpush1.msra.mxu0 %v163
    %1294 = vmatprep.subr.mxu0 %v166
    %1295 = vmatpush1.msra.mxu0 %v165
    %1296 = vmatprep.subr.mxu0 0.0
    %1297 = vmatpush1.msra.mxu0 0.0
    %1298 = vmatprep.subr.mxu0 0.0
    %1299 = vmatpush1.msra.mxu0 0.0
    %1300 = vmatprep.subr.mxu0 0.0
    %1301 = vmatpush1.msra.mxu0 0.0
    %1302 = vmatprep.subr.mxu0 0.0
    %1303 = vmatpush1.msra.mxu0 0.0
    %1304 = vmatprep.subr.mxu0 0.0
    %1305 = vmatpush1.msra.mxu0 0.0
    %1306 = vmatprep.subr.mxu0 0.0
    %1307 = vmatpush1.msra.mxu0 0.0
    %1308 = vmatprep.subr.mxu0 0.0
    %1309 = vmatpush1.msra.mxu0 0.0
    %1310 = vmatprep.subr.mxu0 0.0
    %1311 = vmatpush1.msra.mxu0 0.0
    %1312 = vmatprep.subr.mxu0 0.0
    %1313 = vmatpush1.msra.mxu0 0.0
    %1314 = vmatprep.subr.mxu0 0.0
    %1315 = vmatpush1.msra.mxu0 0.0
    %1316 = vmatprep.subr.mxu0 0.0
    %1317 = vmatpush1.msra.mxu0 0.0
    %1318 = vmatprep.subr.mxu0 0.0
    %1319 = vmatpush1.msra.mxu0 0.0
    %1320 = vmatprep.subr.mxu0 0.0
    %1321 = vmatpush1.msra.mxu0 0.0
    %1322 = vmatprep.subr.mxu0 0.0
    %1323 = vmatpush1.msra.mxu0 0.0
    %1324 = vmatprep.subr.mxu0 0.0
    %1325 = vmatpush1.msra.mxu0 0.0
    %1326 = vmatprep.subr.mxu0 0.0
    %1327 = vmatpush1.msra.mxu0 0.0
    %1328 = vmatprep.subr.mxu0 0.0
    %1329 = vmatpush1.msra.mxu0 0.0
    %1330 = vmatprep.subr.mxu0 0.0
    %1331 = vmatpush1.msra.mxu0 0.0
    %1332 = vmatprep.subr.mxu0 0.0
    %1333 = vmatpush1.msra.mxu0 0.0
    %1334 = vmatprep.subr.mxu0 0.0
    %1335 = vmatpush1.msra.mxu0 0.0
    %1336 = vmatprep.subr.mxu0 0.0
    %1337 = vmatpush1.msra.mxu0 0.0
    %1338 = vmatprep.subr.mxu0 0.0
    %1339 = vmatpush1.msra.mxu0 0.0
    %1340 = vmatprep.subr.mxu0 0.0
    %1341 = vmatpush1.msra.mxu0 0.0
    %1342 = vmatprep.subr.mxu0 0.0
    %1343 = vmatpush1.msra.mxu0 0.0
    %1344 = vmatprep.mubr.f32.mxu0 0.0
    %1345 = vmatmul.mubr.f32.gmra.mrb[0].mxu0 %v1025
    %v1346 = vpop.f32.mrb[0].mxu0
    %v1347 = vadd.f32 0.0, %v1346
    %v1348 = vpop.f32.mrb[0].mxu0
    %v1349 = vadd.f32 0.0, %v1348
    %1350 = vdwg.mxu0
    %v1351 = vadd.f32 %v1276, %v1347
    %v1352 = vadd.f32 %v1278, %v1349
    %v1353 = vxor.u32 %v1351, 2147483648
    %v1354 = vxor.u32 %v1352, 2147483648
    %v1355 = vmul.f32 %v1353, 1.442695
    %v1356 = vpow.pop %v1355
    %v1357 = vmul.f32 %v1354, 1.442695
    %v1358 = vpow.pop %v1357
    %v1359 = vadd.f32 %v1356, 1.0
    %v1360 = vadd.f32 %v1358, 1.0
    %v1361 = vrcp.pop %v1359
    %v1362 = vmul.f32 1.0, %v1361
    %v1363 = vrcp.pop %v1360
    %v1364 = vmul.f32 1.0, %v1363
    %v1365 = vtanh.pop %v1352
    %v1366 = vmul.f32 %v1362, %v1017
    %1368 = vrot.lane.b32.xlu0 %v1365, 64
    %v1369 = vpop.permute.xlu0 %1368
    %v1371 = vmul.f32 %v1362, %v1369
    %1373 = vrot.lane.b32.xlu0 %v1371, 64
    %v1374 = vpop.permute.xlu0 %1373
    %v1376 = vadd.f32 %v1366, %v1374
    %v1377 = vtanh.pop %v1376
    %1379 = vrot.lane.b32.xlu0 %v1377, 64
    %v1380 = vpop.permute.xlu0 %1379
    %v1382 = vmul.f32 %v1364, %v1380
    %v1384 = vsel %vm167, %v1382, 0
    %1386 = vmatprep.subr.mxu0 %v275
    %1387 = vmatpush1.msra.mxu0 %v274
    %1388 = vmatprep.subr.mxu0 %v277
    %1389 = vmatpush1.msra.mxu0 %v276
    %1390 = vmatprep.subr.mxu0 %v279
    %1391 = vmatpush1.msra.mxu0 %v278
    %1392 = vmatprep.subr.mxu0 %v281
    %1393 = vmatpush1.msra.mxu0 %v280
    %1394 = vmatprep.subr.mxu0 %v283
    %1395 = vmatpush1.msra.mxu0 %v282
    %1396 = vmatprep.subr.mxu0 %v285
    %1397 = vmatpush1.msra.mxu0 %v284
    %1398 = vmatprep.subr.mxu0 %v287
    %1399 = vmatpush1.msra.mxu0 %v286
    %1400 = vmatprep.subr.mxu0 %v289
    %1401 = vmatpush1.msra.mxu0 %v288
    %1402 = vmatprep.subr.mxu0 0.0
    %1403 = vmatpush1.msra.mxu0 0.0
    %1404 = vmatprep.subr.mxu0 0.0
    %1405 = vmatpush1.msra.mxu0 0.0
    %1406 = vmatprep.subr.mxu0 0.0
    %1407 = vmatpush1.msra.mxu0 0.0
    %1408 = vmatprep.subr.mxu0 0.0
    %1409 = vmatpush1.msra.mxu0 0.0
    %1410 = vmatprep.subr.mxu0 0.0
    %1411 = vmatpush1.msra.mxu0 0.0
    %1412 = vmatprep.subr.mxu0 0.0
    %1413 = vmatpush1.msra.mxu0 0.0
    %1414 = vmatprep.subr.mxu0 0.0
    %1415 = vmatpush1.msra.mxu0 0.0
    %1416 = vmatprep.subr.mxu0 0.0
    %1417 = vmatpush1.msra.mxu0 0.0
    %1418 = vmatprep.subr.mxu0 0.0
    %1419 = vmatpush1.msra.mxu0 0.0
    %1420 = vmatprep.subr.mxu0 0.0
    %1421 = vmatpush1.msra.mxu0 0.0
    %1422 = vmatprep.subr.mxu0 0.0
    %1423 = vmatpush1.msra.mxu0 0.0
    %1424 = vmatprep.subr.mxu0 0.0
    %1425 = vmatpush1.msra.mxu0 0.0
    %1426 = vmatprep.subr.mxu0 0.0
    %1427 = vmatpush1.msra.mxu0 0.0
    %1428 = vmatprep.subr.mxu0 0.0
    %1429 = vmatpush1.msra.mxu0 0.0
    %1430 = vmatprep.subr.mxu0 0.0
    %1431 = vmatpush1.msra.mxu0 0.0
    %1432 = vmatprep.subr.mxu0 0.0
    %1433 = vmatpush1.msra.mxu0 0.0
    %1434 = vmatprep.subr.mxu0 0.0
    %1435 = vmatpush1.msra.mxu0 0.0
    %1436 = vmatprep.subr.mxu0 0.0
    %1437 = vmatpush1.msra.mxu0 0.0
    %1438 = vmatprep.subr.mxu0 0.0
    %1439 = vmatpush1.msra.mxu0 0.0
    %1440 = vmatprep.subr.mxu0 0.0
    %1441 = vmatpush1.msra.mxu0 0.0
    %1442 = vmatprep.subr.mxu0 0.0
    %1443 = vmatpush1.msra.mxu0 0.0
    %1444 = vmatprep.subr.mxu0 0.0
    %1445 = vmatpush1.msra.mxu0 0.0
    %1446 = vmatprep.subr.mxu0 0.0
    %1447 = vmatpush1.msra.mxu0 0.0
    %1448 = vmatprep.subr.mxu0 0.0
    %1449 = vmatpush1.msra.mxu0 0.0
    %1450 = vmatprep.mubr.f32.mxu0 0.0
    %1451 = vmatmul.mubr.f32.gmra.mrb[0].mxu0 %v1384
    %v1452 = vpop.f32.mrb[0].mxu0
    %v1453 = vadd.f32 0.0, %v1452
    %v1454 = vpop.f32.mrb[0].mxu0
    %v1455 = vadd.f32 0.0, %v1454
    %1456 = vdwg.mxu0
    %v1457 = vadd.f32 %v1200, %v1453
    %v1458 = vadd.f32 %v1202, %v1455
    %v1459 = vxor.u32 %v1457, 2147483648
    %v1460 = vxor.u32 %v1458, 2147483648
    %v1461 = vmul.f32 %v1459, 1.442695
    %v1462 = vpow.pop %v1461
    %v1463 = vmul.f32 %v1460, 1.442695
    %v1464 = vpow.pop %v1463
    %v1465 = vadd.f32 %v1462, 1.0
    %v1466 = vadd.f32 %v1464, 1.0
    %v1467 = vrcp.pop %v1465
    %v1468 = vmul.f32 1.0, %v1467
    %v1469 = vrcp.pop %v1466
    %v1470 = vmul.f32 1.0, %v1469
    %v1471 = vtanh.pop %v1458
    %v1472 = vmul.f32 %v1468, %v1123
    %1474 = vrot.lane.b32.xlu0 %v1471, 64
    %v1475 = vpop.permute.xlu0 %1474
    %v1477 = vmul.f32 %v1468, %v1475
    %1479 = vrot.lane.b32.xlu0 %v1477, 64
    %v1480 = vpop.permute.xlu0 %1479
    %v1482 = vadd.f32 %v1472, %v1480
    %v1483 = vtanh.pop %v1482
    %1485 = vrot.lane.b32.xlu0 %v1483, 64
    %v1486 = vpop.permute.xlu0 %1485
    %v1488 = vmul.f32 %v1470, %v1486
    %v1490 = vsel %vm167, %v1488, 0
    %1492 = vmatprep.subr.mxu0 %v397
    %1493 = vmatpush1.msra.mxu0 %v396
    %1494 = vmatprep.subr.mxu0 %v399
    %1495 = vmatpush1.msra.mxu0 %v398
    %1496 = vmatprep.subr.mxu0 %v401
    %1497 = vmatpush1.msra.mxu0 %v400
    %1498 = vmatprep.subr.mxu0 %v403
    %1499 = vmatpush1.msra.mxu0 %v402
    %1500 = vmatprep.subr.mxu0 %v405
    %1501 = vmatpush1.msra.mxu0 %v404
    %1502 = vmatprep.subr.mxu0 %v407
    %1503 = vmatpush1.msra.mxu0 %v406
    %1504 = vmatprep.subr.mxu0 %v409
    %1505 = vmatpush1.msra.mxu0 %v408
    %1506 = vmatprep.subr.mxu0 %v411
    %1507 = vmatpush1.msra.mxu0 %v410
    %1508 = vmatprep.subr.mxu0 0.0
    %1509 = vmatpush1.msra.mxu0 0.0
    %1510 = vmatprep.subr.mxu0 0.0
    %1511 = vmatpush1.msra.mxu0 0.0
    %1512 = vmatprep.subr.mxu0 0.0
    %1513 = vmatpush1.msra.mxu0 0.0
    %1514 = vmatprep.subr.mxu0 0.0
    %1515 = vmatpush1.msra.mxu0 0.0
    %1516 = vmatprep.subr.mxu0 0.0
    %1517 = vmatpush1.msra.mxu0 0.0
    %1518 = vmatprep.subr.mxu0 0.0
    %1519 = vmatpush1.msra.mxu0 0.0
    %1520 = vmatprep.subr.mxu0 0.0
    %1521 = vmatpush1.msra.mxu0 0.0
    %1522 = vmatprep.subr.mxu0 0.0
    %1523 = vmatpush1.msra.mxu0 0.0
    %1524 = vmatprep.subr.mxu0 0.0
    %1525 = vmatpush1.msra.mxu0 0.0
    %1526 = vmatprep.subr.mxu0 0.0
    %1527 = vmatpush1.msra.mxu0 0.0
    %1528 = vmatprep.subr.mxu0 0.0
    %1529 = vmatpush1.msra.mxu0 0.0
    %1530 = vmatprep.subr.mxu0 0.0
    %1531 = vmatpush1.msra.mxu0 0.0
    %1532 = vmatprep.subr.mxu0 0.0
    %1533 = vmatpush1.msra.mxu0 0.0
    %1534 = vmatprep.subr.mxu0 0.0
    %1535 = vmatpush1.msra.mxu0 0.0
    %1536 = vmatprep.subr.mxu0 0.0
    %1537 = vmatpush1.msra.mxu0 0.0
    %1538 = vmatprep.subr.mxu0 0.0
    %1539 = vmatpush1.msra.mxu0 0.0
    %1540 = vmatprep.subr.mxu0 0.0
    %1541 = vmatpush1.msra.mxu0 0.0
    %1542 = vmatprep.subr.mxu0 0.0
    %1543 = vmatpush1.msra.mxu0 0.0
    %1544 = vmatprep.subr.mxu0 0.0
    %1545 = vmatpush1.msra.mxu0 0.0
    %1546 = vmatprep.subr.mxu0 0.0
    %1547 = vmatpush1.msra.mxu0 0.0
    %1548 = vmatprep.subr.mxu0 0.0
    %1549 = vmatpush1.msra.mxu0 0.0
    %1550 = vmatprep.subr.mxu0 0.0
    %1551 = vmatpush1.msra.mxu0 0.0
    %1552 = vmatprep.subr.mxu0 0.0
    %1553 = vmatpush1.msra.mxu0 0.0
    %1554 = vmatprep.subr.mxu0 0.0
    %1555 = vmatpush1.msra.mxu0 0.0
    %1556 = vmatprep.mubr.f32.mxu0 0.0
    %1557 = vmatmul.mubr.f32.gmra.mrb[0].mxu0 %v1490
    %v1558 = vpop.f32.mrb[0].mxu0
    %v1559 = vadd.f32 %v66, %v1558
    %v1560 = vpop.f32.mrb[0].mxu0
    %v1561 = vadd.f32 %v70, %v1560
    %1562 = vdwg.mxu0
    %s1563 = scalar_lea.vmem %s0, 32
    %v1564 = vld [vmem:[%s1563] sm:$0xff]
    %v1566 = vsel %vm76, %v1564, 0
    %1568 = vmatprep.subr.mxu0 %v75
    %1569 = vmatpush1.msra.mxu0 %v74
    %1570 = vmatprep.subr.mxu0 0.0
    %1571 = vmatpush1.msra.mxu0 0.0
    %1572 = vmatprep.subr.mxu0 0.0
    %1573 = vmatpush1.msra.mxu0 0.0
    %1574 = vmatprep.subr.mxu0 0.0
    %1575 = vmatpush1.msra.mxu0 0.0
    %1576 = vmatprep.subr.mxu0 0.0
    %1577 = vmatpush1.msra.mxu0 0.0
    %1578 = vmatprep.subr.mxu0 0.0
    %1579 = vmatpush1.msra.mxu0 0.0
    %1580 = vmatprep.subr.mxu0 0.0
    %1581 = vmatpush1.msra.mxu0 0.0
    %1582 = vmatprep.subr.mxu0 0.0
    %1583 = vmatpush1.msra.mxu0 0.0
    %1584 = vmatprep.subr.mxu0 0.0
    %1585 = vmatpush1.msra.mxu0 0.0
    %1586 = vmatprep.subr.mxu0 0.0
    %1587 = vmatpush1.msra.mxu0 0.0
    %1588 = vmatprep.subr.mxu0 0.0
    %1589 = vmatpush1.msra.mxu0 0.0
    %1590 = vmatprep.subr.mxu0 0.0
    %1591 = vmatpush1.msra.mxu0 0.0
    %1592 = vmatprep.subr.mxu0 0.0
    %1593 = vmatpush1.msra.mxu0 0.0
    %1594 = vmatprep.subr.mxu0 0.0
    %1595 = vmatpush1.msra.mxu0 0.0
    %1596 = vmatprep.subr.mxu0 0.0
    %1597 = vmatpush1.msra.mxu0 0.0
    %1598 = vmatprep.subr.mxu0 0.0
    %1599 = vmatpush1.msra.mxu0 0.0
    %1600 = vmatprep.subr.mxu0 0.0
    %1601 = vmatpush1.msra.mxu0 0.0
    %1602 = vmatprep.subr.mxu0 0.0
    %1603 = vmatpush1.msra.mxu0 0.0
    %1604 = vmatprep.subr.mxu0 0.0
    %1605 = vmatpush1.msra.mxu0 0.0
    %1606 = vmatprep.subr.mxu0 0.0
    %1607 = vmatpush1.msra.mxu0 0.0
    %1608 = vmatprep.subr.mxu0 0.0
    %1609 = vmatpush1.msra.mxu0 0.0
    %1610 = vmatprep.subr.mxu0 0.0
    %1611 = vmatpush1.msra.mxu0 0.0
    %1612 = vmatprep.subr.mxu0 0.0
    %1613 = vmatpush1.msra.mxu0 0.0
    %1614 = vmatprep.subr.mxu0 0.0
    %1615 = vmatpush1.msra.mxu0 0.0
    %1616 = vmatprep.subr.mxu0 0.0
    %1617 = vmatpush1.msra.mxu0 0.0
    %1618 = vmatprep.subr.mxu0 0.0
    %1619 = vmatpush1.msra.mxu0 0.0
    %1620 = vmatprep.subr.mxu0 0.0
    %1621 = vmatpush1.msra.mxu0 0.0
    %1622 = vmatprep.subr.mxu0 0.0
    %1623 = vmatpush1.msra.mxu0 0.0
    %1624 = vmatprep.subr.mxu0 0.0
    %1625 = vmatpush1.msra.mxu0 0.0
    %1626 = vmatprep.subr.mxu0 0.0
    %1627 = vmatpush1.msra.mxu0 0.0
    %1628 = vmatprep.subr.mxu0 0.0
    %1629 = vmatpush1.msra.mxu0 0.0
    %1630 = vmatprep.subr.mxu0 0.0
    %1631 = vmatpush1.msra.mxu0 0.0
    %1632 = vmatprep.mubr.f32.mxu0 0.0
    %1633 = vmatmul.mubr.f32.gmra.mrb[0].mxu0 %v1566
    %v1634 = vpop.f32.mrb[0].mxu0
    %v1635 = vadd.f32 %v53, %v1634
    %v1636 = vpop.f32.mrb[0].mxu0
    %v1637 = vadd.f32 %v57, %v1636
    %1638 = vdwg.mxu0
    %1639 = vmatprep.subr.mxu0 %v152
    %1640 = vmatpush1.msra.mxu0 %v151
    %1641 = vmatprep.subr.mxu0 %v154
    %1642 = vmatpush1.msra.mxu0 %v153
    %1643 = vmatprep.subr.mxu0 %v156
    %1644 = vmatpush1.msra.mxu0 %v155
    %1645 = vmatprep.subr.mxu0 %v158
    %1646 = vmatpush1.msra.mxu0 %v157
    %1647 = vmatprep.subr.mxu0 %v160
    %1648 = vmatpush1.msra.mxu0 %v159
    %1649 = vmatprep.subr.mxu0 %v162
    %1650 = vmatpush1.msra.mxu0 %v161
    %1651 = vmatprep.subr.mxu0 %v164
    %1652 = vmatpush1.msra.mxu0 %v163
    %1653 = vmatprep.subr.mxu0 %v166
    %1654 = vmatpush1.msra.mxu0 %v165
    %1655 = vmatprep.subr.mxu0 0.0
    %1656 = vmatpush1.msra.mxu0 0.0
    %1657 = vmatprep.subr.mxu0 0.0
    %1658 = vmatpush1.msra.mxu0 0.0
    %1659 = vmatprep.subr.mxu0 0.0
    %1660 = vmatpush1.msra.mxu0 0.0
    %1661 = vmatprep.subr.mxu0 0.0
    %1662 = vmatpush1.msra.mxu0 0.0
    %1663 = vmatprep.subr.mxu0 0.0
    %1664 = vmatpush1.msra.mxu0 0.0
    %1665 = vmatprep.subr.mxu0 0.0
    %1666 = vmatpush1.msra.mxu0 0.0
    %1667 = vmatprep.subr.mxu0 0.0
    %1668 = vmatpush1.msra.mxu0 0.0
    %1669 = vmatprep.subr.mxu0 0.0
    %1670 = vmatpush1.msra.mxu0 0.0
    %1671 = vmatprep.subr.mxu0 0.0
    %1672 = vmatpush1.msra.mxu0 0.0
    %1673 = vmatprep.subr.mxu0 0.0
    %1674 = vmatpush1.msra.mxu0 0.0
    %1675 = vmatprep.subr.mxu0 0.0
    %1676 = vmatpush1.msra.mxu0 0.0
    %1677 = vmatprep.subr.mxu0 0.0
    %1678 = vmatpush1.msra.mxu0 0.0
    %1679 = vmatprep.subr.mxu0 0.0
    %1680 = vmatpush1.msra.mxu0 0.0
    %1681 = vmatprep.subr.mxu0 0.0
    %1682 = vmatpush1.msra.mxu0 0.0
    %1683 = vmatprep.subr.mxu0 0.0
    %1684 = vmatpush1.msra.mxu0 0.0
    %1685 = vmatprep.subr.mxu0 0.0
    %1686 = vmatpush1.msra.mxu0 0.0
    %1687 = vmatprep.subr.mxu0 0.0
    %1688 = vmatpush1.msra.mxu0 0.0
    %1689 = vmatprep.subr.mxu0 0.0
    %1690 = vmatpush1.msra.mxu0 0.0
    %1691 = vmatprep.subr.mxu0 0.0
    %1692 = vmatpush1.msra.mxu0 0.0
    %1693 = vmatprep.subr.mxu0 0.0
    %1694 = vmatpush1.msra.mxu0 0.0
    %1695 = vmatprep.subr.mxu0 0.0
    %1696 = vmatpush1.msra.mxu0 0.0
    %1697 = vmatprep.subr.mxu0 0.0
    %1698 = vmatpush1.msra.mxu0 0.0
    %1699 = vmatprep.subr.mxu0 0.0
    %1700 = vmatpush1.msra.mxu0 0.0
    %1701 = vmatprep.subr.mxu0 0.0
    %1702 = vmatpush1.msra.mxu0 0.0
    %1703 = vmatprep.mubr.f32.mxu0 0.0
    %1704 = vmatmul.mubr.f32.gmra.mrb[0].mxu0 %v1384
    %v1705 = vpop.f32.mrb[0].mxu0
    %v1706 = vadd.f32 0.0, %v1705
    %v1707 = vpop.f32.mrb[0].mxu0
    %v1708 = vadd.f32 0.0, %v1707
    %1709 = vdwg.mxu0
    %v1710 = vadd.f32 %v1635, %v1706
    %v1711 = vadd.f32 %v1637, %v1708
    %v1712 = vxor.u32 %v1710, 2147483648
    %v1713 = vxor.u32 %v1711, 2147483648
    %v1714 = vmul.f32 %v1712, 1.442695
    %v1715 = vpow.pop %v1714
    %v1716 = vmul.f32 %v1713, 1.442695
    %v1717 = vpow.pop %v1716
    %v1718 = vadd.f32 %v1715, 1.0
    %v1719 = vadd.f32 %v1717, 1.0
    %v1720 = vrcp.pop %v1718
    %v1721 = vmul.f32 1.0, %v1720
    %v1722 = vrcp.pop %v1719
    %v1723 = vmul.f32 1.0, %v1722
    %v1724 = vtanh.pop %v1711
    %v1725 = vmul.f32 %v1721, %v1376
    %1727 = vrot.lane.b32.xlu0 %v1724, 64
    %v1728 = vpop.permute.xlu0 %1727
    %v1730 = vmul.f32 %v1721, %v1728
    %1732 = vrot.lane.b32.xlu0 %v1730, 64
    %v1733 = vpop.permute.xlu0 %1732
    %v1735 = vadd.f32 %v1725, %v1733
    %v1736 = vtanh.pop %v1735
    %1738 = vrot.lane.b32.xlu0 %v1736, 64
    %v1739 = vpop.permute.xlu0 %1738
    %v1741 = vmul.f32 %v1723, %v1739
    %v1743 = vsel %vm167, %v1741, 0
    %1745 = vmatprep.subr.mxu0 %v275
    %1746 = vmatpush1.msra.mxu0 %v274
    %1747 = vmatprep.subr.mxu0 %v277
    %1748 = vmatpush1.msra.mxu0 %v276
    %1749 = vmatprep.subr.mxu0 %v279
    %1750 = vmatpush1.msra.mxu0 %v278
    %1751 = vmatprep.subr.mxu0 %v281
    %1752 = vmatpush1.msra.mxu0 %v280
    %1753 = vmatprep.subr.mxu0 %v283
    %1754 = vmatpush1.msra.mxu0 %v282
    %1755 = vmatprep.subr.mxu0 %v285
    %1756 = vmatpush1.msra.mxu0 %v284
    %1757 = vmatprep.subr.mxu0 %v287
    %1758 = vmatpush1.msra.mxu0 %v286
    %1759 = vmatprep.subr.mxu0 %v289
    %1760 = vmatpush1.msra.mxu0 %v288
    %1761 = vmatprep.subr.mxu0 0.0
    %1762 = vmatpush1.msra.mxu0 0.0
    %1763 = vmatprep.subr.mxu0 0.0
    %1764 = vmatpush1.msra.mxu0 0.0
    %1765 = vmatprep.subr.mxu0 0.0
    %1766 = vmatpush1.msra.mxu0 0.0
    %1767 = vmatprep.subr.mxu0 0.0
    %1768 = vmatpush1.msra.mxu0 0.0
    %1769 = vmatprep.subr.mxu0 0.0
    %1770 = vmatpush1.msra.mxu0 0.0
    %1771 = vmatprep.subr.mxu0 0.0
    %1772 = vmatpush1.msra.mxu0 0.0
    %1773 = vmatprep.subr.mxu0 0.0
    %1774 = vmatpush1.msra.mxu0 0.0
    %1775 = vmatprep.subr.mxu0 0.0
    %1776 = vmatpush1.msra.mxu0 0.0
    %1777 = vmatprep.subr.mxu0 0.0
    %1778 = vmatpush1.msra.mxu0 0.0
    %1779 = vmatprep.subr.mxu0 0.0
    %1780 = vmatpush1.msra.mxu0 0.0
    %1781 = vmatprep.subr.mxu0 0.0
    %1782 = vmatpush1.msra.mxu0 0.0
    %1783 = vmatprep.subr.mxu0 0.0
    %1784 = vmatpush1.msra.mxu0 0.0
    %1785 = vmatprep.subr.mxu0 0.0
    %1786 = vmatpush1.msra.mxu0 0.0
    %1787 = vmatprep.subr.mxu0 0.0
    %1788 = vmatpush1.msra.mxu0 0.0
    %1789 = vmatprep.subr.mxu0 0.0
    %1790 = vmatpush1.msra.mxu0 0.0
    %1791 = vmatprep.subr.mxu0 0.0
    %1792 = vmatpush1.msra.mxu0 0.0
    %1793 = vmatprep.subr.mxu0 0.0
    %1794 = vmatpush1.msra.mxu0 0.0
    %1795 = vmatprep.subr.mxu0 0.0
    %1796 = vmatpush1.msra.mxu0 0.0
    %1797 = vmatprep.subr.mxu0 0.0
    %1798 = vmatpush1.msra.mxu0 0.0
    %1799 = vmatprep.subr.mxu0 0.0
    %1800 = vmatpush1.msra.mxu0 0.0
    %1801 = vmatprep.subr.mxu0 0.0
    %1802 = vmatpush1.msra.mxu0 0.0
    %1803 = vmatprep.subr.mxu0 0.0
    %1804 = vmatpush1.msra.mxu0 0.0
    %1805 = vmatprep.subr.mxu0 0.0
    %1806 = vmatpush1.msra.mxu0 0.0
    %1807 = vmatprep.subr.mxu0 0.0
    %1808 = vmatpush1.msra.mxu0 0.0
    %1809 = vmatprep.mubr.f32.mxu0 0.0
    %1810 = vmatmul.mubr.f32.gmra.mrb[0].mxu0 %v1743
    %v1811 = vpop.f32.mrb[0].mxu0
    %v1812 = vadd.f32 0.0, %v1811
    %v1813 = vpop.f32.mrb[0].mxu0
    %v1814 = vadd.f32 0.0, %v1813
    %1815 = vdwg.mxu0
    %v1816 = vadd.f32 %v1559, %v1812
    %v1817 = vadd.f32 %v1561, %v1814
    %v1818 = vxor.u32 %v1816, 2147483648
    %v1819 = vxor.u32 %v1817, 2147483648
    %v1820 = vmul.f32 %v1818, 1.442695
    %v1821 = vpow.pop %v1820
    %v1822 = vmul.f32 %v1819, 1.442695
    %v1823 = vpow.pop %v1822
    %v1824 = vadd.f32 %v1821, 1.0
    %v1825 = vadd.f32 %v1823, 1.0
    %v1826 = vrcp.pop %v1824
    %v1827 = vmul.f32 1.0, %v1826
    %v1828 = vrcp.pop %v1825
    %v1829 = vmul.f32 1.0, %v1828
    %v1830 = vtanh.pop %v1817
    %v1831 = vmul.f32 %v1827, %v1482
    %1833 = vrot.lane.b32.xlu0 %v1830, 64
    %v1834 = vpop.permute.xlu0 %1833
    %v1836 = vmul.f32 %v1827, %v1834
    %1838 = vrot.lane.b32.xlu0 %v1836, 64
    %v1839 = vpop.permute.xlu0 %1838
    %v1841 = vadd.f32 %v1831, %v1839
    %v1842 = vtanh.pop %v1841
    %1844 = vrot.lane.b32.xlu0 %v1842, 64
    %v1845 = vpop.permute.xlu0 %1844
    %v1847 = vmul.f32 %v1829, %v1845
    %v1849 = vsel %vm167, %v1847, 0
    %1851 = vmatprep.subr.mxu0 %v397
    %1852 = vmatpush1.msra.mxu0 %v396
    %1853 = vmatprep.subr.mxu0 %v399
    %1854 = vmatpush1.msra.mxu0 %v398
    %1855 = vmatprep.subr.mxu0 %v401
    %1856 = vmatpush1.msra.mxu0 %v400
    %1857 = vmatprep.subr.mxu0 %v403
    %1858 = vmatpush1.msra.mxu0 %v402
    %1859 = vmatprep.subr.mxu0 %v405
    %1860 = vmatpush1.msra.mxu0 %v404
    %1861 = vmatprep.subr.mxu0 %v407
    %1862 = vmatpush1.msra.mxu0 %v406
    %1863 = vmatprep.subr.mxu0 %v409
    %1864 = vmatpush1.msra.mxu0 %v408
    %1865 = vmatprep.subr.mxu0 %v411
    %1866 = vmatpush1.msra.mxu0 %v410
    %1867 = vmatprep.subr.mxu0 0.0
    %1868 = vmatpush1.msra.mxu0 0.0
    %1869 = vmatprep.subr.mxu0 0.0
    %1870 = vmatpush1.msra.mxu0 0.0
    %1871 = vmatprep.subr.mxu0 0.0
    %1872 = vmatpush1.msra.mxu0 0.0
    %1873 = vmatprep.subr.mxu0 0.0
    %1874 = vmatpush1.msra.mxu0 0.0
    %1875 = vmatprep.subr.mxu0 0.0
    %1876 = vmatpush1.msra.mxu0 0.0
    %1877 = vmatprep.subr.mxu0 0.0
    %1878 = vmatpush1.msra.mxu0 0.0
    %1879 = vmatprep.subr.mxu0 0.0
    %1880 = vmatpush1.msra.mxu0 0.0
    %1881 = vmatprep.subr.mxu0 0.0
    %1882 = vmatpush1.msra.mxu0 0.0
    %1883 = vmatprep.subr.mxu0 0.0
    %1884 = vmatpush1.msra.mxu0 0.0
    %1885 = vmatprep.subr.mxu0 0.0
    %1886 = vmatpush1.msra.mxu0 0.0
    %1887 = vmatprep.subr.mxu0 0.0
    %1888 = vmatpush1.msra.mxu0 0.0
    %1889 = vmatprep.subr.mxu0 0.0
    %1890 = vmatpush1.msra.mxu0 0.0
    %1891 = vmatprep.subr.mxu0 0.0
    %1892 = vmatpush1.msra.mxu0 0.0
    %1893 = vmatprep.subr.mxu0 0.0
    %1894 = vmatpush1.msra.mxu0 0.0
    %1895 = vmatprep.subr.mxu0 0.0
    %1896 = vmatpush1.msra.mxu0 0.0
    %1897 = vmatprep.subr.mxu0 0.0
    %1898 = vmatpush1.msra.mxu0 0.0
    %1899 = vmatprep.subr.mxu0 0.0
    %1900 = vmatpush1.msra.mxu0 0.0
    %1901 = vmatprep.subr.mxu0 0.0
    %1902 = vmatpush1.msra.mxu0 0.0
    %1903 = vmatprep.subr.mxu0 0.0
    %1904 = vmatpush1.msra.mxu0 0.0
    %1905 = vmatprep.subr.mxu0 0.0
    %1906 = vmatpush1.msra.mxu0 0.0
    %1907 = vmatprep.subr.mxu0 0.0
    %1908 = vmatpush1.msra.mxu0 0.0
    %1909 = vmatprep.subr.mxu0 0.0
    %1910 = vmatpush1.msra.mxu0 0.0
    %1911 = vmatprep.subr.mxu0 0.0
    %1912 = vmatpush1.msra.mxu0 0.0
    %1913 = vmatprep.subr.mxu0 0.0
    %1914 = vmatpush1.msra.mxu0 0.0
    %1915 = vmatprep.mubr.f32.mxu0 0.0
    %1916 = vmatmul.mubr.f32.gmra.mrb[0].mxu0 %v1849
    %v1917 = vpop.f32.mrb[0].mxu0
    %v1918 = vadd.f32 %v66, %v1917
    %v1919 = vpop.f32.mrb[0].mxu0
    %v1920 = vadd.f32 %v70, %v1919
    %1921 = vdwg.mxu0
    %s1922 = scalar_lea.vmem %s0, 40
    %v1923 = vld [vmem:[%s1922] sm:$0xff]
    %v1925 = vsel %vm76, %v1923, 0
    %1927 = vmatprep.subr.mxu0 %v75
    %1928 = vmatpush1.msra.mxu0 %v74
    %1929 = vmatprep.subr.mxu0 0.0
    %1930 = vmatpush1.msra.mxu0 0.0
    %1931 = vmatprep.subr.mxu0 0.0
    %1932 = vmatpush1.msra.mxu0 0.0
    %1933 = vmatprep.subr.mxu0 0.0
    %1934 = vmatpush1.msra.mxu0 0.0
    %1935 = vmatprep.subr.mxu0 0.0
    %1936 = vmatpush1.msra.mxu0 0.0
    %1937 = vmatprep.subr.mxu0 0.0
    %1938 = vmatpush1.msra.mxu0 0.0
    %1939 = vmatprep.subr.mxu0 0.0
    %1940 = vmatpush1.msra.mxu0 0.0
    %1941 = vmatprep.subr.mxu0 0.0
    %1942 = vmatpush1.msra.mxu0 0.0
    %1943 = vmatprep.subr.mxu0 0.0
    %1944 = vmatpush1.msra.mxu0 0.0
    %1945 = vmatprep.subr.mxu0 0.0
    %1946 = vmatpush1.msra.mxu0 0.0
    %1947 = vmatprep.subr.mxu0 0.0
    %1948 = vmatpush1.msra.mxu0 0.0
    %1949 = vmatprep.subr.mxu0 0.0
    %1950 = vmatpush1.msra.mxu0 0.0
    %1951 = vmatprep.subr.mxu0 0.0
    %1952 = vmatpush1.msra.mxu0 0.0
    %1953 = vmatprep.subr.mxu0 0.0
    %1954 = vmatpush1.msra.mxu0 0.0
    %1955 = vmatprep.subr.mxu0 0.0
    %1956 = vmatpush1.msra.mxu0 0.0
    %1957 = vmatprep.subr.mxu0 0.0
    %1958 = vmatpush1.msra.mxu0 0.0
    %1959 = vmatprep.subr.mxu0 0.0
    %1960 = vmatpush1.msra.mxu0 0.0
    %1961 = vmatprep.subr.mxu0 0.0
    %1962 = vmatpush1.msra.mxu0 0.0
    %1963 = vmatprep.subr.mxu0 0.0
    %1964 = vmatpush1.msra.mxu0 0.0
    %1965 = vmatprep.subr.mxu0 0.0
    %1966 = vmatpush1.msra.mxu0 0.0
    %1967 = vmatprep.subr.mxu0 0.0
    %1968 = vmatpush1.msra.mxu0 0.0
    %1969 = vmatprep.subr.mxu0 0.0
    %1970 = vmatpush1.msra.mxu0 0.0
    %1971 = vmatprep.subr.mxu0 0.0
    %1972 = vmatpush1.msra.mxu0 0.0
    %1973 = vmatprep.subr.mxu0 0.0
    %1974 = vmatpush1.msra.mxu0 0.0
    %1975 = vmatprep.subr.mxu0 0.0
    %1976 = vmatpush1.msra.mxu0 0.0
    %1977 = vmatprep.subr.mxu0 0.0
    %1978 = vmatpush1.msra.mxu0 0.0
    %1979 = vmatprep.subr.mxu0 0.0
    %1980 = vmatpush1.msra.mxu0 0.0
    %1981 = vmatprep.subr.mxu0 0.0
    %1982 = vmatpush1.msra.mxu0 0.0
    %1983 = vmatprep.subr.mxu0 0.0
    %1984 = vmatpush1.msra.mxu0 0.0
    %1985 = vmatprep.subr.mxu0 0.0
    %1986 = vmatpush1.msra.mxu0 0.0
    %1987 = vmatprep.subr.mxu0 0.0
    %1988 = vmatpush1.msra.mxu0 0.0
    %1989 = vmatprep.subr.mxu0 0.0
    %1990 = vmatpush1.msra.mxu0 0.0
    %1991 = vmatprep.mubr.f32.mxu0 0.0
    %1992 = vmatmul.mubr.f32.gmra.mrb[0].mxu0 %v1925
    %v1993 = vpop.f32.mrb[0].mxu0
    %v1994 = vadd.f32 %v53, %v1993
    %v1995 = vpop.f32.mrb[0].mxu0
    %v1996 = vadd.f32 %v57, %v1995
    %1997 = vdwg.mxu0
    %1998 = vmatprep.subr.mxu0 %v152
    %1999 = vmatpush1.msra.mxu0 %v151
    %2000 = vmatprep.subr.mxu0 %v154
    %2001 = vmatpush1.msra.mxu0 %v153
    %2002 = vmatprep.subr.mxu0 %v156
    %2003 = vmatpush1.msra.mxu0 %v155
    %2004 = vmatprep.subr.mxu0 %v158
    %2005 = vmatpush1.msra.mxu0 %v157
    %2006 = vmatprep.subr.mxu0 %v160
    %2007 = vmatpush1.msra.mxu0 %v159
    %2008 = vmatprep.subr.mxu0 %v162
    %2009 = vmatpush1.msra.mxu0 %v161
    %2010 = vmatprep.subr.mxu0 %v164
    %2011 = vmatpush1.msra.mxu0 %v163
    %2012 = vmatprep.subr.mxu0 %v166
    %2013 = vmatpush1.msra.mxu0 %v165
    %2014 = vmatprep.subr.mxu0 0.0
    %2015 = vmatpush1.msra.mxu0 0.0
    %2016 = vmatprep.subr.mxu0 0.0
    %2017 = vmatpush1.msra.mxu0 0.0
    %2018 = vmatprep.subr.mxu0 0.0
    %2019 = vmatpush1.msra.mxu0 0.0
    %2020 = vmatprep.subr.mxu0 0.0
    %2021 = vmatpush1.msra.mxu0 0.0
    %2022 = vmatprep.subr.mxu0 0.0
    %2023 = vmatpush1.msra.mxu0 0.0
    %2024 = vmatprep.subr.mxu0 0.0
    %2025 = vmatpush1.msra.mxu0 0.0
    %2026 = vmatprep.subr.mxu0 0.0
    %2027 = vmatpush1.msra.mxu0 0.0
    %2028 = vmatprep.subr.mxu0 0.0
    %2029 = vmatpush1.msra.mxu0 0.0
    %2030 = vmatprep.subr.mxu0 0.0
    %2031 = vmatpush1.msra.mxu0 0.0
    %2032 = vmatprep.subr.mxu0 0.0
    %2033 = vmatpush1.msra.mxu0 0.0
    %2034 = vmatprep.subr.mxu0 0.0
    %2035 = vmatpush1.msra.mxu0 0.0
    %2036 = vmatprep.subr.mxu0 0.0
    %2037 = vmatpush1.msra.mxu0 0.0
    %2038 = vmatprep.subr.mxu0 0.0
    %2039 = vmatpush1.msra.mxu0 0.0
    %2040 = vmatprep.subr.mxu0 0.0
    %2041 = vmatpush1.msra.mxu0 0.0
    %2042 = vmatprep.subr.mxu0 0.0
    %2043 = vmatpush1.msra.mxu0 0.0
    %2044 = vmatprep.subr.mxu0 0.0
    %2045 = vmatpush1.msra.mxu0 0.0
    %2046 = vmatprep.subr.mxu0 0.0
    %2047 = vmatpush1.msra.mxu0 0.0
    %2048 = vmatprep.subr.mxu0 0.0
    %2049 = vmatpush1.msra.mxu0 0.0
    %2050 = vmatprep.subr.mxu0 0.0
    %2051 = vmatpush1.msra.mxu0 0.0
    %2052 = vmatprep.subr.mxu0 0.0
    %2053 = vmatpush1.msra.mxu0 0.0
    %2054 = vmatprep.subr.mxu0 0.0
    %2055 = vmatpush1.msra.mxu0 0.0
    %2056 = vmatprep.subr.mxu0 0.0
    %2057 = vmatpush1.msra.mxu0 0.0
    %2058 = vmatprep.subr.mxu0 0.0
    %2059 = vmatpush1.msra.mxu0 0.0
    %2060 = vmatprep.subr.mxu0 0.0
    %2061 = vmatpush1.msra.mxu0 0.0
    %2062 = vmatprep.mubr.f32.mxu0 0.0
    %2063 = vmatmul.mubr.f32.gmra.mrb[0].mxu0 %v1743
    %v2064 = vpop.f32.mrb[0].mxu0
    %v2065 = vadd.f32 0.0, %v2064
    %v2066 = vpop.f32.mrb[0].mxu0
    %v2067 = vadd.f32 0.0, %v2066
    %2068 = vdwg.mxu0
    %v2069 = vadd.f32 %v1994, %v2065
    %v2070 = vadd.f32 %v1996, %v2067
    %v2071 = vxor.u32 %v2069, 2147483648
    %v2072 = vxor.u32 %v2070, 2147483648
    %v2073 = vmul.f32 %v2071, 1.442695
    %v2074 = vpow.pop %v2073
    %v2075 = vmul.f32 %v2072, 1.442695
    %v2076 = vpow.pop %v2075
    %v2077 = vadd.f32 %v2074, 1.0
    %v2078 = vadd.f32 %v2076, 1.0
    %v2079 = vrcp.pop %v2077
    %v2080 = vmul.f32 1.0, %v2079
    %v2081 = vrcp.pop %v2078
    %v2082 = vmul.f32 1.0, %v2081
    %v2083 = vtanh.pop %v2070
    %v2084 = vmul.f32 %v2080, %v1735
    %2086 = vrot.lane.b32.xlu0 %v2083, 64
    %v2087 = vpop.permute.xlu0 %2086
    %v2089 = vmul.f32 %v2080, %v2087
    %2091 = vrot.lane.b32.xlu0 %v2089, 64
    %v2092 = vpop.permute.xlu0 %2091
    %v2094 = vadd.f32 %v2084, %v2092
    %v2095 = vtanh.pop %v2094
    %2097 = vrot.lane.b32.xlu0 %v2095, 64
    %v2098 = vpop.permute.xlu0 %2097
    %v2100 = vmul.f32 %v2082, %v2098
    %v2102 = vsel %vm167, %v2100, 0
    %2104 = vmatprep.subr.mxu0 %v275
    %2105 = vmatpush1.msra.mxu0 %v274
    %2106 = vmatprep.subr.mxu0 %v277
    %2107 = vmatpush1.msra.mxu0 %v276
    %2108 = vmatprep.subr.mxu0 %v279
    %2109 = vmatpush1.msra.mxu0 %v278
    %2110 = vmatprep.subr.mxu0 %v281
    %2111 = vmatpush1.msra.mxu0 %v280
    %2112 = vmatprep.subr.mxu0 %v283
    %2113 = vmatpush1.msra.mxu0 %v282
    %2114 = vmatprep.subr.mxu0 %v285
    %2115 = vmatpush1.msra.mxu0 %v284
    %2116 = vmatprep.subr.mxu0 %v287
    %2117 = vmatpush1.msra.mxu0 %v286
    %2118 = vmatprep.subr.mxu0 %v289
    %2119 = vmatpush1.msra.mxu0 %v288
    %2120 = vmatprep.subr.mxu0 0.0
    %2121 = vmatpush1.msra.mxu0 0.0
    %2122 = vmatprep.subr.mxu0 0.0
    %2123 = vmatpush1.msra.mxu0 0.0
    %2124 = vmatprep.subr.mxu0 0.0
    %2125 = vmatpush1.msra.mxu0 0.0
    %2126 = vmatprep.subr.mxu0 0.0
    %2127 = vmatpush1.msra.mxu0 0.0
    %2128 = vmatprep.subr.mxu0 0.0
    %2129 = vmatpush1.msra.mxu0 0.0
    %2130 = vmatprep.subr.mxu0 0.0
    %2131 = vmatpush1.msra.mxu0 0.0
    %2132 = vmatprep.subr.mxu0 0.0
    %2133 = vmatpush1.msra.mxu0 0.0
    %2134 = vmatprep.subr.mxu0 0.0
    %2135 = vmatpush1.msra.mxu0 0.0
    %2136 = vmatprep.subr.mxu0 0.0
    %2137 = vmatpush1.msra.mxu0 0.0
    %2138 = vmatprep.subr.mxu0 0.0
    %2139 = vmatpush1.msra.mxu0 0.0
    %2140 = vmatprep.subr.mxu0 0.0
    %2141 = vmatpush1.msra.mxu0 0.0
    %2142 = vmatprep.subr.mxu0 0.0
    %2143 = vmatpush1.msra.mxu0 0.0
    %2144 = vmatprep.subr.mxu0 0.0
    %2145 = vmatpush1.msra.mxu0 0.0
    %2146 = vmatprep.subr.mxu0 0.0
    %2147 = vmatpush1.msra.mxu0 0.0
    %2148 = vmatprep.subr.mxu0 0.0
    %2149 = vmatpush1.msra.mxu0 0.0
    %2150 = vmatprep.subr.mxu0 0.0
    %2151 = vmatpush1.msra.mxu0 0.0
    %2152 = vmatprep.subr.mxu0 0.0
    %2153 = vmatpush1.msra.mxu0 0.0
    %2154 = vmatprep.subr.mxu0 0.0
    %2155 = vmatpush1.msra.mxu0 0.0
    %2156 = vmatprep.subr.mxu0 0.0
    %2157 = vmatpush1.msra.mxu0 0.0
    %2158 = vmatprep.subr.mxu0 0.0
    %2159 = vmatpush1.msra.mxu0 0.0
    %2160 = vmatprep.subr.mxu0 0.0
    %2161 = vmatpush1.msra.mxu0 0.0
    %2162 = vmatprep.subr.mxu0 0.0
    %2163 = vmatpush1.msra.mxu0 0.0
    %2164 = vmatprep.subr.mxu0 0.0
    %2165 = vmatpush1.msra.mxu0 0.0
    %2166 = vmatprep.subr.mxu0 0.0
    %2167 = vmatpush1.msra.mxu0 0.0
    %2168 = vmatprep.mubr.f32.mxu0 0.0
    %2169 = vmatmul.mubr.f32.gmra.mrb[0].mxu0 %v2102
    %v2170 = vpop.f32.mrb[0].mxu0
    %v2171 = vadd.f32 0.0, %v2170
    %v2172 = vpop.f32.mrb[0].mxu0
    %v2173 = vadd.f32 0.0, %v2172
    %2174 = vdwg.mxu0
    %v2175 = vadd.f32 %v1918, %v2171
    %v2176 = vadd.f32 %v1920, %v2173
    %v2177 = vxor.u32 %v2175, 2147483648
    %v2178 = vxor.u32 %v2176, 2147483648
    %v2179 = vmul.f32 %v2177, 1.442695
    %v2180 = vpow.pop %v2179
    %v2181 = vmul.f32 %v2178, 1.442695
    %v2182 = vpow.pop %v2181
    %v2183 = vadd.f32 %v2180, 1.0
    %v2184 = vadd.f32 %v2182, 1.0
    %v2185 = vrcp.pop %v2183
    %v2186 = vmul.f32 1.0, %v2185
    %v2187 = vrcp.pop %v2184
    %v2188 = vmul.f32 1.0, %v2187
    %v2189 = vtanh.pop %v2176
    %v2190 = vmul.f32 %v2186, %v1841
    %2192 = vrot.lane.b32.xlu0 %v2189, 64
    %v2193 = vpop.permute.xlu0 %2192
    %v2195 = vmul.f32 %v2186, %v2193
    %2197 = vrot.lane.b32.xlu0 %v2195, 64
    %v2198 = vpop.permute.xlu0 %2197
    %v2200 = vadd.f32 %v2190, %v2198
    %v2201 = vtanh.pop %v2200
    %2203 = vrot.lane.b32.xlu0 %v2201, 64
    %v2204 = vpop.permute.xlu0 %2203
    %v2206 = vmul.f32 %v2188, %v2204
    %v2208 = vsel %vm167, %v2206, 0
    %2210 = vmatprep.subr.mxu0 %v397
    %2211 = vmatpush1.msra.mxu0 %v396
    %2212 = vmatprep.subr.mxu0 %v399
    %2213 = vmatpush1.msra.mxu0 %v398
    %2214 = vmatprep.subr.mxu0 %v401
    %2215 = vmatpush1.msra.mxu0 %v400
    %2216 = vmatprep.subr.mxu0 %v403
    %2217 = vmatpush1.msra.mxu0 %v402
    %2218 = vmatprep.subr.mxu0 %v405
    %2219 = vmatpush1.msra.mxu0 %v404
    %2220 = vmatprep.subr.mxu0 %v407
    %2221 = vmatpush1.msra.mxu0 %v406
    %2222 = vmatprep.subr.mxu0 %v409
    %2223 = vmatpush1.msra.mxu0 %v408
    %2224 = vmatprep.subr.mxu0 %v411
    %2225 = vmatpush1.msra.mxu0 %v410
    %2226 = vmatprep.subr.mxu0 0.0
    %2227 = vmatpush1.msra.mxu0 0.0
    %2228 = vmatprep.subr.mxu0 0.0
    %2229 = vmatpush1.msra.mxu0 0.0
    %2230 = vmatprep.subr.mxu0 0.0
    %2231 = vmatpush1.msra.mxu0 0.0
    %2232 = vmatprep.subr.mxu0 0.0
    %2233 = vmatpush1.msra.mxu0 0.0
    %2234 = vmatprep.subr.mxu0 0.0
    %2235 = vmatpush1.msra.mxu0 0.0
    %2236 = vmatprep.subr.mxu0 0.0
    %2237 = vmatpush1.msra.mxu0 0.0
    %2238 = vmatprep.subr.mxu0 0.0
    %2239 = vmatpush1.msra.mxu0 0.0
    %2240 = vmatprep.subr.mxu0 0.0
    %2241 = vmatpush1.msra.mxu0 0.0
    %2242 = vmatprep.subr.mxu0 0.0
    %2243 = vmatpush1.msra.mxu0 0.0
    %2244 = vmatprep.subr.mxu0 0.0
    %2245 = vmatpush1.msra.mxu0 0.0
    %2246 = vmatprep.subr.mxu0 0.0
    %2247 = vmatpush1.msra.mxu0 0.0
    %2248 = vmatprep.subr.mxu0 0.0
    %2249 = vmatpush1.msra.mxu0 0.0
    %2250 = vmatprep.subr.mxu0 0.0
    %2251 = vmatpush1.msra.mxu0 0.0
    %2252 = vmatprep.subr.mxu0 0.0
    %2253 = vmatpush1.msra.mxu0 0.0
    %2254 = vmatprep.subr.mxu0 0.0
    %2255 = vmatpush1.msra.mxu0 0.0
    %2256 = vmatprep.subr.mxu0 0.0
    %2257 = vmatpush1.msra.mxu0 0.0
    %2258 = vmatprep.subr.mxu0 0.0
    %2259 = vmatpush1.msra.mxu0 0.0
    %2260 = vmatprep.subr.mxu0 0.0
    %2261 = vmatpush1.msra.mxu0 0.0
    %2262 = vmatprep.subr.mxu0 0.0
    %2263 = vmatpush1.msra.mxu0 0.0
    %2264 = vmatprep.subr.mxu0 0.0
    %2265 = vmatpush1.msra.mxu0 0.0
    %2266 = vmatprep.subr.mxu0 0.0
    %2267 = vmatpush1.msra.mxu0 0.0
    %2268 = vmatprep.subr.mxu0 0.0
    %2269 = vmatpush1.msra.mxu0 0.0
    %2270 = vmatprep.subr.mxu0 0.0
    %2271 = vmatpush1.msra.mxu0 0.0
    %2272 = vmatprep.subr.mxu0 0.0
    %2273 = vmatpush1.msra.mxu0 0.0
    %2274 = vmatprep.mubr.f32.mxu0 0.0
    %2275 = vmatmul.mubr.f32.gmra.mrb[0].mxu0 %v2208
    %v2276 = vpop.f32.mrb[0].mxu0
    %v2277 = vadd.f32 %v66, %v2276
    %v2278 = vpop.f32.mrb[0].mxu0
    %v2279 = vadd.f32 %v70, %v2278
    %2280 = vdwg.mxu0
    %s2281 = scalar_lea.vmem %s0, 48
    %v2282 = vld [vmem:[%s2281] sm:$0xff]
    %v2284 = vsel %vm76, %v2282, 0
    %2286 = vmatprep.subr.mxu0 %v75
    %2287 = vmatpush1.msra.mxu0 %v74
    %2288 = vmatprep.subr.mxu0 0.0
    %2289 = vmatpush1.msra.mxu0 0.0
    %2290 = vmatprep.subr.mxu0 0.0
    %2291 = vmatpush1.msra.mxu0 0.0
    %2292 = vmatprep.subr.mxu0 0.0
    %2293 = vmatpush1.msra.mxu0 0.0
    %2294 = vmatprep.subr.mxu0 0.0
    %2295 = vmatpush1.msra.mxu0 0.0
    %2296 = vmatprep.subr.mxu0 0.0
    %2297 = vmatpush1.msra.mxu0 0.0
    %2298 = vmatprep.subr.mxu0 0.0
    %2299 = vmatpush1.msra.mxu0 0.0
    %2300 = vmatprep.subr.mxu0 0.0
    %2301 = vmatpush1.msra.mxu0 0.0
    %2302 = vmatprep.subr.mxu0 0.0
    %2303 = vmatpush1.msra.mxu0 0.0
    %2304 = vmatprep.subr.mxu0 0.0
    %2305 = vmatpush1.msra.mxu0 0.0
    %2306 = vmatprep.subr.mxu0 0.0
    %2307 = vmatpush1.msra.mxu0 0.0
    %2308 = vmatprep.subr.mxu0 0.0
    %2309 = vmatpush1.msra.mxu0 0.0
    %2310 = vmatprep.subr.mxu0 0.0
    %2311 = vmatpush1.msra.mxu0 0.0
    %2312 = vmatprep.subr.mxu0 0.0
    %2313 = vmatpush1.msra.mxu0 0.0
    %2314 = vmatprep.subr.mxu0 0.0
    %2315 = vmatpush1.msra.mxu0 0.0
    %2316 = vmatprep.subr.mxu0 0.0
    %2317 = vmatpush1.msra.mxu0 0.0
    %2318 = vmatprep.subr.mxu0 0.0
    %2319 = vmatpush1.msra.mxu0 0.0
    %2320 = vmatprep.subr.mxu0 0.0
    %2321 = vmatpush1.msra.mxu0 0.0
    %2322 = vmatprep.subr.mxu0 0.0
    %2323 = vmatpush1.msra.mxu0 0.0
    %2324 = vmatprep.subr.mxu0 0.0
    %2325 = vmatpush1.msra.mxu0 0.0
    %2326 = vmatprep.subr.mxu0 0.0
    %2327 = vmatpush1.msra.mxu0 0.0
    %2328 = vmatprep.subr.mxu0 0.0
    %2329 = vmatpush1.msra.mxu0 0.0
    %2330 = vmatprep.subr.mxu0 0.0
    %2331 = vmatpush1.msra.mxu0 0.0
    %2332 = vmatprep.subr.mxu0 0.0
    %2333 = vmatpush1.msra.mxu0 0.0
    %2334 = vmatprep.subr.mxu0 0.0
    %2335 = vmatpush1.msra.mxu0 0.0
    %2336 = vmatprep.subr.mxu0 0.0
    %2337 = vmatpush1.msra.mxu0 0.0
    %2338 = vmatprep.subr.mxu0 0.0
    %2339 = vmatpush1.msra.mxu0 0.0
    %2340 = vmatprep.subr.mxu0 0.0
    %2341 = vmatpush1.msra.mxu0 0.0
    %2342 = vmatprep.subr.mxu0 0.0
    %2343 = vmatpush1.msra.mxu0 0.0
    %2344 = vmatprep.subr.mxu0 0.0
    %2345 = vmatpush1.msra.mxu0 0.0
    %2346 = vmatprep.subr.mxu0 0.0
    %2347 = vmatpush1.msra.mxu0 0.0
    %2348 = vmatprep.subr.mxu0 0.0
    %2349 = vmatpush1.msra.mxu0 0.0
    %2350 = vmatprep.mubr.f32.mxu0 0.0
    %2351 = vmatmul.mubr.f32.gmra.mrb[0].mxu0 %v2284
    %v2352 = vpop.f32.mrb[0].mxu0
    %v2353 = vadd.f32 %v53, %v2352
    %v2354 = vpop.f32.mrb[0].mxu0
    %v2355 = vadd.f32 %v57, %v2354
    %2356 = vdwg.mxu0
    %2357 = vmatprep.subr.mxu0 %v152
    %2358 = vmatpush1.msra.mxu0 %v151
    %2359 = vmatprep.subr.mxu0 %v154
    %2360 = vmatpush1.msra.mxu0 %v153
    %2361 = vmatprep.subr.mxu0 %v156
    %2362 = vmatpush1.msra.mxu0 %v155
    %2363 = vmatprep.subr.mxu0 %v158
    %2364 = vmatpush1.msra.mxu0 %v157
    %2365 = vmatprep.subr.mxu0 %v160
    %2366 = vmatpush1.msra.mxu0 %v159
    %2367 = vmatprep.subr.mxu0 %v162
    %2368 = vmatpush1.msra.mxu0 %v161
    %2369 = vmatprep.subr.mxu0 %v164
    %2370 = vmatpush1.msra.mxu0 %v163
    %2371 = vmatprep.subr.mxu0 %v166
    %2372 = vmatpush1.msra.mxu0 %v165
    %2373 = vmatprep.subr.mxu0 0.0
    %2374 = vmatpush1.msra.mxu0 0.0
    %2375 = vmatprep.subr.mxu0 0.0
    %2376 = vmatpush1.msra.mxu0 0.0
    %2377 = vmatprep.subr.mxu0 0.0
    %2378 = vmatpush1.msra.mxu0 0.0
    %2379 = vmatprep.subr.mxu0 0.0
    %2380 = vmatpush1.msra.mxu0 0.0
    %2381 = vmatprep.subr.mxu0 0.0
    %2382 = vmatpush1.msra.mxu0 0.0
    %2383 = vmatprep.subr.mxu0 0.0
    %2384 = vmatpush1.msra.mxu0 0.0
    %2385 = vmatprep.subr.mxu0 0.0
    %2386 = vmatpush1.msra.mxu0 0.0
    %2387 = vmatprep.subr.mxu0 0.0
    %2388 = vmatpush1.msra.mxu0 0.0
    %2389 = vmatprep.subr.mxu0 0.0
    %2390 = vmatpush1.msra.mxu0 0.0
    %2391 = vmatprep.subr.mxu0 0.0
    %2392 = vmatpush1.msra.mxu0 0.0
    %2393 = vmatprep.subr.mxu0 0.0
    %2394 = vmatpush1.msra.mxu0 0.0
    %2395 = vmatprep.subr.mxu0 0.0
    %2396 = vmatpush1.msra.mxu0 0.0
    %2397 = vmatprep.subr.mxu0 0.0
    %2398 = vmatpush1.msra.mxu0 0.0
    %2399 = vmatprep.subr.mxu0 0.0
    %2400 = vmatpush1.msra.mxu0 0.0
    %2401 = vmatprep.subr.mxu0 0.0
    %2402 = vmatpush1.msra.mxu0 0.0
    %2403 = vmatprep.subr.mxu0 0.0
    %2404 = vmatpush1.msra.mxu0 0.0
    %2405 = vmatprep.subr.mxu0 0.0
    %2406 = vmatpush1.msra.mxu0 0.0
    %2407 = vmatprep.subr.mxu0 0.0
    %2408 = vmatpush1.msra.mxu0 0.0
    %2409 = vmatprep.subr.mxu0 0.0
    %2410 = vmatpush1.msra.mxu0 0.0
    %2411 = vmatprep.subr.mxu0 0.0
    %2412 = vmatpush1.msra.mxu0 0.0
    %2413 = vmatprep.subr.mxu0 0.0
    %2414 = vmatpush1.msra.mxu0 0.0
    %2415 = vmatprep.subr.mxu0 0.0
    %2416 = vmatpush1.msra.mxu0 0.0
    %2417 = vmatprep.subr.mxu0 0.0
    %2418 = vmatpush1.msra.mxu0 0.0
    %2419 = vmatprep.subr.mxu0 0.0
    %2420 = vmatpush1.msra.mxu0 0.0
    %2421 = vmatprep.mubr.f32.mxu0 0.0
    %2422 = vmatmul.mubr.f32.gmra.mrb[0].mxu0 %v2102
    %v2423 = vpop.f32.mrb[0].mxu0
    %v2424 = vadd.f32 0.0, %v2423
    %v2425 = vpop.f32.mrb[0].mxu0
    %v2426 = vadd.f32 0.0, %v2425
    %2427 = vdwg.mxu0
    %v2428 = vadd.f32 %v2353, %v2424
    %v2429 = vadd.f32 %v2355, %v2426
    %v2430 = vxor.u32 %v2428, 2147483648
    %v2431 = vxor.u32 %v2429, 2147483648
    %v2432 = vmul.f32 %v2430, 1.442695
    %v2433 = vpow.pop %v2432
    %v2434 = vmul.f32 %v2431, 1.442695
    %v2435 = vpow.pop %v2434
    %v2436 = vadd.f32 %v2433, 1.0
    %v2437 = vadd.f32 %v2435, 1.0
    %v2438 = vrcp.pop %v2436
    %v2439 = vmul.f32 1.0, %v2438
    %v2440 = vrcp.pop %v2437
    %v2441 = vmul.f32 1.0, %v2440
    %v2442 = vtanh.pop %v2429
    %v2443 = vmul.f32 %v2439, %v2094
    %2445 = vrot.lane.b32.xlu0 %v2442, 64
    %v2446 = vpop.permute.xlu0 %2445
    %v2448 = vmul.f32 %v2439, %v2446
    %2450 = vrot.lane.b32.xlu0 %v2448, 64
    %v2451 = vpop.permute.xlu0 %2450
    %v2453 = vadd.f32 %v2443, %v2451
    %v2454 = vtanh.pop %v2453
    %2456 = vrot.lane.b32.xlu0 %v2454, 64
    %v2457 = vpop.permute.xlu0 %2456
    %v2459 = vmul.f32 %v2441, %v2457
    %v2461 = vsel %vm167, %v2459, 0
    %2463 = vmatprep.subr.mxu0 %v275
    %2464 = vmatpush1.msra.mxu0 %v274
    %2465 = vmatprep.subr.mxu0 %v277
    %2466 = vmatpush1.msra.mxu0 %v276
    %2467 = vmatprep.subr.mxu0 %v279
    %2468 = vmatpush1.msra.mxu0 %v278
    %2469 = vmatprep.subr.mxu0 %v281
    %2470 = vmatpush1.msra.mxu0 %v280
    %2471 = vmatprep.subr.mxu0 %v283
    %2472 = vmatpush1.msra.mxu0 %v282
    %2473 = vmatprep.subr.mxu0 %v285
    %2474 = vmatpush1.msra.mxu0 %v284
    %2475 = vmatprep.subr.mxu0 %v287
    %2476 = vmatpush1.msra.mxu0 %v286
    %2477 = vmatprep.subr.mxu0 %v289
    %2478 = vmatpush1.msra.mxu0 %v288
    %2479 = vmatprep.subr.mxu0 0.0
    %2480 = vmatpush1.msra.mxu0 0.0
    %2481 = vmatprep.subr.mxu0 0.0
    %2482 = vmatpush1.msra.mxu0 0.0
    %2483 = vmatprep.subr.mxu0 0.0
    %2484 = vmatpush1.msra.mxu0 0.0
    %2485 = vmatprep.subr.mxu0 0.0
    %2486 = vmatpush1.msra.mxu0 0.0
    %2487 = vmatprep.subr.mxu0 0.0
    %2488 = vmatpush1.msra.mxu0 0.0
    %2489 = vmatprep.subr.mxu0 0.0
    %2490 = vmatpush1.msra.mxu0 0.0
    %2491 = vmatprep.subr.mxu0 0.0
    %2492 = vmatpush1.msra.mxu0 0.0
    %2493 = vmatprep.subr.mxu0 0.0
    %2494 = vmatpush1.msra.mxu0 0.0
    %2495 = vmatprep.subr.mxu0 0.0
    %2496 = vmatpush1.msra.mxu0 0.0
    %2497 = vmatprep.subr.mxu0 0.0
    %2498 = vmatpush1.msra.mxu0 0.0
    %2499 = vmatprep.subr.mxu0 0.0
    %2500 = vmatpush1.msra.mxu0 0.0
    %2501 = vmatprep.subr.mxu0 0.0
    %2502 = vmatpush1.msra.mxu0 0.0
    %2503 = vmatprep.subr.mxu0 0.0
    %2504 = vmatpush1.msra.mxu0 0.0
    %2505 = vmatprep.subr.mxu0 0.0
    %2506 = vmatpush1.msra.mxu0 0.0
    %2507 = vmatprep.subr.mxu0 0.0
    %2508 = vmatpush1.msra.mxu0 0.0
    %2509 = vmatprep.subr.mxu0 0.0
    %2510 = vmatpush1.msra.mxu0 0.0
    %2511 = vmatprep.subr.mxu0 0.0
    %2512 = vmatpush1.msra.mxu0 0.0
    %2513 = vmatprep.subr.mxu0 0.0
    %2514 = vmatpush1.msra.mxu0 0.0
    %2515 = vmatprep.subr.mxu0 0.0
    %2516 = vmatpush1.msra.mxu0 0.0
    %2517 = vmatprep.subr.mxu0 0.0
    %2518 = vmatpush1.msra.mxu0 0.0
    %2519 = vmatprep.subr.mxu0 0.0
    %2520 = vmatpush1.msra.mxu0 0.0
    %2521 = vmatprep.subr.mxu0 0.0
    %2522 = vmatpush1.msra.mxu0 0.0
    %2523 = vmatprep.subr.mxu0 0.0
    %2524 = vmatpush1.msra.mxu0 0.0
    %2525 = vmatprep.subr.mxu0 0.0
    %2526 = vmatpush1.msra.mxu0 0.0
    %2527 = vmatprep.mubr.f32.mxu0 0.0
    %2528 = vmatmul.mubr.f32.gmra.mrb[0].mxu0 %v2461
    %v2529 = vpop.f32.mrb[0].mxu0
    %v2530 = vadd.f32 0.0, %v2529
    %v2531 = vpop.f32.mrb[0].mxu0
    %v2532 = vadd.f32 0.0, %v2531
    %2533 = vdwg.mxu0
    %v2534 = vadd.f32 %v2277, %v2530
    %v2535 = vadd.f32 %v2279, %v2532
    %v2536 = vxor.u32 %v2534, 2147483648
    %v2537 = vxor.u32 %v2535, 2147483648
    %v2538 = vmul.f32 %v2536, 1.442695
    %v2539 = vpow.pop %v2538
    %v2540 = vmul.f32 %v2537, 1.442695
    %v2541 = vpow.pop %v2540
    %v2542 = vadd.f32 %v2539, 1.0
    %v2543 = vadd.f32 %v2541, 1.0
    %v2544 = vrcp.pop %v2542
    %v2545 = vmul.f32 1.0, %v2544
    %v2546 = vrcp.pop %v2543
    %v2547 = vmul.f32 1.0, %v2546
    %v2548 = vtanh.pop %v2535
    %v2549 = vmul.f32 %v2545, %v2200
    %2551 = vrot.lane.b32.xlu0 %v2548, 64
    %v2552 = vpop.permute.xlu0 %2551
    %v2554 = vmul.f32 %v2545, %v2552
    %2556 = vrot.lane.b32.xlu0 %v2554, 64
    %v2557 = vpop.permute.xlu0 %2556
    %v2559 = vadd.f32 %v2549, %v2557
    %v2560 = vtanh.pop %v2559
    %2562 = vrot.lane.b32.xlu0 %v2560, 64
    %v2563 = vpop.permute.xlu0 %2562
    %v2565 = vmul.f32 %v2547, %v2563
    %v2567 = vsel %vm167, %v2565, 0
    %2569 = vmatprep.subr.mxu0 %v397
    %2570 = vmatpush1.msra.mxu0 %v396
    %2571 = vmatprep.subr.mxu0 %v399
    %2572 = vmatpush1.msra.mxu0 %v398
    %2573 = vmatprep.subr.mxu0 %v401
    %2574 = vmatpush1.msra.mxu0 %v400
    %2575 = vmatprep.subr.mxu0 %v403
    %2576 = vmatpush1.msra.mxu0 %v402
    %2577 = vmatprep.subr.mxu0 %v405
    %2578 = vmatpush1.msra.mxu0 %v404
    %2579 = vmatprep.subr.mxu0 %v407
    %2580 = vmatpush1.msra.mxu0 %v406
    %2581 = vmatprep.subr.mxu0 %v409
    %2582 = vmatpush1.msra.mxu0 %v408
    %2583 = vmatprep.subr.mxu0 %v411
    %2584 = vmatpush1.msra.mxu0 %v410
    %2585 = vmatprep.subr.mxu0 0.0
    %2586 = vmatpush1.msra.mxu0 0.0
    %2587 = vmatprep.subr.mxu0 0.0
    %2588 = vmatpush1.msra.mxu0 0.0
    %2589 = vmatprep.subr.mxu0 0.0
    %2590 = vmatpush1.msra.mxu0 0.0
    %2591 = vmatprep.subr.mxu0 0.0
    %2592 = vmatpush1.msra.mxu0 0.0
    %2593 = vmatprep.subr.mxu0 0.0
    %2594 = vmatpush1.msra.mxu0 0.0
    %2595 = vmatprep.subr.mxu0 0.0
    %2596 = vmatpush1.msra.mxu0 0.0
    %2597 = vmatprep.subr.mxu0 0.0
    %2598 = vmatpush1.msra.mxu0 0.0
    %2599 = vmatprep.subr.mxu0 0.0
    %2600 = vmatpush1.msra.mxu0 0.0
    %2601 = vmatprep.subr.mxu0 0.0
    %2602 = vmatpush1.msra.mxu0 0.0
    %2603 = vmatprep.subr.mxu0 0.0
    %2604 = vmatpush1.msra.mxu0 0.0
    %2605 = vmatprep.subr.mxu0 0.0
    %2606 = vmatpush1.msra.mxu0 0.0
    %2607 = vmatprep.subr.mxu0 0.0
    %2608 = vmatpush1.msra.mxu0 0.0
    %2609 = vmatprep.subr.mxu0 0.0
    %2610 = vmatpush1.msra.mxu0 0.0
    %2611 = vmatprep.subr.mxu0 0.0
    %2612 = vmatpush1.msra.mxu0 0.0
    %2613 = vmatprep.subr.mxu0 0.0
    %2614 = vmatpush1.msra.mxu0 0.0
    %2615 = vmatprep.subr.mxu0 0.0
    %2616 = vmatpush1.msra.mxu0 0.0
    %2617 = vmatprep.subr.mxu0 0.0
    %2618 = vmatpush1.msra.mxu0 0.0
    %2619 = vmatprep.subr.mxu0 0.0
    %2620 = vmatpush1.msra.mxu0 0.0
    %2621 = vmatprep.subr.mxu0 0.0
    %2622 = vmatpush1.msra.mxu0 0.0
    %2623 = vmatprep.subr.mxu0 0.0
    %2624 = vmatpush1.msra.mxu0 0.0
    %2625 = vmatprep.subr.mxu0 0.0
    %2626 = vmatpush1.msra.mxu0 0.0
    %2627 = vmatprep.subr.mxu0 0.0
    %2628 = vmatpush1.msra.mxu0 0.0
    %2629 = vmatprep.subr.mxu0 0.0
    %2630 = vmatpush1.msra.mxu0 0.0
    %2631 = vmatprep.subr.mxu0 0.0
    %2632 = vmatpush1.msra.mxu0 0.0
    %2633 = vmatprep.mubr.f32.mxu0 0.0
    %2634 = vmatmul.mubr.f32.gmra.mrb[0].mxu0 %v2567
    %v2635 = vpop.f32.mrb[0].mxu0
    %v2636 = vadd.f32 %v66, %v2635
    %v2637 = vpop.f32.mrb[0].mxu0
    %v2638 = vadd.f32 %v70, %v2637
    %2639 = vdwg.mxu0
    %s2640 = scalar_lea.vmem %s0, 56
    %v2641 = vld [vmem:[%s2640] sm:$0xff]
    %v2643 = vsel %vm76, %v2641, 0
    %2645 = vmatprep.subr.mxu0 %v75
    %2646 = vmatpush1.msra.mxu0 %v74
    %2647 = vmatprep.subr.mxu0 0.0
    %2648 = vmatpush1.msra.mxu0 0.0
    %2649 = vmatprep.subr.mxu0 0.0
    %2650 = vmatpush1.msra.mxu0 0.0
    %2651 = vmatprep.subr.mxu0 0.0
    %2652 = vmatpush1.msra.mxu0 0.0
    %2653 = vmatprep.subr.mxu0 0.0
    %2654 = vmatpush1.msra.mxu0 0.0
    %2655 = vmatprep.subr.mxu0 0.0
    %2656 = vmatpush1.msra.mxu0 0.0
    %2657 = vmatprep.subr.mxu0 0.0
    %2658 = vmatpush1.msra.mxu0 0.0
    %2659 = vmatprep.subr.mxu0 0.0
    %2660 = vmatpush1.msra.mxu0 0.0
    %2661 = vmatprep.subr.mxu0 0.0
    %2662 = vmatpush1.msra.mxu0 0.0
    %2663 = vmatprep.subr.mxu0 0.0
    %2664 = vmatpush1.msra.mxu0 0.0
    %2665 = vmatprep.subr.mxu0 0.0
    %2666 = vmatpush1.msra.mxu0 0.0
    %2667 = vmatprep.subr.mxu0 0.0
    %2668 = vmatpush1.msra.mxu0 0.0
    %2669 = vmatprep.subr.mxu0 0.0
    %2670 = vmatpush1.msra.mxu0 0.0
    %2671 = vmatprep.subr.mxu0 0.0
    %2672 = vmatpush1.msra.mxu0 0.0
    %2673 = vmatprep.subr.mxu0 0.0
    %2674 = vmatpush1.msra.mxu0 0.0
    %2675 = vmatprep.subr.mxu0 0.0
    %2676 = vmatpush1.msra.mxu0 0.0
    %2677 = vmatprep.subr.mxu0 0.0
    %2678 = vmatpush1.msra.mxu0 0.0
    %2679 = vmatprep.subr.mxu0 0.0
    %2680 = vmatpush1.msra.mxu0 0.0
    %2681 = vmatprep.subr.mxu0 0.0
    %2682 = vmatpush1.msra.mxu0 0.0
    %2683 = vmatprep.subr.mxu0 0.0
    %2684 = vmatpush1.msra.mxu0 0.0
    %2685 = vmatprep.subr.mxu0 0.0
    %2686 = vmatpush1.msra.mxu0 0.0
    %2687 = vmatprep.subr.mxu0 0.0
    %2688 = vmatpush1.msra.mxu0 0.0
    %2689 = vmatprep.subr.mxu0 0.0
    %2690 = vmatpush1.msra.mxu0 0.0
    %2691 = vmatprep.subr.mxu0 0.0
    %2692 = vmatpush1.msra.mxu0 0.0
    %2693 = vmatprep.subr.mxu0 0.0
    %2694 = vmatpush1.msra.mxu0 0.0
    %2695 = vmatprep.subr.mxu0 0.0
    %2696 = vmatpush1.msra.mxu0 0.0
    %2697 = vmatprep.subr.mxu0 0.0
    %2698 = vmatpush1.msra.mxu0 0.0
    %2699 = vmatprep.subr.mxu0 0.0
    %2700 = vmatpush1.msra.mxu0 0.0
    %2701 = vmatprep.subr.mxu0 0.0
    %2702 = vmatpush1.msra.mxu0 0.0
    %2703 = vmatprep.subr.mxu0 0.0
    %2704 = vmatpush1.msra.mxu0 0.0
    %2705 = vmatprep.subr.mxu0 0.0
    %2706 = vmatpush1.msra.mxu0 0.0
    %2707 = vmatprep.subr.mxu0 0.0
    %2708 = vmatpush1.msra.mxu0 0.0
    %2709 = vmatprep.mubr.f32.mxu0 0.0
    %2710 = vmatmul.mubr.f32.gmra.mrb[0].mxu0 %v2643
    %v2711 = vpop.f32.mrb[0].mxu0
    %v2712 = vadd.f32 %v53, %v2711
    %v2713 = vpop.f32.mrb[0].mxu0
    %v2714 = vadd.f32 %v57, %v2713
    %2715 = vdwg.mxu0
    %2716 = vmatprep.subr.mxu0 %v152
    %2717 = vmatpush1.msra.mxu0 %v151
    %2718 = vmatprep.subr.mxu0 %v154
    %2719 = vmatpush1.msra.mxu0 %v153
    %2720 = vmatprep.subr.mxu0 %v156
    %2721 = vmatpush1.msra.mxu0 %v155
    %2722 = vmatprep.subr.mxu0 %v158
    %2723 = vmatpush1.msra.mxu0 %v157
    %2724 = vmatprep.subr.mxu0 %v160
    %2725 = vmatpush1.msra.mxu0 %v159
    %2726 = vmatprep.subr.mxu0 %v162
    %2727 = vmatpush1.msra.mxu0 %v161
    %2728 = vmatprep.subr.mxu0 %v164
    %2729 = vmatpush1.msra.mxu0 %v163
    %2730 = vmatprep.subr.mxu0 %v166
    %2731 = vmatpush1.msra.mxu0 %v165
    %2732 = vmatprep.subr.mxu0 0.0
    %2733 = vmatpush1.msra.mxu0 0.0
    %2734 = vmatprep.subr.mxu0 0.0
    %2735 = vmatpush1.msra.mxu0 0.0
    %2736 = vmatprep.subr.mxu0 0.0
    %2737 = vmatpush1.msra.mxu0 0.0
    %2738 = vmatprep.subr.mxu0 0.0
    %2739 = vmatpush1.msra.mxu0 0.0
    %2740 = vmatprep.subr.mxu0 0.0
    %2741 = vmatpush1.msra.mxu0 0.0
    %2742 = vmatprep.subr.mxu0 0.0
    %2743 = vmatpush1.msra.mxu0 0.0
    %2744 = vmatprep.subr.mxu0 0.0
    %2745 = vmatpush1.msra.mxu0 0.0
    %2746 = vmatprep.subr.mxu0 0.0
    %2747 = vmatpush1.msra.mxu0 0.0
    %2748 = vmatprep.subr.mxu0 0.0
    %2749 = vmatpush1.msra.mxu0 0.0
    %2750 = vmatprep.subr.mxu0 0.0
    %2751 = vmatpush1.msra.mxu0 0.0
    %2752 = vmatprep.subr.mxu0 0.0
    %2753 = vmatpush1.msra.mxu0 0.0
    %2754 = vmatprep.subr.mxu0 0.0
    %2755 = vmatpush1.msra.mxu0 0.0
    %2756 = vmatprep.subr.mxu0 0.0
    %2757 = vmatpush1.msra.mxu0 0.0
    %2758 = vmatprep.subr.mxu0 0.0
    %2759 = vmatpush1.msra.mxu0 0.0
    %2760 = vmatprep.subr.mxu0 0.0
    %2761 = vmatpush1.msra.mxu0 0.0
    %2762 = vmatprep.subr.mxu0 0.0
    %2763 = vmatpush1.msra.mxu0 0.0
    %2764 = vmatprep.subr.mxu0 0.0
    %2765 = vmatpush1.msra.mxu0 0.0
    %2766 = vmatprep.subr.mxu0 0.0
    %2767 = vmatpush1.msra.mxu0 0.0
    %2768 = vmatprep.subr.mxu0 0.0
    %2769 = vmatpush1.msra.mxu0 0.0
    %2770 = vmatprep.subr.mxu0 0.0
    %2771 = vmatpush1.msra.mxu0 0.0
    %2772 = vmatprep.subr.mxu0 0.0
    %2773 = vmatpush1.msra.mxu0 0.0
    %2774 = vmatprep.subr.mxu0 0.0
    %2775 = vmatpush1.msra.mxu0 0.0
    %2776 = vmatprep.subr.mxu0 0.0
    %2777 = vmatpush1.msra.mxu0 0.0
    %2778 = vmatprep.subr.mxu0 0.0
    %2779 = vmatpush1.msra.mxu0 0.0
    %2780 = vmatprep.mubr.f32.mxu0 0.0
    %2781 = vmatmul.mubr.f32.gmra.mrb[0].mxu0 %v2461
    %v2782 = vpop.f32.mrb[0].mxu0
    %v2783 = vadd.f32 0.0, %v2782
    %v2784 = vpop.f32.mrb[0].mxu0
    %v2785 = vadd.f32 0.0, %v2784
    %2786 = vdwg.mxu0
    %v2787 = vadd.f32 %v2712, %v2783
    %v2788 = vadd.f32 %v2714, %v2785
    %v2789 = vxor.u32 %v2787, 2147483648
    %v2790 = vxor.u32 %v2788, 2147483648
    %v2791 = vmul.f32 %v2789, 1.442695
    %v2792 = vpow.pop %v2791
    %v2793 = vmul.f32 %v2790, 1.442695
    %v2794 = vpow.pop %v2793
    %v2795 = vadd.f32 %v2792, 1.0
    %v2796 = vadd.f32 %v2794, 1.0
    %v2797 = vrcp.pop %v2795
    %v2798 = vmul.f32 1.0, %v2797
    %v2799 = vrcp.pop %v2796
    %v2800 = vmul.f32 1.0, %v2799
    %v2801 = vtanh.pop %v2788
    %v2802 = vmul.f32 %v2798, %v2453
    %2804 = vrot.lane.b32.xlu0 %v2801, 64
    %v2805 = vpop.permute.xlu0 %2804
    %v2807 = vmul.f32 %v2798, %v2805
    %2809 = vrot.lane.b32.xlu0 %v2807, 64
    %v2810 = vpop.permute.xlu0 %2809
    %v2812 = vadd.f32 %v2802, %v2810
    %v2813 = vtanh.pop %v2812
    %2815 = vrot.lane.b32.xlu0 %v2813, 64
    %v2816 = vpop.permute.xlu0 %2815
    %v2818 = vmul.f32 %v2800, %v2816
    %v2820 = vsel %vm167, %v2818, 0
    %2822 = vmatprep.subr.mxu0 %v275
    %2823 = vmatpush1.msra.mxu0 %v274
    %2824 = vmatprep.subr.mxu0 %v277
    %2825 = vmatpush1.msra.mxu0 %v276
    %2826 = vmatprep.subr.mxu0 %v279
    %2827 = vmatpush1.msra.mxu0 %v278
    %2828 = vmatprep.subr.mxu0 %v281
    %2829 = vmatpush1.msra.mxu0 %v280
    %2830 = vmatprep.subr.mxu0 %v283
    %2831 = vmatpush1.msra.mxu0 %v282
    %2832 = vmatprep.subr.mxu0 %v285
    %2833 = vmatpush1.msra.mxu0 %v284
    %2834 = vmatprep.subr.mxu0 %v287
    %2835 = vmatpush1.msra.mxu0 %v286
    %2836 = vmatprep.subr.mxu0 %v289
    %2837 = vmatpush1.msra.mxu0 %v288
    %2838 = vmatprep.subr.mxu0 0.0
    %2839 = vmatpush1.msra.mxu0 0.0
    %2840 = vmatprep.subr.mxu0 0.0
    %2841 = vmatpush1.msra.mxu0 0.0
    %2842 = vmatprep.subr.mxu0 0.0
    %2843 = vmatpush1.msra.mxu0 0.0
    %2844 = vmatprep.subr.mxu0 0.0
    %2845 = vmatpush1.msra.mxu0 0.0
    %2846 = vmatprep.subr.mxu0 0.0
    %2847 = vmatpush1.msra.mxu0 0.0
    %2848 = vmatprep.subr.mxu0 0.0
    %2849 = vmatpush1.msra.mxu0 0.0
    %2850 = vmatprep.subr.mxu0 0.0
    %2851 = vmatpush1.msra.mxu0 0.0
    %2852 = vmatprep.subr.mxu0 0.0
    %2853 = vmatpush1.msra.mxu0 0.0
    %2854 = vmatprep.subr.mxu0 0.0
    %2855 = vmatpush1.msra.mxu0 0.0
    %2856 = vmatprep.subr.mxu0 0.0
    %2857 = vmatpush1.msra.mxu0 0.0
    %2858 = vmatprep.subr.mxu0 0.0
    %2859 = vmatpush1.msra.mxu0 0.0
    %2860 = vmatprep.subr.mxu0 0.0
    %2861 = vmatpush1.msra.mxu0 0.0
    %2862 = vmatprep.subr.mxu0 0.0
    %2863 = vmatpush1.msra.mxu0 0.0
    %2864 = vmatprep.subr.mxu0 0.0
    %2865 = vmatpush1.msra.mxu0 0.0
    %2866 = vmatprep.subr.mxu0 0.0
    %2867 = vmatpush1.msra.mxu0 0.0
    %2868 = vmatprep.subr.mxu0 0.0
    %2869 = vmatpush1.msra.mxu0 0.0
    %2870 = vmatprep.subr.mxu0 0.0
    %2871 = vmatpush1.msra.mxu0 0.0
    %2872 = vmatprep.subr.mxu0 0.0
    %2873 = vmatpush1.msra.mxu0 0.0
    %2874 = vmatprep.subr.mxu0 0.0
    %2875 = vmatpush1.msra.mxu0 0.0
    %2876 = vmatprep.subr.mxu0 0.0
    %2877 = vmatpush1.msra.mxu0 0.0
    %2878 = vmatprep.subr.mxu0 0.0
    %2879 = vmatpush1.msra.mxu0 0.0
    %2880 = vmatprep.subr.mxu0 0.0
    %2881 = vmatpush1.msra.mxu0 0.0
    %2882 = vmatprep.subr.mxu0 0.0
    %2883 = vmatpush1.msra.mxu0 0.0
    %2884 = vmatprep.subr.mxu0 0.0
    %2885 = vmatpush1.msra.mxu0 0.0
    %2886 = vmatprep.mubr.f32.mxu0 0.0
    %2887 = vmatmul.mubr.f32.gmra.mrb[0].mxu0 %v2820
    %v2888 = vpop.f32.mrb[0].mxu0
    %v2889 = vadd.f32 0.0, %v2888
    %v2890 = vpop.f32.mrb[0].mxu0
    %v2891 = vadd.f32 0.0, %v2890
    %2892 = vdwg.mxu0
    %v2893 = vadd.f32 %v2636, %v2889
    %v2894 = vadd.f32 %v2638, %v2891
    %v2895 = vxor.u32 %v2893, 2147483648
    %v2896 = vxor.u32 %v2894, 2147483648
    %v2897 = vmul.f32 %v2895, 1.442695
    %v2898 = vpow.pop %v2897
    %v2899 = vmul.f32 %v2896, 1.442695
    %v2900 = vpow.pop %v2899
    %v2901 = vadd.f32 %v2898, 1.0
    %v2902 = vadd.f32 %v2900, 1.0
    %v2903 = vrcp.pop %v2901
    %v2904 = vmul.f32 1.0, %v2903
    %v2905 = vrcp.pop %v2902
    %v2906 = vmul.f32 1.0, %v2905
    %v2907 = vtanh.pop %v2894
    %v2908 = vmul.f32 %v2904, %v2559
    %2910 = vrot.lane.b32.xlu0 %v2907, 64
    %v2911 = vpop.permute.xlu0 %2910
    %v2913 = vmul.f32 %v2904, %v2911
    %2915 = vrot.lane.b32.xlu0 %v2913, 64
    %v2916 = vpop.permute.xlu0 %2915
    %v2918 = vadd.f32 %v2908, %v2916
    %v2919 = vtanh.pop %v2918
    %2921 = vrot.lane.b32.xlu0 %v2919, 64
    %v2922 = vpop.permute.xlu0 %2921
    %v2924 = vmul.f32 %v2906, %v2922
    %v2925 = vld [vmem:[#allocation4] sm:$0xff]
    %v2926 = vld [vmem:[#allocation4 + $0x8] sm:$0xff]
    %v2927 = vld [vmem:[#allocation4 + $0x10] sm:$0xff]
    %v2928 = vld [vmem:[#allocation4 + $0x18] sm:$0xff]
    %v2929 = vld [vmem:[#allocation4 + $0x20] sm:$0xff]
    %v2930 = vld [vmem:[#allocation4 + $0x28] sm:$0xff]
    %v2931 = vld [vmem:[#allocation4 + $0x30] sm:$0xff]
    %v2932 = vld [vmem:[#allocation4 + $0x38] sm:$0xff]
    %v2933 = vld [vmem:[%s4] sm:$0x1]
    %v2934 = vlaneseq
    %v2935 = vshrl.u32 %v2934, 7
    %v2936 = vsub.s32 0, %v2935
    %v2937 = vrot.slane %v2933, %v2936
    %v2939 = vsel %vm167, %v2924, 0
    %2941 = vmatprep.subr.mxu0 0.0
    %2942 = vmatpush1.msra.mxu0 %v2925
    %2943 = vmatprep.subr.mxu0 0.0
    %2944 = vmatpush1.msra.mxu0 %v2926
    %2945 = vmatprep.subr.mxu0 0.0
    %2946 = vmatpush1.msra.mxu0 %v2927
    %2947 = vmatprep.subr.mxu0 0.0
    %2948 = vmatpush1.msra.mxu0 %v2928
    %2949 = vmatprep.subr.mxu0 0.0
    %2950 = vmatpush1.msra.mxu0 %v2929
    %2951 = vmatprep.subr.mxu0 0.0
    %2952 = vmatpush1.msra.mxu0 %v2930
    %2953 = vmatprep.subr.mxu0 0.0
    %2954 = vmatpush1.msra.mxu0 %v2931
    %2955 = vmatprep.subr.mxu0 0.0
    %2956 = vmatpush1.msra.mxu0 %v2932
    %2957 = vmatprep.subr.mxu0 0.0
    %2958 = vmatpush1.msra.mxu0 0.0
    %2959 = vmatprep.subr.mxu0 0.0
    %2960 = vmatpush1.msra.mxu0 0.0
    %2961 = vmatprep.subr.mxu0 0.0
    %2962 = vmatpush1.msra.mxu0 0.0
    %2963 = vmatprep.subr.mxu0 0.0
    %2964 = vmatpush1.msra.mxu0 0.0
    %2965 = vmatprep.subr.mxu0 0.0
    %2966 = vmatpush1.msra.mxu0 0.0
    %2967 = vmatprep.subr.mxu0 0.0
    %2968 = vmatpush1.msra.mxu0 0.0
    %2969 = vmatprep.subr.mxu0 0.0
    %2970 = vmatpush1.msra.mxu0 0.0
    %2971 = vmatprep.subr.mxu0 0.0
    %2972 = vmatpush1.msra.mxu0 0.0
    %2973 = vmatprep.subr.mxu0 0.0
    %2974 = vmatpush1.msra.mxu0 0.0
    %2975 = vmatprep.subr.mxu0 0.0
    %2976 = vmatpush1.msra.mxu0 0.0
    %2977 = vmatprep.subr.mxu0 0.0
    %2978 = vmatpush1.msra.mxu0 0.0
    %2979 = vmatprep.subr.mxu0 0.0
    %2980 = vmatpush1.msra.mxu0 0.0
    %2981 = vmatprep.subr.mxu0 0.0
    %2982 = vmatpush1.msra.mxu0 0.0
    %2983 = vmatprep.subr.mxu0 0.0
    %2984 = vmatpush1.msra.mxu0 0.0
    %2985 = vmatprep.subr.mxu0 0.0
    %2986 = vmatpush1.msra.mxu0 0.0
    %2987 = vmatprep.subr.mxu0 0.0
    %2988 = vmatpush1.msra.mxu0 0.0
    %2989 = vmatprep.subr.mxu0 0.0
    %2990 = vmatpush1.msra.mxu0 0.0
    %2991 = vmatprep.subr.mxu0 0.0
    %2992 = vmatpush1.msra.mxu0 0.0
    %2993 = vmatprep.subr.mxu0 0.0
    %2994 = vmatpush1.msra.mxu0 0.0
    %2995 = vmatprep.subr.mxu0 0.0
    %2996 = vmatpush1.msra.mxu0 0.0
    %2997 = vmatprep.subr.mxu0 0.0
    %2998 = vmatpush1.msra.mxu0 0.0
    %2999 = vmatprep.subr.mxu0 0.0
    %3000 = vmatpush1.msra.mxu0 0.0
    %3001 = vmatprep.subr.mxu0 0.0
    %3002 = vmatpush1.msra.mxu0 0.0
    %3003 = vmatprep.subr.mxu0 0.0
    %3004 = vmatpush1.msra.mxu0 0.0
    %3005 = vmatprep.mubr.f32.mxu0 0.0
    %3006 = vmatmul.mubr.f32.gmra.mrb[0].mxu0 %v2939
    %v3007 = vpop.f32.mrb[0].mxu0
    %v3008 = vadd.f32 %v2937, %v3007
    %v3009 = vpop.f32.mrb[0].mxu0
    %3010 = vdwg.mxu0
    %v3011 = vmax.f32 %v3008, 0.0
    %v3012 = vld [vmem:[#allocation4 + $0x40] sm:$0xff]
    %v3013 = vld [vmem:[#allocation4 + $0x48] sm:$0xff]
    %v3014 = vld [vmem:[#allocation4 + $0x50] sm:$0xff]
    %v3015 = vld [vmem:[#allocation4 + $0x58] sm:$0xff]
    %v3016 = vld [vmem:[#allocation4 + $0x60] sm:$0xff]
    %v3017 = vld [vmem:[#allocation4 + $0x68] sm:$0xff]
    %v3018 = vld [vmem:[#allocation4 + $0x70] sm:$0xff]
    %v3019 = vld [vmem:[#allocation4 + $0x78] sm:$0xff]
    %v3020 = vld [vmem:[#allocation4 + $0x80] sm:$0xff]
    %v3021 = vld [vmem:[#allocation4 + $0x88] sm:$0xff]
    %v3022 = vld [vmem:[#allocation4 + $0x90] sm:$0xff]
    %v3023 = vld [vmem:[#allocation4 + $0x98] sm:$0xff]
    %v3024 = vld [vmem:[#allocation4 + $0xa0] sm:$0xff]
    %v3025 = vld [vmem:[#allocation4 + $0xa8] sm:$0xff]
    %v3026 = vld [vmem:[#allocation4 + $0xb0] sm:$0xff]
    %v3027 = vld [vmem:[#allocation4 + $0xb8] sm:$0xff]
    %v3028 = vld [vmem:[%s4 + $0x1] sm:$0x1]
    %v3029 = vlaneseq
    %v3030 = vshrl.u32 %v3029, 7
    %v3031 = vsub.s32 0, %v3030
    %v3032 = vrot.slane %v3028, %v3031
    %3033 = vmatprep.subr.mxu0 0.0
    %3034 = vmatpush1.msra.mxu0 %v3012
    %3035 = vmatprep.subr.mxu0 0.0
    %3036 = vmatpush1.msra.mxu0 %v3013
    %3037 = vmatprep.subr.mxu0 0.0
    %3038 = vmatpush1.msra.mxu0 %v3014
    %3039 = vmatprep.subr.mxu0 0.0
    %3040 = vmatpush1.msra.mxu0 %v3015
    %3041 = vmatprep.subr.mxu0 0.0
    %3042 = vmatpush1.msra.mxu0 %v3016
    %3043 = vmatprep.subr.mxu0 0.0
    %3044 = vmatpush1.msra.mxu0 %v3017
    %3045 = vmatprep.subr.mxu0 0.0
    %3046 = vmatpush1.msra.mxu0 %v3018
    %3047 = vmatprep.subr.mxu0 0.0
    %3048 = vmatpush1.msra.mxu0 %v3019
    %3049 = vmatprep.subr.mxu0 0.0
    %3050 = vmatpush1.msra.mxu0 %v3020
    %3051 = vmatprep.subr.mxu0 0.0
    %3052 = vmatpush1.msra.mxu0 %v3021
    %3053 = vmatprep.subr.mxu0 0.0
    %3054 = vmatpush1.msra.mxu0 %v3022
    %3055 = vmatprep.subr.mxu0 0.0
    %3056 = vmatpush1.msra.mxu0 %v3023
    %3057 = vmatprep.subr.mxu0 0.0
    %3058 = vmatpush1.msra.mxu0 %v3024
    %3059 = vmatprep.subr.mxu0 0.0
    %3060 = vmatpush1.msra.mxu0 %v3025
    %3061 = vmatprep.subr.mxu0 0.0
    %3062 = vmatpush1.msra.mxu0 %v3026
    %3063 = vmatprep.subr.mxu0 0.0
    %3064 = vmatpush1.msra.mxu0 %v3027
    %3065 = vmatprep.subr.mxu0 0.0
    %3066 = vmatpush1.msra.mxu0 0.0
    %3067 = vmatprep.subr.mxu0 0.0
    %3068 = vmatpush1.msra.mxu0 0.0
    %3069 = vmatprep.subr.mxu0 0.0
    %3070 = vmatpush1.msra.mxu0 0.0
    %3071 = vmatprep.subr.mxu0 0.0
    %3072 = vmatpush1.msra.mxu0 0.0
    %3073 = vmatprep.subr.mxu0 0.0
    %3074 = vmatpush1.msra.mxu0 0.0
    %3075 = vmatprep.subr.mxu0 0.0
    %3076 = vmatpush1.msra.mxu0 0.0
    %3077 = vmatprep.subr.mxu0 0.0
    %3078 = vmatpush1.msra.mxu0 0.0
    %3079 = vmatprep.subr.mxu0 0.0
    %3080 = vmatpush1.msra.mxu0 0.0
    %3081 = vmatprep.subr.mxu0 0.0
    %3082 = vmatpush1.msra.mxu0 0.0
    %3083 = vmatprep.subr.mxu0 0.0
    %3084 = vmatpush1.msra.mxu0 0.0
    %3085 = vmatprep.subr.mxu0 0.0
    %3086 = vmatpush1.msra.mxu0 0.0
    %3087 = vmatprep.subr.mxu0 0.0
    %3088 = vmatpush1.msra.mxu0 0.0
    %3089 = vmatprep.subr.mxu0 0.0
    %3090 = vmatpush1.msra.mxu0 0.0
    %3091 = vmatprep.subr.mxu0 0.0
    %3092 = vmatpush1.msra.mxu0 0.0
    %3093 = vmatprep.subr.mxu0 0.0
    %3094 = vmatpush1.msra.mxu0 0.0
    %3095 = vmatprep.subr.mxu0 0.0
    %3096 = vmatpush1.msra.mxu0 0.0
    %3097 = vmatprep.mubr.f32.mxu0 0.0
    %3098 = vmatmul.mubr.f32.gmra.mrb[0].mxu0 %v3011
    %v3099 = vpop.f32.mrb[0].mxu0
    %v3100 = vadd.f32 %v3032, %v3099
    %v3101 = vpop.f32.mrb[0].mxu0
    %3102 = vdwg.mxu0
    %v3103 = vmax.f32 %v3100, 0.0
    %v3104 = vld [vmem:[#allocation4 + $0xc0] sm:$0xff]
    %v3105 = vld [vmem:[#allocation4 + $0xc8] sm:$0xff]
    %v3106 = vld [vmem:[#allocation4 + $0xd0] sm:$0xff]
    %v3107 = vld [vmem:[#allocation4 + $0xd8] sm:$0xff]
    %v3108 = vld [vmem:[#allocation4 + $0xe0] sm:$0xff]
    %v3109 = vld [vmem:[#allocation4 + $0xe8] sm:$0xff]
    %v3110 = vld [vmem:[#allocation4 + $0xf0] sm:$0xff]
    %v3111 = vld [vmem:[#allocation4 + $0xf8] sm:$0xff]
    %v3112 = vld [vmem:[#allocation4 + $0x100] sm:$0xff]
    %v3113 = vld [vmem:[#allocation4 + $0x108] sm:$0xff]
    %v3114 = vld [vmem:[#allocation4 + $0x110] sm:$0xff]
    %v3115 = vld [vmem:[#allocation4 + $0x118] sm:$0xff]
    %v3116 = vld [vmem:[#allocation4 + $0x120] sm:$0xff]
    %v3117 = vld [vmem:[#allocation4 + $0x128] sm:$0xff]
    %v3118 = vld [vmem:[#allocation4 + $0x130] sm:$0xff]
    %v3119 = vld [vmem:[#allocation4 + $0x138] sm:$0xff]
    %v3120 = vld [vmem:[%s4 + $0x2] sm:$0x1]
    %v3121 = vlaneseq
    %v3122 = vshrl.u32 %v3121, 7
    %v3123 = vsub.s32 0, %v3122
    %v3124 = vrot.slane %v3120, %v3123
    %3125 = vmatprep.subr.mxu0 0.0
    %3126 = vmatpush1.msra.mxu0 %v3104
    %3127 = vmatprep.subr.mxu0 0.0
    %3128 = vmatpush1.msra.mxu0 %v3105
    %3129 = vmatprep.subr.mxu0 0.0
    %3130 = vmatpush1.msra.mxu0 %v3106
    %3131 = vmatprep.subr.mxu0 0.0
    %3132 = vmatpush1.msra.mxu0 %v3107
    %3133 = vmatprep.subr.mxu0 0.0
    %3134 = vmatpush1.msra.mxu0 %v3108
    %3135 = vmatprep.subr.mxu0 0.0
    %3136 = vmatpush1.msra.mxu0 %v3109
    %3137 = vmatprep.subr.mxu0 0.0
    %3138 = vmatpush1.msra.mxu0 %v3110
    %3139 = vmatprep.subr.mxu0 0.0
    %3140 = vmatpush1.msra.mxu0 %v3111
    %3141 = vmatprep.subr.mxu0 0.0
    %3142 = vmatpush1.msra.mxu0 %v3112
    %3143 = vmatprep.subr.mxu0 0.0
    %3144 = vmatpush1.msra.mxu0 %v3113
    %3145 = vmatprep.subr.mxu0 0.0
    %3146 = vmatpush1.msra.mxu0 %v3114
    %3147 = vmatprep.subr.mxu0 0.0
    %3148 = vmatpush1.msra.mxu0 %v3115
    %3149 = vmatprep.subr.mxu0 0.0
    %3150 = vmatpush1.msra.mxu0 %v3116
    %3151 = vmatprep.subr.mxu0 0.0
    %3152 = vmatpush1.msra.mxu0 %v3117
    %3153 = vmatprep.subr.mxu0 0.0
    %3154 = vmatpush1.msra.mxu0 %v3118
    %3155 = vmatprep.subr.mxu0 0.0
    %3156 = vmatpush1.msra.mxu0 %v3119
    %3157 = vmatprep.subr.mxu0 0.0
    %3158 = vmatpush1.msra.mxu0 0.0
    %3159 = vmatprep.subr.mxu0 0.0
    %3160 = vmatpush1.msra.mxu0 0.0
    %3161 = vmatprep.subr.mxu0 0.0
    %3162 = vmatpush1.msra.mxu0 0.0
    %3163 = vmatprep.subr.mxu0 0.0
    %3164 = vmatpush1.msra.mxu0 0.0
    %3165 = vmatprep.subr.mxu0 0.0
    %3166 = vmatpush1.msra.mxu0 0.0
    %3167 = vmatprep.subr.mxu0 0.0
    %3168 = vmatpush1.msra.mxu0 0.0
    %3169 = vmatprep.subr.mxu0 0.0
    %3170 = vmatpush1.msra.mxu0 0.0
    %3171 = vmatprep.subr.mxu0 0.0
    %3172 = vmatpush1.msra.mxu0 0.0
    %3173 = vmatprep.subr.mxu0 0.0
    %3174 = vmatpush1.msra.mxu0 0.0
    %3175 = vmatprep.subr.mxu0 0.0
    %3176 = vmatpush1.msra.mxu0 0.0
    %3177 = vmatprep.subr.mxu0 0.0
    %3178 = vmatpush1.msra.mxu0 0.0
    %3179 = vmatprep.subr.mxu0 0.0
    %3180 = vmatpush1.msra.mxu0 0.0
    %3181 = vmatprep.subr.mxu0 0.0
    %3182 = vmatpush1.msra.mxu0 0.0
    %3183 = vmatprep.subr.mxu0 0.0
    %3184 = vmatpush1.msra.mxu0 0.0
    %3185 = vmatprep.subr.mxu0 0.0
    %3186 = vmatpush1.msra.mxu0 0.0
    %3187 = vmatprep.subr.mxu0 0.0
    %3188 = vmatpush1.msra.mxu0 0.0
    %3189 = vmatprep.mubr.f32.mxu0 0.0
    %3190 = vmatmul.mubr.f32.gmra.mrb[0].mxu0 %v3103
    %v3191 = vpop.f32.mrb[0].mxu0
    %v3192 = vadd.f32 %v3124, %v3191
    %v3193 = vpop.f32.mrb[0].mxu0
    %3194 = vdwg.mxu0
    %3195 = vst [vmem:[%s5] sm:$0xff] %v3192
    // Predicated region
    $region30: #{stock_price_lstm_forward.1} parent=1 // pred_check
      _
    $region31: #{stock_price_lstm_forward.1} parent=1 // pred_check_branch
      %3197 = sbr.rel (0) target = $region33
    $region32: #{stock_price_lstm_forward.1} parent=1 // pred_region
      _
    $region33: #{stock_price_lstm_forward.1} parent=1 // pred_fallthru
      _
    // Predicated region
    $region34: #{stock_price_lstm_forward.1} parent=1 // pred_check
      _
    $region35: #{stock_price_lstm_forward.1} parent=1 // pred_check_branch
      %3199 = sbr.rel (0) target = $region37
    $region36: #{stock_price_lstm_forward.1} parent=1 // pred_region
      _
    $region37: #{stock_price_lstm_forward.1} parent=1 // pred_fallthru
      _
    %3200 = vsyncpa [#allocation3], 1
    %3201 = vsyncpa [#allocation5], 1

</llo_original>
